<compile_context>
chip_gen: v7x
topology: tpu7x:2x2x1
jax: 0.10.0
libtpu: 0.0.40
codegen_flags: <defaults>
</compile_context>

<pallas_src>
import functools

import jax
import jax.numpy as jnp
from jax import lax
from jax.experimental import pallas as pl
from jax.experimental.pallas import tpu as pltpu

_EPS = 1e-5
# output parity -> kernel tap for (window offset 0, window offset 1) of the k=2 window
_KTAP = ((3, 1), (2, 0))


def _tile_and_pad(m):
    for t in (512, 256, 128):
        if m % t == 0:
            return t, m
    t = 128
    return t, -(-m // t) * t


# ----------------------------- fused Pallas layer kernel ---------------------------

def _layer_kernel(a_ref, b_ref, bias_ref, y_ref, *stat_refs, relu, stats,
                  m_valid, tm):
    # a_ref:(1,tm,K) bf16   b_ref:(1,K,C) bf16   bias_ref:(1,1,C) f32
    # y_ref:(1,tm,C)        stat_refs: sum (1,1,C) f32, ssq (1,1,C) f32  (if stats)
    i = pl.program_id(1)
    acc = jnp.dot(a_ref[0], b_ref[0], preferred_element_type=jnp.float32)
    acc = acc + bias_ref[0]                      # f32 epilogue math (v5e: no bf16 VPU)
    if relu:
        acc = jnp.maximum(acc, 0.0)
    if m_valid is not None:                      # zero padded rows -> exact stats
        rows = i * tm + lax.broadcasted_iota(jnp.int32, acc.shape, 0)
        acc = jnp.where(rows < m_valid, acc, 0.0)
    y_ref[0] = acc.astype(y_ref.dtype)
    if stats:
        sum_ref, ssq_ref = stat_refs

        @pl.when(i == 0)
        def _():
            sum_ref[...] = jnp.zeros_like(sum_ref)
            ssq_ref[...] = jnp.zeros_like(ssq_ref)

        sum_ref[0] += jnp.sum(acc, axis=0, keepdims=True)
        ssq_ref[0] += jnp.sum(acc * acc, axis=0, keepdims=True)


def fused_layer(patches, wmat, bias, *, relu, stats, out_dtype=jnp.bfloat16):
    """(P,M,K) @ (P,K,C) + bias (+ReLU) (+per-channel sum/sumsq), tiled over M."""
    P, M, K = patches.shape
    C = wmat.shape[-1]
    tm, mpad = _tile_and_pad(M)
    if mpad != M:
        patches = jnp.pad(patches, ((0, 0), (0, mpad - M), (0, 0)))
    nb = mpad // tm

    out_shape = [jax.ShapeDtypeStruct((P, mpad, C), out_dtype)]
    out_specs = [pl.BlockSpec((1, tm, C), lambda p, i: (p, i, 0))]
    if stats:
        out_shape += [jax.ShapeDtypeStruct((P, 1, C), jnp.float32)] * 2
        out_specs += [pl.BlockSpec((1, 1, C), lambda p, i: (p, 0, 0))] * 2

    kernel = functools.partial(_layer_kernel, relu=relu, stats=stats,
                               m_valid=(None if mpad == M else M), tm=tm)
    cost = pl.CostEstimate(
        flops=2 * P * mpad * K * C,
        transcendentals=0,
        bytes_accessed=(patches.size * patches.dtype.itemsize
                        + wmat.size * wmat.dtype.itemsize
                        + bias.size * 4
                        + P * mpad * C * jnp.dtype(out_dtype).itemsize))

    res = pl.pallas_call(
        kernel,
        out_shape=tuple(out_shape),
        grid_spec=pltpu.PrefetchScalarGridSpec(
            num_scalar_prefetch=0,
            grid=(P, nb),
            in_specs=[pl.BlockSpec((1, tm, K), lambda p, i: (p, i, 0)),
                      pl.BlockSpec((1, K, C), lambda p, i: (p, 0, 0)),
                      pl.BlockSpec((1, 1, C), lambda p, i: (p, 0, 0))],
            out_specs=tuple(out_specs),
        ),
        compiler_params=pltpu.CompilerParams(
            dimension_semantics=("parallel", "arbitrary" if stats else "parallel")),
        cost_estimate=cost,
    )(patches, wmat, bias)

    y = res[0][:, :M, :] if mpad != M else res[0]
    if stats:
        return y, res[1], res[2]
    return y, None, None


# ----------------------------- JAX glue (channels-last) ----------------------------

def _im2col_nhwc(xp, k, stride, ho, wo, row_off=0, col_off=0):
    # xp: (N, Hp, Wp, C) -> (N*ho*wo, k*k*C); column order is [ki, kj, c].
    n, _, _, c = xp.shape
    taps = []
    for ki in range(k):
        for kj in range(k):
            taps.append(lax.slice(
                xp,
                (0, row_off + ki, col_off + kj, 0),
                (n, row_off + ki + stride * (ho - 1) + 1,
                 col_off + kj + stride * (wo - 1) + 1, c),
                (1, stride, stride, 1)))
    cols = jnp.stack(taps, axis=3)               # (N, ho, wo, k*k, C)
    return cols.reshape(n * ho * wo, k * k * c)


def _bn_fold(sums, ssqs, count, gamma, beta):
    # training-mode BatchNorm2d: biased batch variance.  (ssq/M - mean^2 is fine at
    # these scales; a centered second pass would be safer for large-mean activations.)
    s_tot = jnp.sum(sums, axis=(0, 1))
    q_tot = jnp.sum(ssqs, axis=(0, 1))
    mean = s_tot / count
    var = q_tot / count - mean * mean
    invstd = lax.rsqrt(var + _EPS)
    scale = gamma * invstd
    shift = beta - mean * scale
    safe = jnp.where(jnp.abs(scale) < 1e-12, 1.0, scale)   # guard gamma == 0 corner
    return scale, shift, -shift / safe


def _prep_convT(y_img, w_t, b, scale, shift, pad_val, cout_pad=None):
    """Sub-pixel (4-parity) decomposition of ConvT(k=4, s=2, p=1) with the previous
    layer's BatchNorm affine (scale, shift) folded into weights / bias."""
    n, h, w, cin = y_img.shape
    cout = w_t.shape[1]
    cpad = cout if cout_pad is None else cout_pad
    # Border ring value chosen so scale*pad_val + shift == 0: folded contributions of
    # non-existent input pixels vanish exactly.
    ring = jnp.broadcast_to(pad_val.astype(y_img.dtype).reshape(1, 1, 1, cin),
                            (n, h + 2, w + 2, cin))
    xp = ring.at[:, 1:-1, 1:-1, :].set(y_img)
    w_scaled = w_t * scale.reshape(cin, 1, 1, 1)             # fold BN scale
    pats, wmats, biases = [], [], []
    for ry in range(2):
        kys = jnp.asarray(_KTAP[ry])
        for rx in range(2):
            kxs = jnp.asarray(_KTAP[rx])
            pats.append(_im2col_nhwc(xp, 2, 1, h, w, row_off=ry, col_off=rx))
            wsel = w_scaled[:, :, kys, :][:, :, :, kxs]      # (Cin, Cout, 2, 2)
            wm = wsel.transpose(2, 3, 0, 1).reshape(4 * cin, cout)
            wraw = w_t[:, :, kys, :][:, :, :, kxs]
            bp = b + jnp.einsum('coij,c->o', wraw, shift)    # fold BN shift
            if cpad != cout:
                wm = jnp.pad(wm, ((0, 0), (0, cpad - cout)))
                bp = jnp.pad(bp, (0, cpad - cout))
            wmats.append(wm)
            biases.append(bp)
    return (jnp.stack(pats).astype(jnp.bfloat16),            # (4, M, 4*Cin)
            jnp.stack(wmats).astype(jnp.bfloat16),            # (4, 4*Cin, Cpad)
            jnp.stack(biases).reshape(4, 1, cpad).astype(jnp.float32))


def _interleave(y, n, h, w, c):
    # y: (4, n*h*w, c) with parity p = ry*2 + rx  ->  (n, 2h, 2w, c)
    y = y.reshape(2, 2, n, h, w, c).transpose(2, 3, 0, 4, 1, 5)
    return y.reshape(n, 2 * h, 2 * w, c)


# ----------------------------- network forward -------------------------------------

def srcnn_forward(x, p):
    n, _, h, w = x.shape
    xh = x.transpose(0, 2, 3, 1).astype(jnp.bfloat16)        # NCHW -> NHWC once

    # Block 1: Conv2d(3,256,k4,s2,p1) + ReLU, with BN(256) batch stats fused
    cout1, cin1, k1, _ = p["w1"].shape
    ho, wo = (h + 2 - k1) // 2 + 1, (w + 2 - k1) // 2 + 1
    xp = jnp.pad(xh, ((0, 0), (1, 1), (1, 1), (0, 0)))
    a1 = _im2col_nhwc(xp, k1, 2, ho, wo)[None]
    b1m = p["w1"].transpose(2, 3, 1, 0).reshape(k1 * k1 * cin1, cout1)[None]
    b1m = b1m.astype(jnp.bfloat16)
    bias1 = p["b1"].reshape(1, 1, cout1).astype(jnp.float32)
    y1, s1, q1 = fused_layer(a1, b1m, bias1, relu=True, stats=True)
    sc1, sh1, pv1 = _bn_fold(s1, q1, n * ho * wo, p["g1"], p["be1"])

    # Block 2: ConvT(256,64,k4,s2,p1) + ReLU (BN1 folded in), BN(64) stats fused
    a2, b2m, bias2 = _prep_convT(y1.reshape(n, ho, wo, cout1), p["w2"], p["b2"],
                                 sc1, sh1, pv1)
    y2, s2, q2 = fused_layer(a2, b2m, bias2, relu=True, stats=True)
    h2, w2 = 2 * ho, 2 * wo
    sc2, sh2, pv2 = _bn_fold(s2, q2, n * h2 * w2, p["g2"], p["be2"])

    # Block 3: ConvT(64,3,k4,s2,p1) (BN2 folded in, Cout lane-padded to 128)
    a3, b3m, bias3 = _prep_convT(_interleave(y2, n, ho, wo, 64), p["w3"], p["b3"],
                                 sc2, sh2, pv2, cout_pad=128)
    y3, _, _ = fused_layer(a3, b3m, bias3, relu=False, stats=False,
                           out_dtype=jnp.float32)
    out = _interleave(y3[:, :, :3], n, h2, w2, 3)
    return out.transpose(0, 3, 1, 2)                         # back to NCHW


# ----------------------------- pure-JAX reference ----------------------------------

def reference_forward(x, p):
    dn = ("NCHW", "OIHW", "NCHW")

    def bn_ref(y, g, b, eps=1e-5):
        mean = jnp.mean(y, axis=(0, 2, 3), keepdims=True)
        var = jnp.mean((y - mean) ** 2, axis=(0, 2, 3), keepdims=True)
        return ((y - mean) / jnp.sqrt(var + eps)
                * g.reshape(1, -1, 1, 1) + b.reshape(1, -1, 1, 1))

    y = lax.conv_general_dilated(x, p["w1"], (2, 2), ((1, 1), (1, 1)),
                                 dimension_numbers=dn,
                                 precision=lax.Precision.HIGHEST)
    y = jnp.maximum(y + p["b1"].reshape(1, -1, 1, 1), 0.0)
    y = bn_ref(y, p["g1"], p["be1"])

    w2 = jnp.flip(p["w2"], axis=(2, 3)).transpose(1, 0, 2, 3)
    y = lax.conv_general_dilated(y, w2, (1, 1), ((2, 2), (2, 2)),
                                 lhs_dilation=(2, 2), dimension_numbers=dn,
                                 precision=lax.Precision.HIGHEST)
    y = jnp.maximum(y + p["b2"].reshape(1, -1, 1, 1), 0.0)
    y = bn_ref(y, p["g2"], p["be2"])

    w3 = jnp.flip(p["w3"], axis=(2, 3)).transpose(1, 0, 2, 3)
    y = lax.conv_general_dilated(y, w3, (1, 1), ((2, 2), (2, 2)),
                                 lhs_dilation=(2, 2), dimension_numbers=dn,
                                 precision=lax.Precision.HIGHEST)
    return y + p["b3"].reshape(1, -1, 1, 1)


# ----------------------------- main --------------------------------------------------

if __name__ == "__main__":
    key = jax.random.PRNGKey(0)
    ks = jax.random.split(key, 12)
    N, H, W = 2, 16, 16
    x = jax.random.normal(ks[0], (N, 3, H, W), jnp.float32)

    params = {
        "w1": jax.random.normal(ks[1], (256, 3, 4, 4), jnp.float32) * 0.05,
        "b1": jax.random.normal(ks[2], (256,), jnp.float32) * 0.05,
        "g1": 1.0 + 0.1 * jax.random.normal(ks[3], (256,), jnp.float32),
        "be1": 0.1 * jax.random.normal(ks[4], (256,), jnp.float32),
        "w2": jax.random.normal(ks[5], (256, 64, 4, 4), jnp.float32) * 0.05,
        "b2": jax.random.normal(ks[6], (64,), jnp.float32) * 0.05,
        "g2": 1.0 + 0.1 * jax.random.normal(ks[7], (64,), jnp.float32),
        "be2": 0.1 * jax.random.normal(ks[8], (64,), jnp.float32),
        "w3": jax.random.normal(ks[9], (64, 3, 4, 4), jnp.float32) * 0.05,
        "b3": jax.random.normal(ks[10], (3,), jnp.float32) * 0.05,
    }

    out = jax.block_until_ready(jax.jit(srcnn_forward)(x, params))
    assert out.shape == (N, 3, 2 * H, 2 * W), out.shape

    ref = jax.block_until_ready(reference_forward(x, params))
    max_err = float(jnp.max(jnp.abs(out - ref)))
    mean_err = float(jnp.mean(jnp.abs(out - ref)))
    # bf16 MXU operands (per perf guidance) vs. an f32/HIGHEST reference: expect
    # ~1e-2-scale worst-case deviation on O(1) outputs across the 3-layer chain.
    assert max_err < 5e-2, f"max_err={max_err}"
    assert mean_err < 1e-2, f"mean_err={mean_err}"

    print("KERNEL_OK")
</pallas_src>

<mosaic_0001>
module attributes {stable_mosaic.version = 11 : i64} {
  func.func @_layer_kernel(%arg0: i32, %arg1: i32, %arg2: memref<1x128x48xbf16, #tpu.memory_space<vmem>>, %arg3: memref<1x48x256xbf16, #tpu.memory_space<vmem>>, %arg4: memref<1x1x256xf32, #tpu.memory_space<vmem>>, %arg5: memref<1x128x256xbf16, #tpu.memory_space<vmem>>, %arg6: memref<1x1x256xf32, #tpu.memory_space<vmem>>, %arg7: memref<1x1x256xf32, #tpu.memory_space<vmem>>) attributes {dimension_semantics = [#tpu.dimension_semantics<parallel>, #tpu.dimension_semantics<arbitrary>], iteration_bounds = array<i64: 1, 1>, scalar_prefetch = 0 : i64, scratch_operands = 0 : i64, tpu.core_type = #tpu.core_type<tc>, window_params = [{transform_indices = @transform_0, window_bounds = array<i64: 1, 128, 48>}, {transform_indices = @transform_1, window_bounds = array<i64: 1, 48, 256>}, {transform_indices = @transform_2, window_bounds = array<i64: 1, 1, 256>}, {transform_indices = @transform_3, window_bounds = array<i64: 1, 128, 256>}, {transform_indices = @transform_4, window_bounds = array<i64: 1, 1, 256>}, {transform_indices = @transform_5, window_bounds = array<i64: 1, 1, 256>}]} {
    %c0 = arith.constant 0 : index
    %c0_0 = arith.constant 0 : index
    %c0_1 = arith.constant 0 : index
    %0 = vector.load %arg2[%c0, %c0_0, %c0_1] : memref<1x128x48xbf16, #tpu.memory_space<vmem>>, vector<1x128x48xbf16>
    %1 = vector.shape_cast %0 : vector<1x128x48xbf16> to vector<128x48xbf16>
    %c0_2 = arith.constant 0 : index
    %c0_3 = arith.constant 0 : index
    %c0_4 = arith.constant 0 : index
    %2 = vector.load %arg3[%c0_2, %c0_3, %c0_4] : memref<1x48x256xbf16, #tpu.memory_space<vmem>>, vector<1x48x256xbf16>
    %3 = vector.shape_cast %2 : vector<1x48x256xbf16> to vector<48x256xbf16>
    %cst = arith.constant dense<0.000000e+00> : vector<128x256xf32>
    %4 = tpu.matmul %1, %3, %cst {dimension_numbers = #tpu.dot_dimension_numbers<[1], [0], [0], [1], [0, 0, 1, 1], [], []>} : vector<128x48xbf16>, vector<48x256xbf16>, vector<128x256xf32> -> vector<128x256xf32>
    %c0_5 = arith.constant 0 : index
    %c0_6 = arith.constant 0 : index
    %c0_7 = arith.constant 0 : index
    %5 = vector.load %arg4[%c0_5, %c0_6, %c0_7] : memref<1x1x256xf32, #tpu.memory_space<vmem>>, vector<1x1x256xf32>
    %6 = vector.shape_cast %5 : vector<1x1x256xf32> to vector<1x256xf32>
    %7 = vector.broadcast %6 : vector<1x256xf32> to vector<128x256xf32>
    %8 = arith.addf %4, %7 : vector<128x256xf32>
    %cst_8 = arith.constant 0.000000e+00 : f32
    %9 = vector.broadcast %cst_8 : f32 to vector<128x256xf32>
    %10 = arith.maximumf %8, %9 : vector<128x256xf32>
    %11 = arith.truncf %10 : vector<128x256xf32> to vector<128x256xbf16>
    %c0_9 = arith.constant 0 : index
    %c0_10 = arith.constant 0 : index
    %c0_11 = arith.constant 0 : index
    %12 = vector.load %arg5[%c0_9, %c0_10, %c0_11] : memref<1x128x256xbf16, #tpu.memory_space<vmem>>, vector<1x128x256xbf16>
    %13 = vector.shape_cast %12 : vector<1x128x256xbf16> to vector<128x256xbf16>
    %14 = vector.shape_cast %11 : vector<128x256xbf16> to vector<1x128x256xbf16>
    tpu.vector_store %arg5[%c0_9, %c0_10, %c0_11], %14 {strides = array<i32>} : memref<1x128x256xbf16, #tpu.memory_space<vmem>>, vector<1x128x256xbf16>,
    %c0_i32 = arith.constant 0 : i32
    %15 = arith.cmpi eq, %arg1, %c0_i32 : i32
    %16 = arith.extui %15 : i1 to i32
    %c0_i32_12 = arith.constant 0 : i32
    %17 = arith.cmpi ne, %16, %c0_i32_12 : i32
    scf.if %17 {
      %cst_27 = arith.constant 0.000000e+00 : f32
      %35 = vector.broadcast %cst_27 : f32 to vector<1x1x256xf32>
      %c0_28 = arith.constant 0 : index
      %c0_29 = arith.constant 0 : index
      %c0_30 = arith.constant 0 : index
      %36 = vector.load %arg6[%c0_28, %c0_29, %c0_30] : memref<1x1x256xf32, #tpu.memory_space<vmem>>, vector<1x1x256xf32>
      tpu.vector_store %arg6[%c0_28, %c0_29, %c0_30], %35 {strides = array<i32>} : memref<1x1x256xf32, #tpu.memory_space<vmem>>, vector<1x1x256xf32>,
      %cst_31 = arith.constant 0.000000e+00 : f32
      %37 = vector.broadcast %cst_31 : f32 to vector<1x1x256xf32>
      %c0_32 = arith.constant 0 : index
      %c0_33 = arith.constant 0 : index
      %c0_34 = arith.constant 0 : index
      %38 = vector.load %arg7[%c0_32, %c0_33, %c0_34] : memref<1x1x256xf32, #tpu.memory_space<vmem>>, vector<1x1x256xf32>
      tpu.vector_store %arg7[%c0_32, %c0_33, %c0_34], %37 {strides = array<i32>} : memref<1x1x256xf32, #tpu.memory_space<vmem>>, vector<1x1x256xf32>,
    } else {
    }
    %c0_13 = arith.constant 0 : index
    %c0_14 = arith.constant 0 : index
    %c0_15 = arith.constant 0 : index
    %18 = vector.load %arg6[%c0_13, %c0_14, %c0_15] : memref<1x1x256xf32, #tpu.memory_space<vmem>>, vector<1x1x256xf32>
    %19 = vector.shape_cast %18 : vector<1x1x256xf32> to vector<1x256xf32>
    %cst_16 = arith.constant dense<0.000000e+00> : vector<256xf32>
    %20 = vector.multi_reduction <add>, %10, %cst_16 [0] : vector<128x256xf32> to vector<256xf32>
    %21 = vector.shape_cast %20 : vector<256xf32> to vector<1x256xf32>
    %22 = arith.addf %19, %21 : vector<1x256xf32>
    %c0_17 = arith.constant 0 : index
    %c0_18 = arith.constant 0 : index
    %c0_19 = arith.constant 0 : index
    %23 = vector.load %arg6[%c0_17, %c0_18, %c0_19] : memref<1x1x256xf32, #tpu.memory_space<vmem>>, vector<1x1x256xf32>
    %24 = vector.shape_cast %23 : vector<1x1x256xf32> to vector<1x256xf32>
    %25 = vector.shape_cast %22 : vector<1x256xf32> to vector<1x1x256xf32>
    tpu.vector_store %arg6[%c0_17, %c0_18, %c0_19], %25 {strides = array<i32>} : memref<1x1x256xf32, #tpu.memory_space<vmem>>, vector<1x1x256xf32>,
    %c0_20 = arith.constant 0 : index
    %c0_21 = arith.constant 0 : index
    %c0_22 = arith.constant 0 : index
    %26 = vector.load %arg7[%c0_20, %c0_21, %c0_22] : memref<1x1x256xf32, #tpu.memory_space<vmem>>, vector<1x1x256xf32>
    %27 = vector.shape_cast %26 : vector<1x1x256xf32> to vector<1x256xf32>
    %28 = arith.mulf %10, %10 : vector<128x256xf32>
    %cst_23 = arith.constant dense<0.000000e+00> : vector<256xf32>
    %29 = vector.multi_reduction <add>, %28, %cst_23 [0] : vector<128x256xf32> to vector<256xf32>
    %30 = vector.shape_cast %29 : vector<256xf32> to vector<1x256xf32>
    %31 = arith.addf %27, %30 : vector<1x256xf32>
    %c0_24 = arith.constant 0 : index
    %c0_25 = arith.constant 0 : index
    %c0_26 = arith.constant 0 : index
    %32 = vector.load %arg7[%c0_24, %c0_25, %c0_26] : memref<1x1x256xf32, #tpu.memory_space<vmem>>, vector<1x1x256xf32>
    %33 = vector.shape_cast %32 : vector<1x1x256xf32> to vector<1x256xf32>
    %34 = vector.shape_cast %31 : vector<1x256xf32> to vector<1x1x256xf32>
    tpu.vector_store %arg7[%c0_24, %c0_25, %c0_26], %34 {strides = array<i32>} : memref<1x1x256xf32, #tpu.memory_space<vmem>>, vector<1x1x256xf32>,
    return
  }
  func.func @transform_0(%arg0: i32, %arg1: i32) -> (i32, i32, i32) {
    %c0_i32 = arith.constant 0 : i32
    %c0_i32_0 = arith.constant 0 : i32
    return %arg0, %arg1, %c0_i32 : i32, i32, i32
  }
  func.func @transform_1(%arg0: i32, %arg1: i32) -> (i32, i32, i32) {
    %c0_i32 = arith.constant 0 : i32
    %c0_i32_0 = arith.constant 0 : i32
    %c0_i32_1 = arith.constant 0 : i32
    return %arg0, %c0_i32, %c0_i32_0 : i32, i32, i32
  }
  func.func @transform_2(%arg0: i32, %arg1: i32) -> (i32, i32, i32) {
    %c0_i32 = arith.constant 0 : i32
    %c0_i32_0 = arith.constant 0 : i32
    %c0_i32_1 = arith.constant 0 : i32
    return %arg0, %c0_i32, %c0_i32_0 : i32, i32, i32
  }
  func.func @transform_3(%arg0: i32, %arg1: i32) -> (i32, i32, i32) {
    %c0_i32 = arith.constant 0 : i32
    %c0_i32_0 = arith.constant 0 : i32
    return %arg0, %arg1, %c0_i32 : i32, i32, i32
  }
  func.func @transform_4(%arg0: i32, %arg1: i32) -> (i32, i32, i32) {
    %c0_i32 = arith.constant 0 : i32
    %c0_i32_0 = arith.constant 0 : i32
    %c0_i32_1 = arith.constant 0 : i32
    return %arg0, %c0_i32, %c0_i32_0 : i32, i32, i32
  }
  func.func @transform_5(%arg0: i32, %arg1: i32) -> (i32, i32, i32) {
    %c0_i32 = arith.constant 0 : i32
    %c0_i32_0 = arith.constant 0 : i32
    %c0_i32_1 = arith.constant 0 : i32
    return %arg0, %c0_i32, %c0_i32_0 : i32, i32, i32
  }
}

module attributes {stable_mosaic.version = 11 : i64} {
  func.func @_layer_kernel(%arg0: i32, %arg1: i32, %arg2: memref<1x128x1024xbf16, #tpu.memory_space<vmem>>, %arg3: memref<1x1024x64xbf16, #tpu.memory_space<vmem>>, %arg4: memref<1x1x64xf32, #tpu.memory_space<vmem>>, %arg5: memref<1x128x64xbf16, #tpu.memory_space<vmem>>, %arg6: memref<1x1x64xf32, #tpu.memory_space<vmem>>, %arg7: memref<1x1x64xf32, #tpu.memory_space<vmem>>) attributes {dimension_semantics = [#tpu.dimension_semantics<parallel>, #tpu.dimension_semantics<arbitrary>], iteration_bounds = array<i64: 4, 1>, scalar_prefetch = 0 : i64, scratch_operands = 0 : i64, tpu.core_type = #tpu.core_type<tc>, window_params = [{transform_indices = @transform_0, window_bounds = array<i64: 1, 128, 1024>}, {transform_indices = @transform_1, window_bounds = array<i64: 1, 1024, 64>}, {transform_indices = @transform_2, window_bounds = array<i64: 1, 1, 64>}, {transform_indices = @transform_3, window_bounds = array<i64: 1, 128, 64>}, {transform_indices = @transform_4, window_bounds = array<i64: 1, 1, 64>}, {transform_indices = @transform_5, window_bounds = array<i64: 1, 1, 64>}]} {
    %c0 = arith.constant 0 : index
    %c0_0 = arith.constant 0 : index
    %c0_1 = arith.constant 0 : index
    %0 = vector.load %arg2[%c0, %c0_0, %c0_1] : memref<1x128x1024xbf16, #tpu.memory_space<vmem>>, vector<1x128x1024xbf16>
    %1 = vector.shape_cast %0 : vector<1x128x1024xbf16> to vector<128x1024xbf16>
    %c0_2 = arith.constant 0 : index
    %c0_3 = arith.constant 0 : index
    %c0_4 = arith.constant 0 : index
    %2 = vector.load %arg3[%c0_2, %c0_3, %c0_4] : memref<1x1024x64xbf16, #tpu.memory_space<vmem>>, vector<1x1024x64xbf16>
    %3 = vector.shape_cast %2 : vector<1x1024x64xbf16> to vector<1024x64xbf16>
    %cst = arith.constant dense<0.000000e+00> : vector<128x64xf32>
    %4 = tpu.matmul %1, %3, %cst {dimension_numbers = #tpu.dot_dimension_numbers<[1], [0], [0], [1], [0, 0, 1, 1], [], []>} : vector<128x1024xbf16>, vector<1024x64xbf16>, vector<128x64xf32> -> vector<128x64xf32>
    %c0_5 = arith.constant 0 : index
    %c0_6 = arith.constant 0 : index
    %c0_7 = arith.constant 0 : index
    %5 = vector.load %arg4[%c0_5, %c0_6, %c0_7] : memref<1x1x64xf32, #tpu.memory_space<vmem>>, vector<1x1x64xf32>
    %6 = vector.shape_cast %5 : vector<1x1x64xf32> to vector<1x64xf32>
    %7 = vector.broadcast %6 : vector<1x64xf32> to vector<128x64xf32>
    %8 = arith.addf %4, %7 : vector<128x64xf32>
    %cst_8 = arith.constant 0.000000e+00 : f32
    %9 = vector.broadcast %cst_8 : f32 to vector<128x64xf32>
    %10 = arith.maximumf %8, %9 : vector<128x64xf32>
    %11 = arith.truncf %10 : vector<128x64xf32> to vector<128x64xbf16>
    %c0_9 = arith.constant 0 : index
    %c0_10 = arith.constant 0 : index
    %c0_11 = arith.constant 0 : index
    %12 = vector.load %arg5[%c0_9, %c0_10, %c0_11] : memref<1x128x64xbf16, #tpu.memory_space<vmem>>, vector<1x128x64xbf16>
    %13 = vector.shape_cast %12 : vector<1x128x64xbf16> to vector<128x64xbf16>
    %14 = vector.shape_cast %11 : vector<128x64xbf16> to vector<1x128x64xbf16>
    tpu.vector_store %arg5[%c0_9, %c0_10, %c0_11], %14 {strides = array<i32>} : memref<1x128x64xbf16, #tpu.memory_space<vmem>>, vector<1x128x64xbf16>,
    %c0_i32 = arith.constant 0 : i32
    %15 = arith.cmpi eq, %arg1, %c0_i32 : i32
    %16 = arith.extui %15 : i1 to i32
    %c0_i32_12 = arith.constant 0 : i32
    %17 = arith.cmpi ne, %16, %c0_i32_12 : i32
    scf.if %17 {
      %cst_27 = arith.constant 0.000000e+00 : f32
      %35 = vector.broadcast %cst_27 : f32 to vector<1x1x64xf32>
      %c0_28 = arith.constant 0 : index
      %c0_29 = arith.constant 0 : index
      %c0_30 = arith.constant 0 : index
      %36 = vector.load %arg6[%c0_28, %c0_29, %c0_30] : memref<1x1x64xf32, #tpu.memory_space<vmem>>, vector<1x1x64xf32>
      tpu.vector_store %arg6[%c0_28, %c0_29, %c0_30], %35 {strides = array<i32>} : memref<1x1x64xf32, #tpu.memory_space<vmem>>, vector<1x1x64xf32>,
      %cst_31 = arith.constant 0.000000e+00 : f32
      %37 = vector.broadcast %cst_31 : f32 to vector<1x1x64xf32>
      %c0_32 = arith.constant 0 : index
      %c0_33 = arith.constant 0 : index
      %c0_34 = arith.constant 0 : index
      %38 = vector.load %arg7[%c0_32, %c0_33, %c0_34] : memref<1x1x64xf32, #tpu.memory_space<vmem>>, vector<1x1x64xf32>
      tpu.vector_store %arg7[%c0_32, %c0_33, %c0_34], %37 {strides = array<i32>} : memref<1x1x64xf32, #tpu.memory_space<vmem>>, vector<1x1x64xf32>,
    } else {
    }
    %c0_13 = arith.constant 0 : index
    %c0_14 = arith.constant 0 : index
    %c0_15 = arith.constant 0 : index
    %18 = vector.load %arg6[%c0_13, %c0_14, %c0_15] : memref<1x1x64xf32, #tpu.memory_space<vmem>>, vector<1x1x64xf32>
    %19 = vector.shape_cast %18 : vector<1x1x64xf32> to vector<1x64xf32>
    %cst_16 = arith.constant dense<0.000000e+00> : vector<64xf32>
    %20 = vector.multi_reduction <add>, %10, %cst_16 [0] : vector<128x64xf32> to vector<64xf32>
    %21 = vector.shape_cast %20 : vector<64xf32> to vector<1x64xf32>
    %22 = arith.addf %19, %21 : vector<1x64xf32>
    %c0_17 = arith.constant 0 : index
    %c0_18 = arith.constant 0 : index
    %c0_19 = arith.constant 0 : index
    %23 = vector.load %arg6[%c0_17, %c0_18, %c0_19] : memref<1x1x64xf32, #tpu.memory_space<vmem>>, vector<1x1x64xf32>
    %24 = vector.shape_cast %23 : vector<1x1x64xf32> to vector<1x64xf32>
    %25 = vector.shape_cast %22 : vector<1x64xf32> to vector<1x1x64xf32>
    tpu.vector_store %arg6[%c0_17, %c0_18, %c0_19], %25 {strides = array<i32>} : memref<1x1x64xf32, #tpu.memory_space<vmem>>, vector<1x1x64xf32>,
    %c0_20 = arith.constant 0 : index
    %c0_21 = arith.constant 0 : index
    %c0_22 = arith.constant 0 : index
    %26 = vector.load %arg7[%c0_20, %c0_21, %c0_22] : memref<1x1x64xf32, #tpu.memory_space<vmem>>, vector<1x1x64xf32>
    %27 = vector.shape_cast %26 : vector<1x1x64xf32> to vector<1x64xf32>
    %28 = arith.mulf %10, %10 : vector<128x64xf32>
    %cst_23 = arith.constant dense<0.000000e+00> : vector<64xf32>
    %29 = vector.multi_reduction <add>, %28, %cst_23 [0] : vector<128x64xf32> to vector<64xf32>
    %30 = vector.shape_cast %29 : vector<64xf32> to vector<1x64xf32>
    %31 = arith.addf %27, %30 : vector<1x64xf32>
    %c0_24 = arith.constant 0 : index
    %c0_25 = arith.constant 0 : index
    %c0_26 = arith.constant 0 : index
    %32 = vector.load %arg7[%c0_24, %c0_25, %c0_26] : memref<1x1x64xf32, #tpu.memory_space<vmem>>, vector<1x1x64xf32>
    %33 = vector.shape_cast %32 : vector<1x1x64xf32> to vector<1x64xf32>
    %34 = vector.shape_cast %31 : vector<1x64xf32> to vector<1x1x64xf32>
    tpu.vector_store %arg7[%c0_24, %c0_25, %c0_26], %34 {strides = array<i32>} : memref<1x1x64xf32, #tpu.memory_space<vmem>>, vector<1x1x64xf32>,
    return
  }
  func.func @transform_0(%arg0: i32, %arg1: i32) -> (i32, i32, i32) {
    %c0_i32 = arith.constant 0 : i32
    %c0_i32_0 = arith.constant 0 : i32
    return %arg0, %arg1, %c0_i32 : i32, i32, i32
  }
  func.func @transform_1(%arg0: i32, %arg1: i32) -> (i32, i32, i32) {
    %c0_i32 = arith.constant 0 : i32
    %c0_i32_0 = arith.constant 0 : i32
    %c0_i32_1 = arith.constant 0 : i32
    return %arg0, %c0_i32, %c0_i32_0 : i32, i32, i32
  }
  func.func @transform_2(%arg0: i32, %arg1: i32) -> (i32, i32, i32) {
    %c0_i32 = arith.constant 0 : i32
    %c0_i32_0 = arith.constant 0 : i32
    %c0_i32_1 = arith.constant 0 : i32
    return %arg0, %c0_i32, %c0_i32_0 : i32, i32, i32
  }
  func.func @transform_3(%arg0: i32, %arg1: i32) -> (i32, i32, i32) {
    %c0_i32 = arith.constant 0 : i32
    %c0_i32_0 = arith.constant 0 : i32
    return %arg0, %arg1, %c0_i32 : i32, i32, i32
  }
  func.func @transform_4(%arg0: i32, %arg1: i32) -> (i32, i32, i32) {
    %c0_i32 = arith.constant 0 : i32
    %c0_i32_0 = arith.constant 0 : i32
    %c0_i32_1 = arith.constant 0 : i32
    return %arg0, %c0_i32, %c0_i32_0 : i32, i32, i32
  }
  func.func @transform_5(%arg0: i32, %arg1: i32) -> (i32, i32, i32) {
    %c0_i32 = arith.constant 0 : i32
    %c0_i32_0 = arith.constant 0 : i32
    %c0_i32_1 = arith.constant 0 : i32
    return %arg0, %c0_i32, %c0_i32_0 : i32, i32, i32
  }
}

module attributes {stable_mosaic.version = 11 : i64} {
  func.func @_layer_kernel(%arg0: i32, %arg1: i32, %arg2: memref<1x512x256xbf16, #tpu.memory_space<vmem>>, %arg3: memref<1x256x128xbf16, #tpu.memory_space<vmem>>, %arg4: memref<1x1x128xf32, #tpu.memory_space<vmem>>, %arg5: memref<1x512x128xf32, #tpu.memory_space<vmem>>) attributes {dimension_semantics = [#tpu.dimension_semantics<parallel>, #tpu.dimension_semantics<parallel>], iteration_bounds = array<i64: 4, 1>, scalar_prefetch = 0 : i64, scratch_operands = 0 : i64, tpu.core_type = #tpu.core_type<tc>, window_params = [{transform_indices = @transform_0, window_bounds = array<i64: 1, 512, 256>}, {transform_indices = @transform_1, window_bounds = array<i64: 1, 256, 128>}, {transform_indices = @transform_2, window_bounds = array<i64: 1, 1, 128>}, {transform_indices = @transform_3, window_bounds = array<i64: 1, 512, 128>}]} {
    %c0 = arith.constant 0 : index
    %c0_0 = arith.constant 0 : index
    %c0_1 = arith.constant 0 : index
    %0 = vector.load %arg2[%c0, %c0_0, %c0_1] : memref<1x512x256xbf16, #tpu.memory_space<vmem>>, vector<1x512x256xbf16>
    %1 = vector.shape_cast %0 : vector<1x512x256xbf16> to vector<512x256xbf16>
    %c0_2 = arith.constant 0 : index
    %c0_3 = arith.constant 0 : index
    %c0_4 = arith.constant 0 : index
    %2 = vector.load %arg3[%c0_2, %c0_3, %c0_4] : memref<1x256x128xbf16, #tpu.memory_space<vmem>>, vector<1x256x128xbf16>
    %3 = vector.shape_cast %2 : vector<1x256x128xbf16> to vector<256x128xbf16>
    %cst = arith.constant dense<0.000000e+00> : vector<512x128xf32>
    %4 = tpu.matmul %1, %3, %cst {dimension_numbers = #tpu.dot_dimension_numbers<[1], [0], [0], [1], [0, 0, 1, 1], [], []>} : vector<512x256xbf16>, vector<256x128xbf16>, vector<512x128xf32> -> vector<512x128xf32>
    %c0_5 = arith.constant 0 : index
    %c0_6 = arith.constant 0 : index
    %c0_7 = arith.constant 0 : index
    %5 = vector.load %arg4[%c0_5, %c0_6, %c0_7] : memref<1x1x128xf32, #tpu.memory_space<vmem>>, vector<1x1x128xf32>
    %6 = vector.shape_cast %5 : vector<1x1x128xf32> to vector<1x128xf32>
    %7 = vector.broadcast %6 : vector<1x128xf32> to vector<512x128xf32>
    %8 = arith.addf %4, %7 : vector<512x128xf32>
    %c0_8 = arith.constant 0 : index
    %c0_9 = arith.constant 0 : index
    %c0_10 = arith.constant 0 : index
    %9 = vector.load %arg5[%c0_8, %c0_9, %c0_10] : memref<1x512x128xf32, #tpu.memory_space<vmem>>, vector<1x512x128xf32>
    %10 = vector.shape_cast %9 : vector<1x512x128xf32> to vector<512x128xf32>
    %11 = vector.shape_cast %8 : vector<512x128xf32> to vector<1x512x128xf32>
    tpu.vector_store %arg5[%c0_8, %c0_9, %c0_10], %11 {strides = array<i32>} : memref<1x512x128xf32, #tpu.memory_space<vmem>>, vector<1x512x128xf32>,
    return
  }
  func.func @transform_0(%arg0: i32, %arg1: i32) -> (i32, i32, i32) {
    %c0_i32 = arith.constant 0 : i32
    %c0_i32_0 = arith.constant 0 : i32
    return %arg0, %arg1, %c0_i32 : i32, i32, i32
  }
  func.func @transform_1(%arg0: i32, %arg1: i32) -> (i32, i32, i32) {
    %c0_i32 = arith.constant 0 : i32
    %c0_i32_0 = arith.constant 0 : i32
    %c0_i32_1 = arith.constant 0 : i32
    return %arg0, %c0_i32, %c0_i32_0 : i32, i32, i32
  }
  func.func @transform_2(%arg0: i32, %arg1: i32) -> (i32, i32, i32) {
    %c0_i32 = arith.constant 0 : i32
    %c0_i32_0 = arith.constant 0 : i32
    %c0_i32_1 = arith.constant 0 : i32
    return %arg0, %c0_i32, %c0_i32_0 : i32, i32, i32
  }
  func.func @transform_3(%arg0: i32, %arg1: i32) -> (i32, i32, i32) {
    %c0_i32 = arith.constant 0 : i32
    %c0_i32_0 = arith.constant 0 : i32
    return %arg0, %arg1, %c0_i32 : i32, i32, i32
  }
}

</mosaic_0001>

<llo_original>
// kernel: srcnn_forward.3
$region0: #{srcnn_forward.3}
  #allocation0 [shape = 'u32[]', space=smem, size = 0x4, offset = 0x4, fixed_abs, tag = 'smem constant byte address 0x4 - core index']
  #allocation1 [shape = 'u32[144,128]{1,0:T(1,128)}', space=vmem, size = 0x12000, scoped, tag = 'internal scratch']
  %s0 = inlined_call_operand.vmem [shape: bf16[1,128,48], index: 0, kind: input, shape index: {}]
  %s1 = inlined_call_operand.vmem [shape: bf16[1,48,256], index: 1, kind: input, shape index: {}]
  %s2 = inlined_call_operand.vmem [shape: f32[1,1,256], index: 2, kind: input, shape index: {}]
  %s3 = inlined_call_operand.vmem [shape: bf16[1,128,256], index: 3, kind: output, shape index: {0}]
  %s4 = inlined_call_operand.vmem [shape: f32[1,1,256], index: 4, kind: output, shape index: {1}]
  %s5 = inlined_call_operand.vmem [shape: f32[1,1,256], index: 5, kind: output, shape index: {2}]
  %6 = xla_tuple %s3, %s4, %s5
  %s7 = sld [smem:[#allocation0]]
  $region42: #{srcnn_forward.3} parent=0
    _
  %s9 = ssub.s32 1, %s7
  %s10 = scalar_select 0, %s9, %s7
  // Predicated region
  $region2: #{srcnn_forward.3} parent=0 // pred_check
    _
  $region3: #{srcnn_forward.3} parent=0 // pred_check_branch
    %12 = sbr.rel (0) target = $region5
  $region4: #{srcnn_forward.3} parent=0 // pred_region
    _
  $region5: #{srcnn_forward.3} parent=0 // pred_fallthru
    _
  // Predicated region
  $region6: #{srcnn_forward.3} parent=0 // pred_check
    _
  $region7: #{srcnn_forward.3} parent=0 // pred_check_branch
    %14 = sbr.rel (0) target = $region9
  $region8: #{srcnn_forward.3} parent=0 // pred_region
    _
  $region9: #{srcnn_forward.3} parent=0 // pred_fallthru
    _
  // Predicated region
  $region10: #{srcnn_forward.3} parent=0 // pred_check
    _
  $region11: #{srcnn_forward.3} parent=0 // pred_check_branch
    %16 = sbr.rel (0) target = $region13
  $region12: #{srcnn_forward.3} parent=0 // pred_region
    _
  $region13: #{srcnn_forward.3} parent=0 // pred_fallthru
    _
  %v18 = vld [vmem:[%s0] sm:$0xf]
  %v19 = vld [vmem:[%s0 + $0x4] sm:$0xf]
  %v20 = vld [vmem:[%s0 + $0x8] sm:$0xf]
  %v21 = vld [vmem:[%s0 + $0xc] sm:$0xf]
  %v22 = vld [vmem:[%s0 + $0x10] sm:$0xf]
  %v23 = vld [vmem:[%s0 + $0x14] sm:$0xf]
  %v24 = vld [vmem:[%s0 + $0x18] sm:$0xf]
  %v25 = vld [vmem:[%s0 + $0x1c] sm:$0xf]
  %v26 = vld [vmem:[%s0 + $0x20] sm:$0xf]
  %v27 = vld [vmem:[%s0 + $0x24] sm:$0xf]
  %v28 = vld [vmem:[%s0 + $0x28] sm:$0xf]
  %v29 = vld [vmem:[%s0 + $0x2c] sm:$0xf]
  %v30 = vld [vmem:[%s0 + $0x30] sm:$0xf]
  %v31 = vld [vmem:[%s0 + $0x34] sm:$0xf]
  %v32 = vld [vmem:[%s0 + $0x38] sm:$0xf]
  %v33 = vld [vmem:[%s0 + $0x3c] sm:$0xf]
  %v34 = vld [vmem:[%s1] sm:$0xff]
  %v35 = vld [vmem:[%s1 + $0x8] sm:$0xff]
  %v36 = vld [vmem:[%s1 + $0x10] sm:$0xff]
  %v37 = vld [vmem:[%s1 + $0x18] sm:$0xff]
  %v38 = vld [vmem:[%s1 + $0x20] sm:$0xff]
  %v39 = vld [vmem:[%s1 + $0x28] sm:$0xff]
  %v40 = vld [vmem:[%s2] sm:$0x3]
  %v42 = vlaneseq
  %v43 = vshrl.u32 %v42, 7
  %v44 = vsub.s32 0, %v43
  %v45 = vrot.slane %v40, %v44
  %v46 = vlaneseq
  %v47 = vshrl.u32 %v46, 7
  %v48 = vsub.s32 1, %v47
  %v49 = vrot.slane %v40, %v48
  %v68 = vunpack.c.l.b16 %v18
  %v69 = vunpack.c.l.b16 %v19
  %v70 = vunpack.c.l.b16 %v20
  %v71 = vunpack.c.l.b16 %v21
  %v72 = vunpack.c.l.b16 %v22
  %v73 = vunpack.c.l.b16 %v23
  %v74 = vunpack.c.l.b16 %v24
  %v75 = vunpack.c.l.b16 %v25
  %v76 = vunpack.c.l.b16 %v26
  %v77 = vunpack.c.l.b16 %v27
  %v78 = vunpack.c.l.b16 %v28
  %v79 = vunpack.c.l.b16 %v29
  %v80 = vunpack.c.l.b16 %v30
  %v81 = vunpack.c.l.b16 %v31
  %v82 = vunpack.c.l.b16 %v32
  %v83 = vunpack.c.l.b16 %v33
  %v84 = vpack.c.b16 %v69, %v68
  %v85 = vpack.c.b16 %v71, %v70
  %v86 = vpack.c.b16 %v73, %v72
  %v87 = vpack.c.b16 %v75, %v74
  %v88 = vpack.c.b16 %v77, %v76
  %v89 = vpack.c.b16 %v79, %v78
  %v90 = vpack.c.b16 %v81, %v80
  %v91 = vpack.c.b16 %v83, %v82
  %v98 = vunpack.c.l.b16 %v34
  %v99 = vunpack.c.h.b16 %v34
  %v100 = vunpack.c.l.b16 %v35
  %v101 = vunpack.c.h.b16 %v35
  %v102 = vunpack.c.l.b16 %v36
  %v103 = vunpack.c.h.b16 %v36
  %v104 = vunpack.c.l.b16 %v37
  %v105 = vunpack.c.h.b16 %v37
  %v106 = vunpack.c.l.b16 %v38
  %v107 = vunpack.c.h.b16 %v38
  %v108 = vunpack.c.l.b16 %v39
  %v109 = vunpack.c.h.b16 %v39
  %v110 = vpack.c.b16 %v100, %v98
  %v111 = vpack.c.b16 %v101, %v99
  %v112 = vpack.c.b16 %v104, %v102
  %v113 = vpack.c.b16 %v105, %v103
  %v114 = vpack.c.b16 %v108, %v106
  %v115 = vpack.c.b16 %v109, %v107
  %vm122 = vcmask 392192
  %v124 = vsel %vm122, %v84, 0
  %v127 = vsel %vm122, %v85, 0
  %v130 = vsel %vm122, %v86, 0
  %v133 = vsel %vm122, %v87, 0
  %v136 = vsel %vm122, %v88, 0
  %v139 = vsel %vm122, %v89, 0
  %v142 = vsel %vm122, %v90, 0
  %v145 = vsel %vm122, %v91, 0
  %147 = vmatprep.subr.bf16.mxu0 %v111
  %148 = vmatpush1.bf16.msra.mxu0 %v110
  %149 = vmatprep.subr.bf16.mxu0 %v113
  %150 = vmatpush1.bf16.msra.mxu0 %v112
  %151 = vmatprep.subr.bf16.mxu0 %v115
  %152 = vmatpush1.bf16.msra.mxu0 %v114
  %153 = vmatprep.subr.bf16.mxu0 0
  %154 = vmatpush1.bf16.msra.mxu0 0
  %155 = vmatprep.subr.bf16.mxu0 0
  %156 = vmatpush1.bf16.msra.mxu0 0
  %157 = vmatprep.subr.bf16.mxu0 0
  %158 = vmatpush1.bf16.msra.mxu0 0
  %159 = vmatprep.subr.bf16.mxu0 0
  %160 = vmatpush1.bf16.msra.mxu0 0
  %161 = vmatprep.subr.bf16.mxu0 0
  %162 = vmatpush1.bf16.msra.mxu0 0
  %163 = vmatprep.subr.bf16.mxu0 0
  %164 = vmatpush1.bf16.msra.mxu0 0
  %165 = vmatprep.subr.bf16.mxu0 0
  %166 = vmatpush1.bf16.msra.mxu0 0
  %167 = vmatprep.subr.bf16.mxu0 0
  %168 = vmatpush1.bf16.msra.mxu0 0
  %169 = vmatprep.subr.bf16.mxu0 0
  %170 = vmatpush1.bf16.msra.mxu0 0
  %171 = vmatprep.subr.bf16.mxu0 0
  %172 = vmatpush1.bf16.msra.mxu0 0
  %173 = vmatprep.subr.bf16.mxu0 0
  %174 = vmatpush1.bf16.msra.mxu0 0
  %175 = vmatprep.subr.bf16.mxu0 0
  %176 = vmatpush1.bf16.msra.mxu0 0
  %177 = vmatprep.subr.bf16.mxu0 0
  %178 = vmatpush1.bf16.msra.mxu0 0
  %179 = vmatprep.mubr.bf16.mxu0 0
  %180 = vmatmul.mubr.bf16.gmra.mrb[0].mxu0 %v124
  %v181 = vpop.f32.mrb[0].mxu0
  %v182 = vadd.f32 %v45, %v181
  %v183 = vpop.f32.mrb[0].mxu0
  %v184 = vadd.f32 %v49, %v183
  %v185 = vpop.f32.mrb[0].mxu0
  %v186 = vadd.f32 %v45, %v185
  %v187 = vpop.f32.mrb[0].mxu0
  %v188 = vadd.f32 %v49, %v187
  %189 = vmatprep.mubr.bf16.mxu0 0
  %190 = vmatmul.mubr.bf16.gmra.mrb[0].mxu0 %v127
  %v191 = vpop.f32.mrb[0].mxu0
  %v192 = vadd.f32 %v45, %v191
  %v193 = vpop.f32.mrb[0].mxu0
  %v194 = vadd.f32 %v49, %v193
  %v195 = vpop.f32.mrb[0].mxu0
  %v196 = vadd.f32 %v45, %v195
  %v197 = vpop.f32.mrb[0].mxu0
  %v198 = vadd.f32 %v49, %v197
  %199 = vmatprep.mubr.bf16.mxu0 0
  %200 = vmatmul.mubr.bf16.gmra.mrb[0].mxu0 %v130
  %v201 = vpop.f32.mrb[0].mxu0
  %v202 = vadd.f32 %v45, %v201
  %v203 = vpop.f32.mrb[0].mxu0
  %v204 = vadd.f32 %v49, %v203
  %v205 = vpop.f32.mrb[0].mxu0
  %v206 = vadd.f32 %v45, %v205
  %v207 = vpop.f32.mrb[0].mxu0
  %v208 = vadd.f32 %v49, %v207
  %209 = vmatprep.mubr.bf16.mxu0 0
  %210 = vmatmul.mubr.bf16.gmra.mrb[0].mxu0 %v133
  %v211 = vpop.f32.mrb[0].mxu0
  %v212 = vadd.f32 %v45, %v211
  %v213 = vpop.f32.mrb[0].mxu0
  %v214 = vadd.f32 %v49, %v213
  %v215 = vpop.f32.mrb[0].mxu0
  %v216 = vadd.f32 %v45, %v215
  %v217 = vpop.f32.mrb[0].mxu0
  %v218 = vadd.f32 %v49, %v217
  %219 = vmatprep.mubr.bf16.mxu0 0
  %220 = vmatmul.mubr.bf16.gmra.mrb[0].mxu0 %v136
  %v221 = vpop.f32.mrb[0].mxu0
  %v222 = vadd.f32 %v45, %v221
  %v223 = vpop.f32.mrb[0].mxu0
  %v224 = vadd.f32 %v49, %v223
  %v225 = vpop.f32.mrb[0].mxu0
  %v226 = vadd.f32 %v45, %v225
  %v227 = vpop.f32.mrb[0].mxu0
  %v228 = vadd.f32 %v49, %v227
  %229 = vmatprep.mubr.bf16.mxu0 0
  %230 = vmatmul.mubr.bf16.gmra.mrb[0].mxu0 %v139
  %v231 = vpop.f32.mrb[0].mxu0
  %v232 = vadd.f32 %v45, %v231
  %v233 = vpop.f32.mrb[0].mxu0
  %v234 = vadd.f32 %v49, %v233
  %v235 = vpop.f32.mrb[0].mxu0
  %v236 = vadd.f32 %v45, %v235
  %v237 = vpop.f32.mrb[0].mxu0
  %v238 = vadd.f32 %v49, %v237
  %239 = vmatprep.mubr.bf16.mxu0 0
  %240 = vmatmul.mubr.bf16.gmra.mrb[0].mxu0 %v142
  %v241 = vpop.f32.mrb[0].mxu0
  %v242 = vadd.f32 %v45, %v241
  %v243 = vpop.f32.mrb[0].mxu0
  %v244 = vadd.f32 %v49, %v243
  %v245 = vpop.f32.mrb[0].mxu0
  %v246 = vadd.f32 %v45, %v245
  %v247 = vpop.f32.mrb[0].mxu0
  %v248 = vadd.f32 %v49, %v247
  %249 = vmatprep.mubr.bf16.mxu0 0
  %250 = vmatmul.mubr.bf16.gmra.mrb[0].mxu0 %v145
  %v251 = vpop.f32.mrb[0].mxu0
  %v252 = vadd.f32 %v45, %v251
  %v253 = vpop.f32.mrb[0].mxu0
  %v254 = vadd.f32 %v49, %v253
  %v255 = vpop.f32.mrb[0].mxu0
  %v256 = vadd.f32 %v45, %v255
  %v257 = vpop.f32.mrb[0].mxu0
  %v258 = vadd.f32 %v49, %v257
  %259 = vdwg.mxu0
  %v260 = vmax.f32 %v182, 0.0
  %v261 = vmax.f32 %v184, 0.0
  %v262 = vmax.f32 %v186, 0.0
  %v263 = vmax.f32 %v188, 0.0
  %v264 = vmax.f32 %v192, 0.0
  %v265 = vmax.f32 %v194, 0.0
  %v266 = vmax.f32 %v196, 0.0
  %v267 = vmax.f32 %v198, 0.0
  %v268 = vmax.f32 %v202, 0.0
  %v269 = vmax.f32 %v204, 0.0
  %v270 = vmax.f32 %v206, 0.0
  %v271 = vmax.f32 %v208, 0.0
  %v272 = vmax.f32 %v212, 0.0
  %v273 = vmax.f32 %v214, 0.0
  %v274 = vmax.f32 %v216, 0.0
  %v275 = vmax.f32 %v218, 0.0
  %v276 = vmax.f32 %v222, 0.0
  %v277 = vmax.f32 %v224, 0.0
  %v278 = vmax.f32 %v226, 0.0
  %v279 = vmax.f32 %v228, 0.0
  %v280 = vmax.f32 %v232, 0.0
  %v281 = vmax.f32 %v234, 0.0
  %v282 = vmax.f32 %v236, 0.0
  %v283 = vmax.f32 %v238, 0.0
  %v284 = vmax.f32 %v242, 0.0
  %v285 = vmax.f32 %v244, 0.0
  %v286 = vmax.f32 %v246, 0.0
  %v287 = vmax.f32 %v248, 0.0
  %v288 = vmax.f32 %v252, 0.0
  %v289 = vmax.f32 %v254, 0.0
  %v290 = vmax.f32 %v256, 0.0
  %v291 = vmax.f32 %v258, 0.0
  %v292 = vpack.c.bf16 %v262, %v260
  %v293 = vpack.c.bf16 %v263, %v261
  %v294 = vpack.c.bf16 %v266, %v264
  %v295 = vpack.c.bf16 %v267, %v265
  %v296 = vpack.c.bf16 %v270, %v268
  %v297 = vpack.c.bf16 %v271, %v269
  %v298 = vpack.c.bf16 %v274, %v272
  %v299 = vpack.c.bf16 %v275, %v273
  %v300 = vpack.c.bf16 %v278, %v276
  %v301 = vpack.c.bf16 %v279, %v277
  %v302 = vpack.c.bf16 %v282, %v280
  %v303 = vpack.c.bf16 %v283, %v281
  %v304 = vpack.c.bf16 %v286, %v284
  %v305 = vpack.c.bf16 %v287, %v285
  %v306 = vpack.c.bf16 %v290, %v288
  %v307 = vpack.c.bf16 %v291, %v289
  %v324 = vunpack.c.l.b16 %v292
  %v325 = vunpack.c.l.b16 %v293
  %v326 = vunpack.c.h.b16 %v292
  %v327 = vunpack.c.h.b16 %v293
  %v328 = vunpack.c.l.b16 %v294
  %v329 = vunpack.c.l.b16 %v295
  %v330 = vunpack.c.h.b16 %v294
  %v331 = vunpack.c.h.b16 %v295
  %v332 = vunpack.c.l.b16 %v296
  %v333 = vunpack.c.l.b16 %v297
  %v334 = vunpack.c.h.b16 %v296
  %v335 = vunpack.c.h.b16 %v297
  %v336 = vunpack.c.l.b16 %v298
  %v337 = vunpack.c.l.b16 %v299
  %v338 = vunpack.c.h.b16 %v298
  %v339 = vunpack.c.h.b16 %v299
  %v340 = vunpack.c.l.b16 %v300
  %v341 = vunpack.c.l.b16 %v301
  %v342 = vunpack.c.h.b16 %v300
  %v343 = vunpack.c.h.b16 %v301
  %v344 = vunpack.c.l.b16 %v302
  %v345 = vunpack.c.l.b16 %v303
  %v346 = vunpack.c.h.b16 %v302
  %v347 = vunpack.c.h.b16 %v303
  %v348 = vunpack.c.l.b16 %v304
  %v349 = vunpack.c.l.b16 %v305
  %v350 = vunpack.c.h.b16 %v304
  %v351 = vunpack.c.h.b16 %v305
  %v352 = vunpack.c.l.b16 %v306
  %v353 = vunpack.c.l.b16 %v307
  %v354 = vunpack.c.h.b16 %v306
  %v355 = vunpack.c.h.b16 %v307
  %v356 = vpack.c.b16 %v325, %v324
  %v357 = vpack.c.b16 %v327, %v326
  %v358 = vpack.c.b16 %v329, %v328
  %v359 = vpack.c.b16 %v331, %v330
  %v360 = vpack.c.b16 %v333, %v332
  %v361 = vpack.c.b16 %v335, %v334
  %v362 = vpack.c.b16 %v337, %v336
  %v363 = vpack.c.b16 %v339, %v338
  %v364 = vpack.c.b16 %v341, %v340
  %v365 = vpack.c.b16 %v343, %v342
  %v366 = vpack.c.b16 %v345, %v344
  %v367 = vpack.c.b16 %v347, %v346
  %v368 = vpack.c.b16 %v349, %v348
  %v369 = vpack.c.b16 %v351, %v350
  %v370 = vpack.c.b16 %v353, %v352
  %v371 = vpack.c.b16 %v355, %v354
  %388 = vst [vmem:[%s3] sm:$0xff] %v356
  %389 = vst [vmem:[%s3 + $0x8] sm:$0xff] %v357
  %390 = vst [vmem:[%s3 + $0x10] sm:$0xff] %v358
  %391 = vst [vmem:[%s3 + $0x18] sm:$0xff] %v359
  %392 = vst [vmem:[%s3 + $0x20] sm:$0xff] %v360
  %393 = vst [vmem:[%s3 + $0x28] sm:$0xff] %v361
  %394 = vst [vmem:[%s3 + $0x30] sm:$0xff] %v362
  %395 = vst [vmem:[%s3 + $0x38] sm:$0xff] %v363
  %396 = vst [vmem:[%s3 + $0x40] sm:$0xff] %v364
  %397 = vst [vmem:[%s3 + $0x48] sm:$0xff] %v365
  %398 = vst [vmem:[%s3 + $0x50] sm:$0xff] %v366
  %399 = vst [vmem:[%s3 + $0x58] sm:$0xff] %v367
  %400 = vst [vmem:[%s3 + $0x60] sm:$0xff] %v368
  %401 = vst [vmem:[%s3 + $0x68] sm:$0xff] %v369
  %402 = vst [vmem:[%s3 + $0x70] sm:$0xff] %v370
  %403 = vst [vmem:[%s3 + $0x78] sm:$0xff] %v371
  %p404 = scmp.eq.s32.totalorder 0, 0
  // Predicated region
  $region14: #{srcnn_forward.3} parent=0 // pred_check
    %p405 = pneg %p404
  $region15: #{srcnn_forward.3} parent=0 // pred_check_branch
    %407 = sbr.rel (%p405) target = $region17
  $region16: #{srcnn_forward.3} parent=0 // pred_region
    %v408 = vlaneseq
    %vm409 = vcmp.ge.s32.totalorder %v408, 0
    %vm410 = vcmp.lt.s32.totalorder %v408, 256
    %vm411 = vmand %vm409, %vm410
    %412 = vst.msk [vmem:[%s4] sm:$0x3] %vm411, 0.0
    %413 = vst.msk [vmem:[%s5] sm:$0x3] %vm411, 0.0
  $region17: #{srcnn_forward.3} parent=0 // pred_fallthru
    _
  %v414 = vld [vmem:[%s4] sm:$0x3]
  %v415 = vadd.f32 %v260, %v262
  %v416 = vadd.f32 %v415, %v264
  %v417 = vadd.f32 %v416, %v266
  %v418 = vadd.f32 %v417, %v268
  %v419 = vadd.f32 %v418, %v270
  %v420 = vadd.f32 %v419, %v272
  %v421 = vadd.f32 %v420, %v274
  %v422 = vadd.f32 %v421, %v276
  %v423 = vadd.f32 %v422, %v278
  %v424 = vadd.f32 %v423, %v280
  %v425 = vadd.f32 %v424, %v282
  %v426 = vadd.f32 %v425, %v284
  %v427 = vadd.f32 %v426, %v286
  %v428 = vadd.f32 %v427, %v288
  %v429 = vadd.f32 %v428, %v290
  %v430 = vrot.slane %v429, 4
  %v431 = vadd.f32 %v429, %v430
  %v432 = vrot.slane %v431, 2
  %v433 = vadd.f32 %v431, %v432
  %v434 = vrot.slane %v433, 1
  %v435 = vadd.f32 %v433, %v434
  %v436 = vadd.f32 %v261, %v263
  %v437 = vadd.f32 %v436, %v265
  %v438 = vadd.f32 %v437, %v267
  %v439 = vadd.f32 %v438, %v269
  %v440 = vadd.f32 %v439, %v271
  %v441 = vadd.f32 %v440, %v273
  %v442 = vadd.f32 %v441, %v275
  %v443 = vadd.f32 %v442, %v277
  %v444 = vadd.f32 %v443, %v279
  %v445 = vadd.f32 %v444, %v281
  %v446 = vadd.f32 %v445, %v283
  %v447 = vadd.f32 %v446, %v285
  %v448 = vadd.f32 %v447, %v287
  %v449 = vadd.f32 %v448, %v289
  %v450 = vadd.f32 %v449, %v291
  %v451 = vrot.slane %v450, 4
  %v452 = vadd.f32 %v450, %v451
  %v453 = vrot.slane %v452, 2
  %v454 = vadd.f32 %v452, %v453
  %v455 = vrot.slane %v454, 1
  %v456 = vadd.f32 %v454, %v455
  %v459 = vcombine.low %v435, %v456
  %v461 = vunpack.c.l.s4 1966171168
  %v462 = vunpack.c.0.s8 %v461
  %v463 = vlaneseq
  %v464 = vshrl.u32 %v463, 7
  %v465 = vsub.s32 %v462, %v464
  %v466 = vrot.slane %v459, %v465
  %v468 = vunpack.c.l.s4 1966171168
  %v469 = vunpack.c.0.s8 %v468
  %v470 = vlaneseq
  %v471 = vshrl.u32 %v470, 7
  %v472 = vsub.s32 %v469, %v471
  %v473 = vrot.slane %v466, %v472
  %v475 = vadd.f32 %v414, %v473
  %v476 = vlaneseq
  %vm477 = vcmp.ge.s32.totalorder %v476, 0
  %vm478 = vcmp.lt.s32.totalorder %v476, 256
  %vm479 = vmand %vm477, %vm478
  %480 = vst.msk [vmem:[%s4] sm:$0x3] %vm479, %v475
  %v481 = vld [vmem:[%s5] sm:$0x3]
  %v482 = vmul.f32 %v260, %v260
  %v483 = vmul.f32 %v261, %v261
  %v484 = vmul.f32 %v262, %v262
  %v485 = vmul.f32 %v263, %v263
  %v486 = vmul.f32 %v264, %v264
  %v487 = vmul.f32 %v265, %v265
  %v488 = vmul.f32 %v266, %v266
  %v489 = vmul.f32 %v267, %v267
  %v490 = vmul.f32 %v268, %v268
  %v491 = vmul.f32 %v269, %v269
  %v492 = vmul.f32 %v270, %v270
  %v493 = vmul.f32 %v271, %v271
  %v494 = vmul.f32 %v272, %v272
  %v495 = vmul.f32 %v273, %v273
  %v496 = vmul.f32 %v274, %v274
  %v497 = vmul.f32 %v275, %v275
  %v498 = vmul.f32 %v276, %v276
  %v499 = vmul.f32 %v277, %v277
  %v500 = vmul.f32 %v278, %v278
  %v501 = vmul.f32 %v279, %v279
  %v502 = vmul.f32 %v280, %v280
  %v503 = vmul.f32 %v281, %v281
  %v504 = vmul.f32 %v282, %v282
  %v505 = vmul.f32 %v283, %v283
  %v506 = vmul.f32 %v284, %v284
  %v507 = vmul.f32 %v285, %v285
  %v508 = vmul.f32 %v286, %v286
  %v509 = vmul.f32 %v287, %v287
  %v510 = vmul.f32 %v288, %v288
  %v511 = vmul.f32 %v289, %v289
  %v512 = vmul.f32 %v290, %v290
  %v513 = vmul.f32 %v291, %v291
  %v514 = vadd.f32 %v482, %v484
  %v515 = vadd.f32 %v514, %v486
  %v516 = vadd.f32 %v515, %v488
  %v517 = vadd.f32 %v516, %v490
  %v518 = vadd.f32 %v517, %v492
  %v519 = vadd.f32 %v518, %v494
  %v520 = vadd.f32 %v519, %v496
  %v521 = vadd.f32 %v520, %v498
  %v522 = vadd.f32 %v521, %v500
  %v523 = vadd.f32 %v522, %v502
  %v524 = vadd.f32 %v523, %v504
  %v525 = vadd.f32 %v524, %v506
  %v526 = vadd.f32 %v525, %v508
  %v527 = vadd.f32 %v526, %v510
  %v528 = vadd.f32 %v527, %v512
  %v529 = vrot.slane %v528, 4
  %v530 = vadd.f32 %v528, %v529
  %v531 = vrot.slane %v530, 2
  %v532 = vadd.f32 %v530, %v531
  %v533 = vrot.slane %v532, 1
  %v534 = vadd.f32 %v532, %v533
  %v535 = vadd.f32 %v483, %v485
  %v536 = vadd.f32 %v535, %v487
  %v537 = vadd.f32 %v536, %v489
  %v538 = vadd.f32 %v537, %v491
  %v539 = vadd.f32 %v538, %v493
  %v540 = vadd.f32 %v539, %v495
  %v541 = vadd.f32 %v540, %v497
  %v542 = vadd.f32 %v541, %v499
  %v543 = vadd.f32 %v542, %v501
  %v544 = vadd.f32 %v543, %v503
  %v545 = vadd.f32 %v544, %v505
  %v546 = vadd.f32 %v545, %v507
  %v547 = vadd.f32 %v546, %v509
  %v548 = vadd.f32 %v547, %v511
  %v549 = vadd.f32 %v548, %v513
  %v550 = vrot.slane %v549, 4
  %v551 = vadd.f32 %v549, %v550
  %v552 = vrot.slane %v551, 2
  %v553 = vadd.f32 %v551, %v552
  %v554 = vrot.slane %v553, 1
  %v555 = vadd.f32 %v553, %v554
  %v558 = vcombine.low %v534, %v555
  %v560 = vunpack.c.l.s4 1966171168
  %v561 = vunpack.c.0.s8 %v560
  %v562 = vlaneseq
  %v563 = vshrl.u32 %v562, 7
  %v564 = vsub.s32 %v561, %v563
  %v565 = vrot.slane %v558, %v564
  %v567 = vunpack.c.l.s4 1966171168
  %v568 = vunpack.c.0.s8 %v567
  %v569 = vlaneseq
  %v570 = vshrl.u32 %v569, 7
  %v571 = vsub.s32 %v568, %v570
  %v572 = vrot.slane %v565, %v571
  %v574 = vadd.f32 %v481, %v572
  %575 = vst.msk [vmem:[%s5] sm:$0x3] %vm479, %v574
  // Predicated region
  $region18: #{srcnn_forward.3} parent=0 // pred_check
    _
  $region19: #{srcnn_forward.3} parent=0 // pred_check_branch
    %577 = sbr.rel (0) target = $region21
  $region20: #{srcnn_forward.3} parent=0 // pred_region
    _
  $region21: #{srcnn_forward.3} parent=0 // pred_fallthru
    _
  // Predicated region
  $region22: #{srcnn_forward.3} parent=0 // pred_check
    _
  $region23: #{srcnn_forward.3} parent=0 // pred_check_branch
    %579 = sbr.rel (0) target = $region25
  $region24: #{srcnn_forward.3} parent=0 // pred_region
    _
  $region25: #{srcnn_forward.3} parent=0 // pred_fallthru
    _
  // Predicated region
  $region26: #{srcnn_forward.3} parent=0 // pred_check
    _
  $region27: #{srcnn_forward.3} parent=0 // pred_check_branch
    %581 = sbr.rel (0) target = $region29
  $region28: #{srcnn_forward.3} parent=0 // pred_region
    _
  $region29: #{srcnn_forward.3} parent=0 // pred_fallthru
    _
  // Predicated region
  $region30: #{srcnn_forward.3} parent=0 // pred_check
    _
  $region31: #{srcnn_forward.3} parent=0 // pred_check_branch
    %583 = sbr.rel (0) target = $region33
  $region32: #{srcnn_forward.3} parent=0 // pred_region
    _
  $region33: #{srcnn_forward.3} parent=0 // pred_fallthru
    _
  // Predicated region
  $region34: #{srcnn_forward.3} parent=0 // pred_check
    _
  $region35: #{srcnn_forward.3} parent=0 // pred_check_branch
    %585 = sbr.rel (0) target = $region37
  $region36: #{srcnn_forward.3} parent=0 // pred_region
    _
  $region37: #{srcnn_forward.3} parent=0 // pred_fallthru
    _
  // Predicated region
  $region38: #{srcnn_forward.3} parent=0 // pred_check
    _
  $region39: #{srcnn_forward.3} parent=0 // pred_check_branch
    %587 = sbr.rel (0) target = $region41
  $region40: #{srcnn_forward.3} parent=0 // pred_region
    _
  $region41: #{srcnn_forward.3} parent=0 // pred_fallthru
    _

// kernel: srcnn_forward.4
$region0: #{srcnn_forward.4}
  #allocation0 [shape = 'u32[]', space=smem, size = 0x4, offset = 0x4, fixed_abs, tag = 'smem constant byte address 0x4 - core index']
  #allocation1 [shape = 'u32[144,128]{1,0:T(1,128)}', space=vmem, size = 0x12000, scoped, tag = 'internal scratch']
  %s0 = inlined_call_operand.vmem [shape: bf16[4,128,1024], index: 0, kind: input, shape index: {}]
  %s1 = inlined_call_operand.vmem [shape: bf16[4,1024,64], index: 1, kind: input, shape index: {}]
  %s2 = inlined_call_operand.vmem [shape: f32[4,1,64], index: 2, kind: input, shape index: {}]
  %s3 = inlined_call_operand.vmem [shape: bf16[4,128,64], index: 3, kind: output, shape index: {0}]
  %s4 = inlined_call_operand.vmem [shape: f32[4,1,64], index: 4, kind: output, shape index: {1}]
  %s5 = inlined_call_operand.vmem [shape: f32[4,1,64], index: 5, kind: output, shape index: {2}]
  %6 = xla_tuple %s3, %s4, %s5
  %s7 = sld [smem:[#allocation0]]
  $region65: #{srcnn_forward.4} parent=0
    _
  %s9 = ssub.s32 1, %s7
  %s10 = scalar_select 0, %s9, %s7
  loop: start=0, step=1, limit=6
  $region2: #{srcnn_forward.4} parent=0 // loop_pre_header
    _
  $region3: #{srcnn_forward.4} parent=0 // loop_header
    %s12 = sphi 0, %s16
    %p13 = scmp.ge.s32.totalorder %s12, 6
    %s19 = sphi 0, %s31
    %s20 = sphi 0, %s27
    %s21 = sphi 0, %s19
    %s22 = sphi 0, %s20
    %s23 = sphi 0, %s21
    %s24 = sphi 0, %s22
    %s36 = sphi 0, %s38
    %s39 = sphi 0, %s36
    %s40 = sphi 0, %s39
    %s56 = sphi 0, %s40
    %s62 = sphi 0, %s64
    %s65 = sphi 0, %s62
    %s66 = sphi 0, %s65
    %s82 = sphi 0, %s66
    %s88 = sphi 0, %s90
    %s91 = sphi 0, %s88
    %s92 = sphi 0, %s91
    %s108 = sphi 0, %s92
    %s116 = sphi 0, %s118
    %s119 = sphi 0, %s116
    %s120 = sphi 0, %s119
    %s136 = sphi 0, %s120
    %s142 = sphi 0, %s144
    %s145 = sphi 0, %s142
    %s146 = sphi 0, %s145
    %s162 = sphi 0, %s146
    %s168 = sphi 0, %s170
    %s171 = sphi 0, %s168
    %s172 = sphi 0, %s171
    %s188 = sphi 0, %s172
  $region4: #{srcnn_forward.4} parent=0 // loop_header_branch
    %15 = sbr.rel (%p13) target = $region8
  $region5: #{srcnn_forward.4} parent=0 // loop_body
    %s17 = ssub.s32 %s12, 1
    %s18 = ssub.s32 %s12, 2
    %s25 = sadd.s32 1, %s20
    %p26 = scmp.ge.s32.totalorder %s25, 1
    %s27 = scalar_select %p26, 0, %s25
    %s28 = sadd.s32 1, %s19
    %s29 = scalar_select %p26, %s28, %s19
    %p30 = scmp.ge.s32.totalorder %s29, 4
    %s31 = scalar_select %p30, 0, %s29
    %s32 = ssub.s32 %s19, %s31
    %s33 = ssub.s32 %s20, %s27
    %s34 = sor.u32 %s32, %s33
    %p35 = scmp.eq.s32.totalorder %s34, 0
    %s37 = sadd.s32 %s36, 1
    %s38 = scalar_select %p35, %s36, %s37
    %p41 = pneg %p35
    %p42 = scmp.eq.s32.totalorder %s12, 3
    %p43 = por %p41, %p42
    %p44 = scmp.ne.s32.totalorder %s36, %s39
    %p45 = scmp.eq.s32.totalorder %s12, 0
    %p46 = por %p44, %p45
    %p47 = scmp.ne.s32.totalorder %s36, %s39
    %p48 = scmp.eq.s32.totalorder %s17, 3
    %p49 = por %p47, %p48
    %p50 = scmp.ne.s32.totalorder %s39, %s40
    %p51 = scmp.eq.s32.totalorder %s17, 0
    %p52 = por %p50, %p51
    %p53 = scmp.ne.s32.totalorder %s39, %s40
    %p54 = scmp.eq.s32.totalorder %s18, 3
    %p55 = por %p53, %p54
    %p57 = scmp.ne.s32.totalorder %s40, %s56
    %p58 = scmp.eq.s32.totalorder %s18, 0
    %p59 = por %p57, %p58
    %s60 = ssub.s32 %s19, %s31
    %p61 = scmp.eq.s32.totalorder %s60, 0
    %s63 = sadd.s32 %s62, 1
    %s64 = scalar_select %p61, %s62, %s63
    %p67 = pneg %p61
    %p68 = scmp.eq.s32.totalorder %s12, 3
    %p69 = por %p67, %p68
    %p70 = scmp.ne.s32.totalorder %s62, %s65
    %p71 = scmp.eq.s32.totalorder %s12, 0
    %p72 = por %p70, %p71
    %p73 = scmp.ne.s32.totalorder %s62, %s65
    %p74 = scmp.eq.s32.totalorder %s17, 3
    %p75 = por %p73, %p74
    %p76 = scmp.ne.s32.totalorder %s65, %s66
    %p77 = scmp.eq.s32.totalorder %s17, 0
    %p78 = por %p76, %p77
    %p79 = scmp.ne.s32.totalorder %s65, %s66
    %p80 = scmp.eq.s32.totalorder %s18, 3
    %p81 = por %p79, %p80
    %p83 = scmp.ne.s32.totalorder %s66, %s82
    %p84 = scmp.eq.s32.totalorder %s18, 0
    %p85 = por %p83, %p84
    %s86 = ssub.s32 %s19, %s31
    %p87 = scmp.eq.s32.totalorder %s86, 0
    %s89 = sadd.s32 %s88, 1
    %s90 = scalar_select %p87, %s88, %s89
    %p93 = pneg %p87
    %p94 = scmp.eq.s32.totalorder %s12, 3
    %p95 = por %p93, %p94
    %p96 = scmp.ne.s32.totalorder %s88, %s91
    %p97 = scmp.eq.s32.totalorder %s12, 0
    %p98 = por %p96, %p97
    %p99 = scmp.ne.s32.totalorder %s88, %s91
    %p100 = scmp.eq.s32.totalorder %s17, 3
    %p101 = por %p99, %p100
    %p102 = scmp.ne.s32.totalorder %s91, %s92
    %p103 = scmp.eq.s32.totalorder %s17, 0
    %p104 = por %p102, %p103
    %p105 = scmp.ne.s32.totalorder %s91, %s92
    %p106 = scmp.eq.s32.totalorder %s18, 3
    %p107 = por %p105, %p106
    %p109 = scmp.ne.s32.totalorder %s92, %s108
    %p110 = scmp.eq.s32.totalorder %s18, 0
    %p111 = por %p109, %p110
    %s112 = ssub.s32 %s19, %s31
    %s113 = ssub.s32 %s20, %s27
    %s114 = sor.u32 %s112, %s113
    %p115 = scmp.eq.s32.totalorder %s114, 0
    %s117 = sadd.s32 %s116, 1
    %s118 = scalar_select %p115, %s116, %s117
    %p121 = pneg %p115
    %p122 = scmp.eq.s32.totalorder %s12, 3
    %p123 = por %p121, %p122
    %p124 = scmp.ne.s32.totalorder %s116, %s119
    %p125 = scmp.eq.s32.totalorder %s12, 0
    %p126 = por %p124, %p125
    %p127 = scmp.ne.s32.totalorder %s116, %s119
    %p128 = scmp.eq.s32.totalorder %s17, 3
    %p129 = por %p127, %p128
    %p130 = scmp.ne.s32.totalorder %s119, %s120
    %p131 = scmp.eq.s32.totalorder %s17, 0
    %p132 = por %p130, %p131
    %p133 = scmp.ne.s32.totalorder %s119, %s120
    %p134 = scmp.eq.s32.totalorder %s18, 3
    %p135 = por %p133, %p134
    %p137 = scmp.ne.s32.totalorder %s120, %s136
    %p138 = scmp.eq.s32.totalorder %s18, 0
    %p139 = por %p137, %p138
    %s140 = ssub.s32 %s19, %s31
    %p141 = scmp.eq.s32.totalorder %s140, 0
    %s143 = sadd.s32 %s142, 1
    %s144 = scalar_select %p141, %s142, %s143
    %p147 = pneg %p141
    %p148 = scmp.eq.s32.totalorder %s12, 3
    %p149 = por %p147, %p148
    %p150 = scmp.ne.s32.totalorder %s142, %s145
    %p151 = scmp.eq.s32.totalorder %s12, 0
    %p152 = por %p150, %p151
    %p153 = scmp.ne.s32.totalorder %s142, %s145
    %p154 = scmp.eq.s32.totalorder %s17, 3
    %p155 = por %p153, %p154
    %p156 = scmp.ne.s32.totalorder %s145, %s146
    %p157 = scmp.eq.s32.totalorder %s17, 0
    %p158 = por %p156, %p157
    %p159 = scmp.ne.s32.totalorder %s145, %s146
    %p160 = scmp.eq.s32.totalorder %s18, 3
    %p161 = por %p159, %p160
    %p163 = scmp.ne.s32.totalorder %s146, %s162
    %p164 = scmp.eq.s32.totalorder %s18, 0
    %p165 = por %p163, %p164
    %s166 = ssub.s32 %s19, %s31
    %p167 = scmp.eq.s32.totalorder %s166, 0
    %s169 = sadd.s32 %s168, 1
    %s170 = scalar_select %p167, %s168, %s169
    %p173 = pneg %p167
    %p174 = scmp.eq.s32.totalorder %s12, 3
    %p175 = por %p173, %p174
    %p176 = scmp.ne.s32.totalorder %s168, %s171
    %p177 = scmp.eq.s32.totalorder %s12, 0
    %p178 = por %p176, %p177
    %p179 = scmp.ne.s32.totalorder %s168, %s171
    %p180 = scmp.eq.s32.totalorder %s17, 3
    %p181 = por %p179, %p180
    %p182 = scmp.ne.s32.totalorder %s171, %s172
    %p183 = scmp.eq.s32.totalorder %s17, 0
    %p184 = por %p182, %p183
    %p185 = scmp.ne.s32.totalorder %s171, %s172
    %p186 = scmp.eq.s32.totalorder %s18, 3
    %p187 = por %p185, %p186
    %p189 = scmp.ne.s32.totalorder %s172, %s188
    %p190 = scmp.eq.s32.totalorder %s18, 0
    %p191 = por %p189, %p190
    %p192 = scmp.le.s32.totalorder 1, %s12
    %p193 = scmp.lt.s32.totalorder %s12, 5
    %p194 = pnand %p192, %p193
    %p195 = pneg %p194
    // Predicated region
    $region9: #{srcnn_forward.4} parent=5 // pred_check
      _
    $region10: #{srcnn_forward.4} parent=5 // pred_check_branch
      %197 = sbr.rel (%p194) target = $region12
    $region11: #{srcnn_forward.4} parent=5 // pred_region
      %s198 = ssub.s32 %s12, 1
    $region12: #{srcnn_forward.4} parent=5 // pred_fallthru
      _
    %p199 = scmp.lt.s32.totalorder %s12, 4
    // Predicated region
    $region13: #{srcnn_forward.4} parent=5 // pred_check
      %p200 = pneg %p199
    $region14: #{srcnn_forward.4} parent=5 // pred_check_branch
      %202 = sbr.rel (%p200) target = $region16
    $region15: #{srcnn_forward.4} parent=5 // pred_region
      // Predicated region
      $region17: #{srcnn_forward.4} parent=15 // pred_check
        %p203 = pneg %p46
      $region18: #{srcnn_forward.4} parent=15 // pred_check_branch
        %205 = sbr.rel (%p203) target = $region20
      $region19: #{srcnn_forward.4} parent=15 // pred_region
        %s206 = smul.u32 16, %s20
        %p207 = scmp.lt.s32.totalorder %s19, 3
        %s208 = scalar_select %p207, %s19, 3
        %p209 = scmp.lt.s32.totalorder %s206, 15
        %s210 = scalar_select %p209, %s206, 15
        %s211 = smul.addr %s210, 8
        %s212 = smul.addr %s208, 128
        %s213 = sadd.s32 %s211, %s212
        %s214 = smul.addr %s213, 4
        %s215 = scalar_lea.vmem %s0, %s214
        %s216 = smul.u32 16, %s20
      $region20: #{srcnn_forward.4} parent=15 // pred_fallthru
        _
      // Predicated region
      $region21: #{srcnn_forward.4} parent=15 // pred_check
        %p217 = pneg %p72
      $region22: #{srcnn_forward.4} parent=15 // pred_check_branch
        %219 = sbr.rel (%p217) target = $region24
      $region23: #{srcnn_forward.4} parent=15 // pred_region
        %p220 = scmp.lt.s32.totalorder %s19, 3
        %s221 = scalar_select %p220, %s19, 3
        %s222 = smul.addr %s221, 128
        %s223 = smul.addr %s222, 4
        %s224 = scalar_lea.vmem %s1, %s223
      $region24: #{srcnn_forward.4} parent=15 // pred_fallthru
        _
      // Predicated region
      $region25: #{srcnn_forward.4} parent=15 // pred_check
        %p225 = pneg %p98
      $region26: #{srcnn_forward.4} parent=15 // pred_check_branch
        %227 = sbr.rel (%p225) target = $region28
      $region27: #{srcnn_forward.4} parent=15 // pred_region
        %p228 = scmp.lt.s32.totalorder %s19, 3
        %s229 = scalar_select %p228, %s19, 3
        %s230 = scalar_lea.vmem %s2, %s229
      $region28: #{srcnn_forward.4} parent=15 // pred_fallthru
        _
    $region16: #{srcnn_forward.4} parent=5 // pred_fallthru
      _
    %p231 = scmp.le.s32.totalorder 1, %s12
    %p232 = scmp.lt.s32.totalorder %s12, 5
    %p233 = pnand %p231, %p232
    %p234 = pneg %p233
    // Predicated region
    $region29: #{srcnn_forward.4} parent=5 // pred_check
      _
    $region30: #{srcnn_forward.4} parent=5 // pred_check_branch
      %236 = sbr.rel (%p233) target = $region32
    $region31: #{srcnn_forward.4} parent=5 // pred_region
      %s237 = ssub.s32 %s12, 1
      %s238 = smul.u32 16, %s22
      %p239 = scmp.lt.s32.totalorder %s21, 3
      %s240 = scalar_select %p239, %s21, 3
      %p241 = scmp.lt.s32.totalorder %s238, 15
      %s242 = scalar_select %p241, %s238, 15
      %s243 = smul.addr %s242, 8
      %s244 = smul.addr %s240, 128
      %s245 = sadd.s32 %s243, %s244
      %s246 = smul.addr %s245, 4
      %s247 = scalar_lea.vmem %s0, %s246
      %p248 = pneg %p52
      %p249 = pneg %p49
      %p250 = scmp.lt.s32.totalorder %s21, 3
      %s251 = scalar_select %p250, %s21, 3
      %s252 = smul.addr %s251, 128
      %s253 = smul.addr %s252, 4
      %s254 = scalar_lea.vmem %s1, %s253
      %p255 = pneg %p78
      %p256 = pneg %p75
      %p257 = scmp.lt.s32.totalorder %s21, 3
      %s258 = scalar_select %p257, %s21, 3
      %s259 = scalar_lea.vmem %s2, %s258
      %p260 = pneg %p104
      %p261 = pneg %p101
      %p262 = pneg %p132
      %p263 = pneg %p129
      %s264 = smul.u32 16, %s22
      %p265 = scmp.lt.s32.totalorder %s21, 3
      %s266 = scalar_select %p265, %s21, 3
      %p267 = scmp.lt.s32.totalorder %s264, 15
      %s268 = scalar_select %p267, %s264, 15
      %s269 = smul.addr %s266, 16
      %s270 = sadd.s32 %s268, %s269
      %s271 = smul.addr %s270, 4
      %s272 = scalar_lea.vmem %s3, %s271
      %p273 = pneg %p158
      %p274 = pneg %p155
      %p275 = scmp.lt.s32.totalorder %s21, 3
      %s276 = scalar_select %p275, %s21, 3
      %s277 = scalar_lea.vmem %s4, %s276
      %p278 = pneg %p184
      %p279 = pneg %p181
      %p280 = scmp.lt.s32.totalorder %s21, 3
      %s281 = scalar_select %p280, %s21, 3
      %s282 = scalar_lea.vmem %s5, %s281
      %s283 = smul.u32 16, %s22
      %p284 = scmp.lt.s32.totalorder %s21, 3
      %s285 = scalar_select %p284, %s21, 3
      %p286 = scmp.lt.s32.totalorder %s283, 15
      %s287 = scalar_select %p286, %s283, 15
      %s288 = smul.addr %s287, 8
      %s289 = smul.addr %s285, 128
      %s290 = sadd.s32 %s288, %s289
      %s291 = smul.addr %s290, 4
      %s292 = scalar_lea.vmem %s0, %s291
      %s293 = smul.u32 16, %s22
      %p294 = scmp.lt.s32.totalorder %s21, 3
      %s295 = scalar_select %p294, %s21, 3
      %s296 = smul.addr %s295, 128
      %s297 = smul.addr %s296, 4
      %s298 = scalar_lea.vmem %s1, %s297
      %p299 = scmp.lt.s32.totalorder %s21, 3
      %s300 = scalar_select %p299, %s21, 3
      %s301 = scalar_lea.vmem %s2, %s300
      %s302 = smul.u32 16, %s22
      %p303 = scmp.lt.s32.totalorder %s21, 3
      %s304 = scalar_select %p303, %s21, 3
      %p305 = scmp.lt.s32.totalorder %s302, 15
      %s306 = scalar_select %p305, %s302, 15
      %s307 = smul.addr %s304, 16
      %s308 = sadd.s32 %s306, %s307
      %s309 = smul.addr %s308, 4
      %s310 = scalar_lea.vmem %s3, %s309
      %s311 = smul.u32 16, %s22
      %p312 = scmp.lt.s32.totalorder %s21, 3
      %s313 = scalar_select %p312, %s21, 3
      %s314 = scalar_lea.vmem %s4, %s313
      %p315 = scmp.lt.s32.totalorder %s21, 3
      %s316 = scalar_select %p315, %s21, 3
      %s317 = scalar_lea.vmem %s5, %s316
      %v319 = vld [vmem:[%s292] sm:$0xff]
      %v320 = vld [vmem:[%s292 + $0x8] sm:$0xff]
      %v321 = vld [vmem:[%s292 + $0x10] sm:$0xff]
      %v322 = vld [vmem:[%s292 + $0x18] sm:$0xff]
      %v323 = vld [vmem:[%s292 + $0x20] sm:$0xff]
      %v324 = vld [vmem:[%s292 + $0x28] sm:$0xff]
      %v325 = vld [vmem:[%s292 + $0x30] sm:$0xff]
      %v326 = vld [vmem:[%s292 + $0x38] sm:$0xff]
      %v327 = vld [vmem:[%s292 + $0x40] sm:$0xff]
      %v328 = vld [vmem:[%s292 + $0x48] sm:$0xff]
      %v329 = vld [vmem:[%s292 + $0x50] sm:$0xff]
      %v330 = vld [vmem:[%s292 + $0x58] sm:$0xff]
      %v331 = vld [vmem:[%s292 + $0x60] sm:$0xff]
      %v332 = vld [vmem:[%s292 + $0x68] sm:$0xff]
      %v333 = vld [vmem:[%s292 + $0x70] sm:$0xff]
      %v334 = vld [vmem:[%s292 + $0x78] sm:$0xff]
      %v335 = vld [vmem:[%s292 + $0x80] sm:$0xff]
      %v336 = vld [vmem:[%s292 + $0x88] sm:$0xff]
      %v337 = vld [vmem:[%s292 + $0x90] sm:$0xff]
      %v338 = vld [vmem:[%s292 + $0x98] sm:$0xff]
      %v339 = vld [vmem:[%s292 + $0xa0] sm:$0xff]
      %v340 = vld [vmem:[%s292 + $0xa8] sm:$0xff]
      %v341 = vld [vmem:[%s292 + $0xb0] sm:$0xff]
      %v342 = vld [vmem:[%s292 + $0xb8] sm:$0xff]
      %v343 = vld [vmem:[%s292 + $0xc0] sm:$0xff]
      %v344 = vld [vmem:[%s292 + $0xc8] sm:$0xff]
      %v345 = vld [vmem:[%s292 + $0xd0] sm:$0xff]
      %v346 = vld [vmem:[%s292 + $0xd8] sm:$0xff]
      %v347 = vld [vmem:[%s292 + $0xe0] sm:$0xff]
      %v348 = vld [vmem:[%s292 + $0xe8] sm:$0xff]
      %v349 = vld [vmem:[%s292 + $0xf0] sm:$0xff]
      %v350 = vld [vmem:[%s292 + $0xf8] sm:$0xff]
      %v351 = vld [vmem:[%s292 + $0x100] sm:$0xff]
      %v352 = vld [vmem:[%s292 + $0x108] sm:$0xff]
      %v353 = vld [vmem:[%s292 + $0x110] sm:$0xff]
      %v354 = vld [vmem:[%s292 + $0x118] sm:$0xff]
      %v355 = vld [vmem:[%s292 + $0x120] sm:$0xff]
      %v356 = vld [vmem:[%s292 + $0x128] sm:$0xff]
      %v357 = vld [vmem:[%s292 + $0x130] sm:$0xff]
      %v358 = vld [vmem:[%s292 + $0x138] sm:$0xff]
      %v359 = vld [vmem:[%s292 + $0x140] sm:$0xff]
      %v360 = vld [vmem:[%s292 + $0x148] sm:$0xff]
      %v361 = vld [vmem:[%s292 + $0x150] sm:$0xff]
      %v362 = vld [vmem:[%s292 + $0x158] sm:$0xff]
      %v363 = vld [vmem:[%s292 + $0x160] sm:$0xff]
      %v364 = vld [vmem:[%s292 + $0x168] sm:$0xff]
      %v365 = vld [vmem:[%s292 + $0x170] sm:$0xff]
      %v366 = vld [vmem:[%s292 + $0x178] sm:$0xff]
      %v367 = vld [vmem:[%s292 + $0x180] sm:$0xff]
      %v368 = vld [vmem:[%s292 + $0x188] sm:$0xff]
      %v369 = vld [vmem:[%s292 + $0x190] sm:$0xff]
      %v370 = vld [vmem:[%s292 + $0x198] sm:$0xff]
      %v371 = vld [vmem:[%s292 + $0x1a0] sm:$0xff]
      %v372 = vld [vmem:[%s292 + $0x1a8] sm:$0xff]
      %v373 = vld [vmem:[%s292 + $0x1b0] sm:$0xff]
      %v374 = vld [vmem:[%s292 + $0x1b8] sm:$0xff]
      %v375 = vld [vmem:[%s292 + $0x1c0] sm:$0xff]
      %v376 = vld [vmem:[%s292 + $0x1c8] sm:$0xff]
      %v377 = vld [vmem:[%s292 + $0x1d0] sm:$0xff]
      %v378 = vld [vmem:[%s292 + $0x1d8] sm:$0xff]
      %v379 = vld [vmem:[%s292 + $0x1e0] sm:$0xff]
      %v380 = vld [vmem:[%s292 + $0x1e8] sm:$0xff]
      %v381 = vld [vmem:[%s292 + $0x1f0] sm:$0xff]
      %v382 = vld [vmem:[%s292 + $0x1f8] sm:$0xff]
      %v383 = vld [vmem:[%s298] sm:$0xf]
      %v384 = vld [vmem:[%s298 + $0x4] sm:$0xf]
      %v385 = vld [vmem:[%s298 + $0x8] sm:$0xf]
      %v386 = vld [vmem:[%s298 + $0xc] sm:$0xf]
      %v387 = vld [vmem:[%s298 + $0x10] sm:$0xf]
      %v388 = vld [vmem:[%s298 + $0x14] sm:$0xf]
      %v389 = vld [vmem:[%s298 + $0x18] sm:$0xf]
      %v390 = vld [vmem:[%s298 + $0x1c] sm:$0xf]
      %v391 = vld [vmem:[%s298 + $0x20] sm:$0xf]
      %v392 = vld [vmem:[%s298 + $0x24] sm:$0xf]
      %v393 = vld [vmem:[%s298 + $0x28] sm:$0xf]
      %v394 = vld [vmem:[%s298 + $0x2c] sm:$0xf]
      %v395 = vld [vmem:[%s298 + $0x30] sm:$0xf]
      %v396 = vld [vmem:[%s298 + $0x34] sm:$0xf]
      %v397 = vld [vmem:[%s298 + $0x38] sm:$0xf]
      %v398 = vld [vmem:[%s298 + $0x3c] sm:$0xf]
      %v399 = vld [vmem:[%s298 + $0x40] sm:$0xf]
      %v400 = vld [vmem:[%s298 + $0x44] sm:$0xf]
      %v401 = vld [vmem:[%s298 + $0x48] sm:$0xf]
      %v402 = vld [vmem:[%s298 + $0x4c] sm:$0xf]
      %v403 = vld [vmem:[%s298 + $0x50] sm:$0xf]
      %v404 = vld [vmem:[%s298 + $0x54] sm:$0xf]
      %v405 = vld [vmem:[%s298 + $0x58] sm:$0xf]
      %v406 = vld [vmem:[%s298 + $0x5c] sm:$0xf]
      %v407 = vld [vmem:[%s298 + $0x60] sm:$0xf]
      %v408 = vld [vmem:[%s298 + $0x64] sm:$0xf]
      %v409 = vld [vmem:[%s298 + $0x68] sm:$0xf]
      %v410 = vld [vmem:[%s298 + $0x6c] sm:$0xf]
      %v411 = vld [vmem:[%s298 + $0x70] sm:$0xf]
      %v412 = vld [vmem:[%s298 + $0x74] sm:$0xf]
      %v413 = vld [vmem:[%s298 + $0x78] sm:$0xf]
      %v414 = vld [vmem:[%s298 + $0x7c] sm:$0xf]
      %v415 = vld [vmem:[%s298 + $0x80] sm:$0xf]
      %v416 = vld [vmem:[%s298 + $0x84] sm:$0xf]
      %v417 = vld [vmem:[%s298 + $0x88] sm:$0xf]
      %v418 = vld [vmem:[%s298 + $0x8c] sm:$0xf]
      %v419 = vld [vmem:[%s298 + $0x90] sm:$0xf]
      %v420 = vld [vmem:[%s298 + $0x94] sm:$0xf]
      %v421 = vld [vmem:[%s298 + $0x98] sm:$0xf]
      %v422 = vld [vmem:[%s298 + $0x9c] sm:$0xf]
      %v423 = vld [vmem:[%s298 + $0xa0] sm:$0xf]
      %v424 = vld [vmem:[%s298 + $0xa4] sm:$0xf]
      %v425 = vld [vmem:[%s298 + $0xa8] sm:$0xf]
      %v426 = vld [vmem:[%s298 + $0xac] sm:$0xf]
      %v427 = vld [vmem:[%s298 + $0xb0] sm:$0xf]
      %v428 = vld [vmem:[%s298 + $0xb4] sm:$0xf]
      %v429 = vld [vmem:[%s298 + $0xb8] sm:$0xf]
      %v430 = vld [vmem:[%s298 + $0xbc] sm:$0xf]
      %v431 = vld [vmem:[%s298 + $0xc0] sm:$0xf]
      %v432 = vld [vmem:[%s298 + $0xc4] sm:$0xf]
      %v433 = vld [vmem:[%s298 + $0xc8] sm:$0xf]
      %v434 = vld [vmem:[%s298 + $0xcc] sm:$0xf]
      %v435 = vld [vmem:[%s298 + $0xd0] sm:$0xf]
      %v436 = vld [vmem:[%s298 + $0xd4] sm:$0xf]
      %v437 = vld [vmem:[%s298 + $0xd8] sm:$0xf]
      %v438 = vld [vmem:[%s298 + $0xdc] sm:$0xf]
      %v439 = vld [vmem:[%s298 + $0xe0] sm:$0xf]
      %v440 = vld [vmem:[%s298 + $0xe4] sm:$0xf]
      %v441 = vld [vmem:[%s298 + $0xe8] sm:$0xf]
      %v442 = vld [vmem:[%s298 + $0xec] sm:$0xf]
      %v443 = vld [vmem:[%s298 + $0xf0] sm:$0xf]
      %v444 = vld [vmem:[%s298 + $0xf4] sm:$0xf]
      %v445 = vld [vmem:[%s298 + $0xf8] sm:$0xf]
      %v446 = vld [vmem:[%s298 + $0xfc] sm:$0xf]
      %v447 = vld [vmem:[%s298 + $0x100] sm:$0xf]
      %v448 = vld [vmem:[%s298 + $0x104] sm:$0xf]
      %v449 = vld [vmem:[%s298 + $0x108] sm:$0xf]
      %v450 = vld [vmem:[%s298 + $0x10c] sm:$0xf]
      %v451 = vld [vmem:[%s298 + $0x110] sm:$0xf]
      %v452 = vld [vmem:[%s298 + $0x114] sm:$0xf]
      %v453 = vld [vmem:[%s298 + $0x118] sm:$0xf]
      %v454 = vld [vmem:[%s298 + $0x11c] sm:$0xf]
      %v455 = vld [vmem:[%s298 + $0x120] sm:$0xf]
      %v456 = vld [vmem:[%s298 + $0x124] sm:$0xf]
      %v457 = vld [vmem:[%s298 + $0x128] sm:$0xf]
      %v458 = vld [vmem:[%s298 + $0x12c] sm:$0xf]
      %v459 = vld [vmem:[%s298 + $0x130] sm:$0xf]
      %v460 = vld [vmem:[%s298 + $0x134] sm:$0xf]
      %v461 = vld [vmem:[%s298 + $0x138] sm:$0xf]
      %v462 = vld [vmem:[%s298 + $0x13c] sm:$0xf]
      %v463 = vld [vmem:[%s298 + $0x140] sm:$0xf]
      %v464 = vld [vmem:[%s298 + $0x144] sm:$0xf]
      %v465 = vld [vmem:[%s298 + $0x148] sm:$0xf]
      %v466 = vld [vmem:[%s298 + $0x14c] sm:$0xf]
      %v467 = vld [vmem:[%s298 + $0x150] sm:$0xf]
      %v468 = vld [vmem:[%s298 + $0x154] sm:$0xf]
      %v469 = vld [vmem:[%s298 + $0x158] sm:$0xf]
      %v470 = vld [vmem:[%s298 + $0x15c] sm:$0xf]
      %v471 = vld [vmem:[%s298 + $0x160] sm:$0xf]
      %v472 = vld [vmem:[%s298 + $0x164] sm:$0xf]
      %v473 = vld [vmem:[%s298 + $0x168] sm:$0xf]
      %v474 = vld [vmem:[%s298 + $0x16c] sm:$0xf]
      %v475 = vld [vmem:[%s298 + $0x170] sm:$0xf]
      %v476 = vld [vmem:[%s298 + $0x174] sm:$0xf]
      %v477 = vld [vmem:[%s298 + $0x178] sm:$0xf]
      %v478 = vld [vmem:[%s298 + $0x17c] sm:$0xf]
      %v479 = vld [vmem:[%s298 + $0x180] sm:$0xf]
      %v480 = vld [vmem:[%s298 + $0x184] sm:$0xf]
      %v481 = vld [vmem:[%s298 + $0x188] sm:$0xf]
      %v482 = vld [vmem:[%s298 + $0x18c] sm:$0xf]
      %v483 = vld [vmem:[%s298 + $0x190] sm:$0xf]
      %v484 = vld [vmem:[%s298 + $0x194] sm:$0xf]
      %v485 = vld [vmem:[%s298 + $0x198] sm:$0xf]
      %v486 = vld [vmem:[%s298 + $0x19c] sm:$0xf]
      %v487 = vld [vmem:[%s298 + $0x1a0] sm:$0xf]
      %v488 = vld [vmem:[%s298 + $0x1a4] sm:$0xf]
      %v489 = vld [vmem:[%s298 + $0x1a8] sm:$0xf]
      %v490 = vld [vmem:[%s298 + $0x1ac] sm:$0xf]
      %v491 = vld [vmem:[%s298 + $0x1b0] sm:$0xf]
      %v492 = vld [vmem:[%s298 + $0x1b4] sm:$0xf]
      %v493 = vld [vmem:[%s298 + $0x1b8] sm:$0xf]
      %v494 = vld [vmem:[%s298 + $0x1bc] sm:$0xf]
      %v495 = vld [vmem:[%s298 + $0x1c0] sm:$0xf]
      %v496 = vld [vmem:[%s298 + $0x1c4] sm:$0xf]
      %v497 = vld [vmem:[%s298 + $0x1c8] sm:$0xf]
      %v498 = vld [vmem:[%s298 + $0x1cc] sm:$0xf]
      %v499 = vld [vmem:[%s298 + $0x1d0] sm:$0xf]
      %v500 = vld [vmem:[%s298 + $0x1d4] sm:$0xf]
      %v501 = vld [vmem:[%s298 + $0x1d8] sm:$0xf]
      %v502 = vld [vmem:[%s298 + $0x1dc] sm:$0xf]
      %v503 = vld [vmem:[%s298 + $0x1e0] sm:$0xf]
      %v504 = vld [vmem:[%s298 + $0x1e4] sm:$0xf]
      %v505 = vld [vmem:[%s298 + $0x1e8] sm:$0xf]
      %v506 = vld [vmem:[%s298 + $0x1ec] sm:$0xf]
      %v507 = vld [vmem:[%s298 + $0x1f0] sm:$0xf]
      %v508 = vld [vmem:[%s298 + $0x1f4] sm:$0xf]
      %v509 = vld [vmem:[%s298 + $0x1f8] sm:$0xf]
      %v510 = vld [vmem:[%s298 + $0x1fc] sm:$0xf]
      %v511 = vld [vmem:[%s301] sm:$0x1]
      %v513 = vlaneseq
      %v514 = vshrl.u32 %v513, 7
      %v515 = vsub.s32 0, %v514
      %v516 = vrot.slane %v511, %v515
      %v582 = vunpack.c.l.b16 %v319
      %v583 = vunpack.c.h.b16 %v319
      %v584 = vunpack.c.l.b16 %v320
      %v585 = vunpack.c.h.b16 %v320
      %v586 = vunpack.c.l.b16 %v321
      %v587 = vunpack.c.h.b16 %v321
      %v588 = vunpack.c.l.b16 %v322
      %v589 = vunpack.c.h.b16 %v322
      %v590 = vunpack.c.l.b16 %v323
      %v591 = vunpack.c.h.b16 %v323
      %v592 = vunpack.c.l.b16 %v324
      %v593 = vunpack.c.h.b16 %v324
      %v594 = vunpack.c.l.b16 %v325
      %v595 = vunpack.c.h.b16 %v325
      %v596 = vunpack.c.l.b16 %v326
      %v597 = vunpack.c.h.b16 %v326
      %v598 = vunpack.c.l.b16 %v327
      %v599 = vunpack.c.h.b16 %v327
      %v600 = vunpack.c.l.b16 %v328
      %v601 = vunpack.c.h.b16 %v328
      %v602 = vunpack.c.l.b16 %v329
      %v603 = vunpack.c.h.b16 %v329
      %v604 = vunpack.c.l.b16 %v330
      %v605 = vunpack.c.h.b16 %v330
      %v606 = vunpack.c.l.b16 %v331
      %v607 = vunpack.c.h.b16 %v331
      %v608 = vunpack.c.l.b16 %v332
      %v609 = vunpack.c.h.b16 %v332
      %v610 = vunpack.c.l.b16 %v333
      %v611 = vunpack.c.h.b16 %v333
      %v612 = vunpack.c.l.b16 %v334
      %v613 = vunpack.c.h.b16 %v334
      %v614 = vunpack.c.l.b16 %v335
      %v615 = vunpack.c.h.b16 %v335
      %v616 = vunpack.c.l.b16 %v336
      %v617 = vunpack.c.h.b16 %v336
      %v618 = vunpack.c.l.b16 %v337
      %v619 = vunpack.c.h.b16 %v337
      %v620 = vunpack.c.l.b16 %v338
      %v621 = vunpack.c.h.b16 %v338
      %v622 = vunpack.c.l.b16 %v339
      %v623 = vunpack.c.h.b16 %v339
      %v624 = vunpack.c.l.b16 %v340
      %v625 = vunpack.c.h.b16 %v340
      %v626 = vunpack.c.l.b16 %v341
      %v627 = vunpack.c.h.b16 %v341
      %v628 = vunpack.c.l.b16 %v342
      %v629 = vunpack.c.h.b16 %v342
      %v630 = vunpack.c.l.b16 %v343
      %v631 = vunpack.c.h.b16 %v343
      %v632 = vunpack.c.l.b16 %v344
      %v633 = vunpack.c.h.b16 %v344
      %v634 = vunpack.c.l.b16 %v345
      %v635 = vunpack.c.h.b16 %v345
      %v636 = vunpack.c.l.b16 %v346
      %v637 = vunpack.c.h.b16 %v346
      %v638 = vunpack.c.l.b16 %v347
      %v639 = vunpack.c.h.b16 %v347
      %v640 = vunpack.c.l.b16 %v348
      %v641 = vunpack.c.h.b16 %v348
      %v642 = vunpack.c.l.b16 %v349
      %v643 = vunpack.c.h.b16 %v349
      %v644 = vunpack.c.l.b16 %v350
      %v645 = vunpack.c.h.b16 %v350
      %v646 = vunpack.c.l.b16 %v351
      %v647 = vunpack.c.h.b16 %v351
      %v648 = vunpack.c.l.b16 %v352
      %v649 = vunpack.c.h.b16 %v352
      %v650 = vunpack.c.l.b16 %v353
      %v651 = vunpack.c.h.b16 %v353
      %v652 = vunpack.c.l.b16 %v354
      %v653 = vunpack.c.h.b16 %v354
      %v654 = vunpack.c.l.b16 %v355
      %v655 = vunpack.c.h.b16 %v355
      %v656 = vunpack.c.l.b16 %v356
      %v657 = vunpack.c.h.b16 %v356
      %v658 = vunpack.c.l.b16 %v357
      %v659 = vunpack.c.h.b16 %v357
      %v660 = vunpack.c.l.b16 %v358
      %v661 = vunpack.c.h.b16 %v358
      %v662 = vunpack.c.l.b16 %v359
      %v663 = vunpack.c.h.b16 %v359
      %v664 = vunpack.c.l.b16 %v360
      %v665 = vunpack.c.h.b16 %v360
      %v666 = vunpack.c.l.b16 %v361
      %v667 = vunpack.c.h.b16 %v361
      %v668 = vunpack.c.l.b16 %v362
      %v669 = vunpack.c.h.b16 %v362
      %v670 = vunpack.c.l.b16 %v363
      %v671 = vunpack.c.h.b16 %v363
      %v672 = vunpack.c.l.b16 %v364
      %v673 = vunpack.c.h.b16 %v364
      %v674 = vunpack.c.l.b16 %v365
      %v675 = vunpack.c.h.b16 %v365
      %v676 = vunpack.c.l.b16 %v366
      %v677 = vunpack.c.h.b16 %v366
      %v678 = vunpack.c.l.b16 %v367
      %v679 = vunpack.c.h.b16 %v367
      %v680 = vunpack.c.l.b16 %v368
      %v681 = vunpack.c.h.b16 %v368
      %v682 = vunpack.c.l.b16 %v369
      %v683 = vunpack.c.h.b16 %v369
      %v684 = vunpack.c.l.b16 %v370
      %v685 = vunpack.c.h.b16 %v370
      %v686 = vunpack.c.l.b16 %v371
      %v687 = vunpack.c.h.b16 %v371
      %v688 = vunpack.c.l.b16 %v372
      %v689 = vunpack.c.h.b16 %v372
      %v690 = vunpack.c.l.b16 %v373
      %v691 = vunpack.c.h.b16 %v373
      %v692 = vunpack.c.l.b16 %v374
      %v693 = vunpack.c.h.b16 %v374
      %v694 = vunpack.c.l.b16 %v375
      %v695 = vunpack.c.h.b16 %v375
      %v696 = vunpack.c.l.b16 %v376
      %v697 = vunpack.c.h.b16 %v376
      %v698 = vunpack.c.l.b16 %v377
      %v699 = vunpack.c.h.b16 %v377
      %v700 = vunpack.c.l.b16 %v378
      %v701 = vunpack.c.h.b16 %v378
      %v702 = vunpack.c.l.b16 %v379
      %v703 = vunpack.c.h.b16 %v379
      %v704 = vunpack.c.l.b16 %v380
      %v705 = vunpack.c.h.b16 %v380
      %v706 = vunpack.c.l.b16 %v381
      %v707 = vunpack.c.h.b16 %v381
      %v708 = vunpack.c.l.b16 %v382
      %v709 = vunpack.c.h.b16 %v382
      %v710 = vpack.c.b16 %v590, %v582
      %v711 = vpack.c.b16 %v591, %v583
      %v712 = vpack.c.b16 %v592, %v584
      %v713 = vpack.c.b16 %v593, %v585
      %v714 = vpack.c.b16 %v594, %v586
      %v715 = vpack.c.b16 %v595, %v587
      %v716 = vpack.c.b16 %v596, %v588
      %v717 = vpack.c.b16 %v597, %v589
      %v718 = vpack.c.b16 %v606, %v598
      %v719 = vpack.c.b16 %v607, %v599
      %v720 = vpack.c.b16 %v608, %v600
      %v721 = vpack.c.b16 %v609, %v601
      %v722 = vpack.c.b16 %v610, %v602
      %v723 = vpack.c.b16 %v611, %v603
      %v724 = vpack.c.b16 %v612, %v604
      %v725 = vpack.c.b16 %v613, %v605
      %v726 = vpack.c.b16 %v622, %v614
      %v727 = vpack.c.b16 %v623, %v615
      %v728 = vpack.c.b16 %v624, %v616
      %v729 = vpack.c.b16 %v625, %v617
      %v730 = vpack.c.b16 %v626, %v618
      %v731 = vpack.c.b16 %v627, %v619
      %v732 = vpack.c.b16 %v628, %v620
      %v733 = vpack.c.b16 %v629, %v621
      %v734 = vpack.c.b16 %v638, %v630
      %v735 = vpack.c.b16 %v639, %v631
      %v736 = vpack.c.b16 %v640, %v632
      %v737 = vpack.c.b16 %v641, %v633
      %v738 = vpack.c.b16 %v642, %v634
      %v739 = vpack.c.b16 %v643, %v635
      %v740 = vpack.c.b16 %v644, %v636
      %v741 = vpack.c.b16 %v645, %v637
      %v742 = vpack.c.b16 %v654, %v646
      %v743 = vpack.c.b16 %v655, %v647
      %v744 = vpack.c.b16 %v656, %v648
      %v745 = vpack.c.b16 %v657, %v649
      %v746 = vpack.c.b16 %v658, %v650
      %v747 = vpack.c.b16 %v659, %v651
      %v748 = vpack.c.b16 %v660, %v652
      %v749 = vpack.c.b16 %v661, %v653
      %v750 = vpack.c.b16 %v670, %v662
      %v751 = vpack.c.b16 %v671, %v663
      %v752 = vpack.c.b16 %v672, %v664
      %v753 = vpack.c.b16 %v673, %v665
      %v754 = vpack.c.b16 %v674, %v666
      %v755 = vpack.c.b16 %v675, %v667
      %v756 = vpack.c.b16 %v676, %v668
      %v757 = vpack.c.b16 %v677, %v669
      %v758 = vpack.c.b16 %v686, %v678
      %v759 = vpack.c.b16 %v687, %v679
      %v760 = vpack.c.b16 %v688, %v680
      %v761 = vpack.c.b16 %v689, %v681
      %v762 = vpack.c.b16 %v690, %v682
      %v763 = vpack.c.b16 %v691, %v683
      %v764 = vpack.c.b16 %v692, %v684
      %v765 = vpack.c.b16 %v693, %v685
      %v766 = vpack.c.b16 %v702, %v694
      %v767 = vpack.c.b16 %v703, %v695
      %v768 = vpack.c.b16 %v704, %v696
      %v769 = vpack.c.b16 %v705, %v697
      %v770 = vpack.c.b16 %v706, %v698
      %v771 = vpack.c.b16 %v707, %v699
      %v772 = vpack.c.b16 %v708, %v700
      %v773 = vpack.c.b16 %v709, %v701
      %v966 = vunpack.c.l.b16 %v383
      %v967 = vunpack.c.l.b16 %v384
      %v968 = vunpack.c.l.b16 %v385
      %v969 = vunpack.c.l.b16 %v386
      %v970 = vunpack.c.l.b16 %v387
      %v971 = vunpack.c.l.b16 %v388
      %v972 = vunpack.c.l.b16 %v389
      %v973 = vunpack.c.l.b16 %v390
      %v974 = vunpack.c.l.b16 %v391
      %v975 = vunpack.c.l.b16 %v392
      %v976 = vunpack.c.l.b16 %v393
      %v977 = vunpack.c.l.b16 %v394
      %v978 = vunpack.c.l.b16 %v395
      %v979 = vunpack.c.l.b16 %v396
      %v980 = vunpack.c.l.b16 %v397
      %v981 = vunpack.c.l.b16 %v398
      %v982 = vunpack.c.l.b16 %v399
      %v983 = vunpack.c.l.b16 %v400
      %v984 = vunpack.c.l.b16 %v401
      %v985 = vunpack.c.l.b16 %v402
      %v986 = vunpack.c.l.b16 %v403
      %v987 = vunpack.c.l.b16 %v404
      %v988 = vunpack.c.l.b16 %v405
      %v989 = vunpack.c.l.b16 %v406
      %v990 = vunpack.c.l.b16 %v407
      %v991 = vunpack.c.l.b16 %v408
      %v992 = vunpack.c.l.b16 %v409
      %v993 = vunpack.c.l.b16 %v410
      %v994 = vunpack.c.l.b16 %v411
      %v995 = vunpack.c.l.b16 %v412
      %v996 = vunpack.c.l.b16 %v413
      %v997 = vunpack.c.l.b16 %v414
      %v998 = vunpack.c.l.b16 %v415
      %v999 = vunpack.c.l.b16 %v416
      %v1000 = vunpack.c.l.b16 %v417
      %v1001 = vunpack.c.l.b16 %v418
      %v1002 = vunpack.c.l.b16 %v419
      %v1003 = vunpack.c.l.b16 %v420
      %v1004 = vunpack.c.l.b16 %v421
      %v1005 = vunpack.c.l.b16 %v422
      %v1006 = vunpack.c.l.b16 %v423
      %v1007 = vunpack.c.l.b16 %v424
      %v1008 = vunpack.c.l.b16 %v425
      %v1009 = vunpack.c.l.b16 %v426
      %v1010 = vunpack.c.l.b16 %v427
      %v1011 = vunpack.c.l.b16 %v428
      %v1012 = vunpack.c.l.b16 %v429
      %v1013 = vunpack.c.l.b16 %v430
      %v1014 = vunpack.c.l.b16 %v431
      %v1015 = vunpack.c.l.b16 %v432
      %v1016 = vunpack.c.l.b16 %v433
      %v1017 = vunpack.c.l.b16 %v434
      %v1018 = vunpack.c.l.b16 %v435
      %v1019 = vunpack.c.l.b16 %v436
      %v1020 = vunpack.c.l.b16 %v437
      %v1021 = vunpack.c.l.b16 %v438
      %v1022 = vunpack.c.l.b16 %v439
      %v1023 = vunpack.c.l.b16 %v440
      %v1024 = vunpack.c.l.b16 %v441
      %v1025 = vunpack.c.l.b16 %v442
      %v1026 = vunpack.c.l.b16 %v443
      %v1027 = vunpack.c.l.b16 %v444
      %v1028 = vunpack.c.l.b16 %v445
      %v1029 = vunpack.c.l.b16 %v446
      %v1030 = vunpack.c.l.b16 %v447
      %v1031 = vunpack.c.l.b16 %v448
      %v1032 = vunpack.c.l.b16 %v449
      %v1033 = vunpack.c.l.b16 %v450
      %v1034 = vunpack.c.l.b16 %v451
      %v1035 = vunpack.c.l.b16 %v452
      %v1036 = vunpack.c.l.b16 %v453
      %v1037 = vunpack.c.l.b16 %v454
      %v1038 = vunpack.c.l.b16 %v455
      %v1039 = vunpack.c.l.b16 %v456
      %v1040 = vunpack.c.l.b16 %v457
      %v1041 = vunpack.c.l.b16 %v458
      %v1042 = vunpack.c.l.b16 %v459
      %v1043 = vunpack.c.l.b16 %v460
      %v1044 = vunpack.c.l.b16 %v461
      %v1045 = vunpack.c.l.b16 %v462
      %v1046 = vunpack.c.l.b16 %v463
      %v1047 = vunpack.c.l.b16 %v464
      %v1048 = vunpack.c.l.b16 %v465
      %v1049 = vunpack.c.l.b16 %v466
      %v1050 = vunpack.c.l.b16 %v467
      %v1051 = vunpack.c.l.b16 %v468
      %v1052 = vunpack.c.l.b16 %v469
      %v1053 = vunpack.c.l.b16 %v470
      %v1054 = vunpack.c.l.b16 %v471
      %v1055 = vunpack.c.l.b16 %v472
      %v1056 = vunpack.c.l.b16 %v473
      %v1057 = vunpack.c.l.b16 %v474
      %v1058 = vunpack.c.l.b16 %v475
      %v1059 = vunpack.c.l.b16 %v476
      %v1060 = vunpack.c.l.b16 %v477
      %v1061 = vunpack.c.l.b16 %v478
      %v1062 = vunpack.c.l.b16 %v479
      %v1063 = vunpack.c.l.b16 %v480
      %v1064 = vunpack.c.l.b16 %v481
      %v1065 = vunpack.c.l.b16 %v482
      %v1066 = vunpack.c.l.b16 %v483
      %v1067 = vunpack.c.l.b16 %v484
      %v1068 = vunpack.c.l.b16 %v485
      %v1069 = vunpack.c.l.b16 %v486
      %v1070 = vunpack.c.l.b16 %v487
      %v1071 = vunpack.c.l.b16 %v488
      %v1072 = vunpack.c.l.b16 %v489
      %v1073 = vunpack.c.l.b16 %v490
      %v1074 = vunpack.c.l.b16 %v491
      %v1075 = vunpack.c.l.b16 %v492
      %v1076 = vunpack.c.l.b16 %v493
      %v1077 = vunpack.c.l.b16 %v494
      %v1078 = vunpack.c.l.b16 %v495
      %v1079 = vunpack.c.l.b16 %v496
      %v1080 = vunpack.c.l.b16 %v497
      %v1081 = vunpack.c.l.b16 %v498
      %v1082 = vunpack.c.l.b16 %v499
      %v1083 = vunpack.c.l.b16 %v500
      %v1084 = vunpack.c.l.b16 %v501
      %v1085 = vunpack.c.l.b16 %v502
      %v1086 = vunpack.c.l.b16 %v503
      %v1087 = vunpack.c.l.b16 %v504
      %v1088 = vunpack.c.l.b16 %v505
      %v1089 = vunpack.c.l.b16 %v506
      %v1090 = vunpack.c.l.b16 %v507
      %v1091 = vunpack.c.l.b16 %v508
      %v1092 = vunpack.c.l.b16 %v509
      %v1093 = vunpack.c.l.b16 %v510
      %v1094 = vpack.c.b16 %v967, %v966
      %v1095 = vpack.c.b16 %v969, %v968
      %v1096 = vpack.c.b16 %v971, %v970
      %v1097 = vpack.c.b16 %v973, %v972
      %v1098 = vpack.c.b16 %v975, %v974
      %v1099 = vpack.c.b16 %v977, %v976
      %v1100 = vpack.c.b16 %v979, %v978
      %v1101 = vpack.c.b16 %v981, %v980
      %v1102 = vpack.c.b16 %v983, %v982
      %v1103 = vpack.c.b16 %v985, %v984
      %v1104 = vpack.c.b16 %v987, %v986
      %v1105 = vpack.c.b16 %v989, %v988
      %v1106 = vpack.c.b16 %v991, %v990
      %v1107 = vpack.c.b16 %v993, %v992
      %v1108 = vpack.c.b16 %v995, %v994
      %v1109 = vpack.c.b16 %v997, %v996
      %v1110 = vpack.c.b16 %v999, %v998
      %v1111 = vpack.c.b16 %v1001, %v1000
      %v1112 = vpack.c.b16 %v1003, %v1002
      %v1113 = vpack.c.b16 %v1005, %v1004
      %v1114 = vpack.c.b16 %v1007, %v1006
      %v1115 = vpack.c.b16 %v1009, %v1008
      %v1116 = vpack.c.b16 %v1011, %v1010
      %v1117 = vpack.c.b16 %v1013, %v1012
      %v1118 = vpack.c.b16 %v1015, %v1014
      %v1119 = vpack.c.b16 %v1017, %v1016
      %v1120 = vpack.c.b16 %v1019, %v1018
      %v1121 = vpack.c.b16 %v1021, %v1020
      %v1122 = vpack.c.b16 %v1023, %v1022
      %v1123 = vpack.c.b16 %v1025, %v1024
      %v1124 = vpack.c.b16 %v1027, %v1026
      %v1125 = vpack.c.b16 %v1029, %v1028
      %v1126 = vpack.c.b16 %v1031, %v1030
      %v1127 = vpack.c.b16 %v1033, %v1032
      %v1128 = vpack.c.b16 %v1035, %v1034
      %v1129 = vpack.c.b16 %v1037, %v1036
      %v1130 = vpack.c.b16 %v1039, %v1038
      %v1131 = vpack.c.b16 %v1041, %v1040
      %v1132 = vpack.c.b16 %v1043, %v1042
      %v1133 = vpack.c.b16 %v1045, %v1044
      %v1134 = vpack.c.b16 %v1047, %v1046
      %v1135 = vpack.c.b16 %v1049, %v1048
      %v1136 = vpack.c.b16 %v1051, %v1050
      %v1137 = vpack.c.b16 %v1053, %v1052
      %v1138 = vpack.c.b16 %v1055, %v1054
      %v1139 = vpack.c.b16 %v1057, %v1056
      %v1140 = vpack.c.b16 %v1059, %v1058
      %v1141 = vpack.c.b16 %v1061, %v1060
      %v1142 = vpack.c.b16 %v1063, %v1062
      %v1143 = vpack.c.b16 %v1065, %v1064
      %v1144 = vpack.c.b16 %v1067, %v1066
      %v1145 = vpack.c.b16 %v1069, %v1068
      %v1146 = vpack.c.b16 %v1071, %v1070
      %v1147 = vpack.c.b16 %v1073, %v1072
      %v1148 = vpack.c.b16 %v1075, %v1074
      %v1149 = vpack.c.b16 %v1077, %v1076
      %v1150 = vpack.c.b16 %v1079, %v1078
      %v1151 = vpack.c.b16 %v1081, %v1080
      %v1152 = vpack.c.b16 %v1083, %v1082
      %v1153 = vpack.c.b16 %v1085, %v1084
      %v1154 = vpack.c.b16 %v1087, %v1086
      %v1155 = vpack.c.b16 %v1089, %v1088
      %v1156 = vpack.c.b16 %v1091, %v1090
      %v1157 = vpack.c.b16 %v1093, %v1092
      %1222 = vmatprep.subr.bf16.mxu0 0
      %1223 = vmatpush1.bf16.msra.mxu0 %v1094
      %1224 = vmatprep.subr.bf16.mxu0 0
      %1225 = vmatpush1.bf16.msra.mxu0 %v1095
      %1226 = vmatprep.subr.bf16.mxu0 0
      %1227 = vmatpush1.bf16.msra.mxu0 %v1096
      %1228 = vmatprep.subr.bf16.mxu0 0
      %1229 = vmatpush1.bf16.msra.mxu0 %v1097
      %1230 = vmatprep.subr.bf16.mxu0 0
      %1231 = vmatpush1.bf16.msra.mxu0 %v1098
      %1232 = vmatprep.subr.bf16.mxu0 0
      %1233 = vmatpush1.bf16.msra.mxu0 %v1099
      %1234 = vmatprep.subr.bf16.mxu0 0
      %1235 = vmatpush1.bf16.msra.mxu0 %v1100
      %1236 = vmatprep.subr.bf16.mxu0 0
      %1237 = vmatpush1.bf16.msra.mxu0 %v1101
      %1238 = vmatprep.subr.bf16.mxu0 0
      %1239 = vmatpush1.bf16.msra.mxu0 %v1102
      %1240 = vmatprep.subr.bf16.mxu0 0
      %1241 = vmatpush1.bf16.msra.mxu0 %v1103
      %1242 = vmatprep.subr.bf16.mxu0 0
      %1243 = vmatpush1.bf16.msra.mxu0 %v1104
      %1244 = vmatprep.subr.bf16.mxu0 0
      %1245 = vmatpush1.bf16.msra.mxu0 %v1105
      %1246 = vmatprep.subr.bf16.mxu0 0
      %1247 = vmatpush1.bf16.msra.mxu0 %v1106
      %1248 = vmatprep.subr.bf16.mxu0 0
      %1249 = vmatpush1.bf16.msra.mxu0 %v1107
      %1250 = vmatprep.subr.bf16.mxu0 0
      %1251 = vmatpush1.bf16.msra.mxu0 %v1108
      %1252 = vmatprep.subr.bf16.mxu0 0
      %1253 = vmatpush1.bf16.msra.mxu0 %v1109
      %1254 = vmatprep.mubr.bf16.mxu0 %v711
      %1255 = vmatmul.mubr.bf16.gmra.mrb[0].mxu0 %v710
      %v1256 = vpop.f32.mrb[0].mxu0
      %v1257 = vadd.f32 %v516, %v1256
      %v1258 = vpop.f32.mrb[0].mxu0
      %v1259 = vpop.f32.mrb[0].mxu0
      %v1260 = vadd.f32 %v516, %v1259
      %v1261 = vpop.f32.mrb[0].mxu0
      %1262 = vmatprep.mubr.bf16.mxu0 %v719
      %1263 = vmatmul.mubr.bf16.gmra.mrb[0].mxu0 %v718
      %v1264 = vpop.f32.mrb[0].mxu0
      %v1265 = vadd.f32 %v516, %v1264
      %v1266 = vpop.f32.mrb[0].mxu0
      %v1267 = vpop.f32.mrb[0].mxu0
      %v1268 = vadd.f32 %v516, %v1267
      %v1269 = vpop.f32.mrb[0].mxu0
      %1270 = vmatprep.mubr.bf16.mxu0 %v727
      %1271 = vmatmul.mubr.bf16.gmra.mrb[0].mxu0 %v726
      %v1272 = vpop.f32.mrb[0].mxu0
      %v1273 = vadd.f32 %v516, %v1272
      %v1274 = vpop.f32.mrb[0].mxu0
      %v1275 = vpop.f32.mrb[0].mxu0
      %v1276 = vadd.f32 %v516, %v1275
      %v1277 = vpop.f32.mrb[0].mxu0
      %1278 = vmatprep.mubr.bf16.mxu0 %v735
      %1279 = vmatmul.mubr.bf16.gmra.mrb[0].mxu0 %v734
      %v1280 = vpop.f32.mrb[0].mxu0
      %v1281 = vadd.f32 %v516, %v1280
      %v1282 = vpop.f32.mrb[0].mxu0
      %v1283 = vpop.f32.mrb[0].mxu0
      %v1284 = vadd.f32 %v516, %v1283
      %v1285 = vpop.f32.mrb[0].mxu0
      %1286 = vmatprep.mubr.bf16.mxu0 %v743
      %1287 = vmatmul.mubr.bf16.gmra.mrb[0].mxu0 %v742
      %v1288 = vpop.f32.mrb[0].mxu0
      %v1289 = vadd.f32 %v516, %v1288
      %v1290 = vpop.f32.mrb[0].mxu0
      %v1291 = vpop.f32.mrb[0].mxu0
      %v1292 = vadd.f32 %v516, %v1291
      %v1293 = vpop.f32.mrb[0].mxu0
      %1294 = vmatprep.mubr.bf16.mxu0 %v751
      %1295 = vmatmul.mubr.bf16.gmra.mrb[0].mxu0 %v750
      %v1296 = vpop.f32.mrb[0].mxu0
      %v1297 = vadd.f32 %v516, %v1296
      %v1298 = vpop.f32.mrb[0].mxu0
      %v1299 = vpop.f32.mrb[0].mxu0
      %v1300 = vadd.f32 %v516, %v1299
      %v1301 = vpop.f32.mrb[0].mxu0
      %1302 = vmatprep.mubr.bf16.mxu0 %v759
      %1303 = vmatmul.mubr.bf16.gmra.mrb[0].mxu0 %v758
      %v1304 = vpop.f32.mrb[0].mxu0
      %v1305 = vadd.f32 %v516, %v1304
      %v1306 = vpop.f32.mrb[0].mxu0
      %v1307 = vpop.f32.mrb[0].mxu0
      %v1308 = vadd.f32 %v516, %v1307
      %v1309 = vpop.f32.mrb[0].mxu0
      %1310 = vmatprep.mubr.bf16.mxu0 %v767
      %1311 = vmatmul.mubr.bf16.gmra.mrb[0].mxu0 %v766
      %v1312 = vpop.f32.mrb[0].mxu0
      %v1313 = vadd.f32 %v516, %v1312
      %v1314 = vpop.f32.mrb[0].mxu0
      %v1315 = vpop.f32.mrb[0].mxu0
      %v1316 = vadd.f32 %v516, %v1315
      %v1317 = vpop.f32.mrb[0].mxu0
      %1318 = vdwg.mxu0
      %1319 = vmatprep.subr.bf16.mxu0 0
      %1320 = vmatpush1.bf16.msra.mxu0 %v1110
      %1321 = vmatprep.subr.bf16.mxu0 0
      %1322 = vmatpush1.bf16.msra.mxu0 %v1111
      %1323 = vmatprep.subr.bf16.mxu0 0
      %1324 = vmatpush1.bf16.msra.mxu0 %v1112
      %1325 = vmatprep.subr.bf16.mxu0 0
      %1326 = vmatpush1.bf16.msra.mxu0 %v1113
      %1327 = vmatprep.subr.bf16.mxu0 0
      %1328 = vmatpush1.bf16.msra.mxu0 %v1114
      %1329 = vmatprep.subr.bf16.mxu0 0
      %1330 = vmatpush1.bf16.msra.mxu0 %v1115
      %1331 = vmatprep.subr.bf16.mxu0 0
      %1332 = vmatpush1.bf16.msra.mxu0 %v1116
      %1333 = vmatprep.subr.bf16.mxu0 0
      %1334 = vmatpush1.bf16.msra.mxu0 %v1117
      %1335 = vmatprep.subr.bf16.mxu0 0
      %1336 = vmatpush1.bf16.msra.mxu0 %v1118
      %1337 = vmatprep.subr.bf16.mxu0 0
      %1338 = vmatpush1.bf16.msra.mxu0 %v1119
      %1339 = vmatprep.subr.bf16.mxu0 0
      %1340 = vmatpush1.bf16.msra.mxu0 %v1120
      %1341 = vmatprep.subr.bf16.mxu0 0
      %1342 = vmatpush1.bf16.msra.mxu0 %v1121
      %1343 = vmatprep.subr.bf16.mxu0 0
      %1344 = vmatpush1.bf16.msra.mxu0 %v1122
      %1345 = vmatprep.subr.bf16.mxu0 0
      %1346 = vmatpush1.bf16.msra.mxu0 %v1123
      %1347 = vmatprep.subr.bf16.mxu0 0
      %1348 = vmatpush1.bf16.msra.mxu0 %v1124
      %1349 = vmatprep.subr.bf16.mxu0 0
      %1350 = vmatpush1.bf16.msra.mxu0 %v1125
      %1351 = vmatprep.mubr.bf16.mxu0 %v713
      %1352 = vmatmul.mubr.bf16.gmra.mrb[0].mxu0 %v712
      %v1353 = vpop.f32.mrb[0].mxu0
      %v1354 = vadd.f32 %v1257, %v1353
      %v1355 = vpop.f32.mrb[0].mxu0
      %v1356 = vpop.f32.mrb[0].mxu0
      %v1357 = vadd.f32 %v1260, %v1356
      %v1358 = vpop.f32.mrb[0].mxu0
      %1359 = vmatprep.mubr.bf16.mxu0 %v721
      %1360 = vmatmul.mubr.bf16.gmra.mrb[0].mxu0 %v720
      %v1361 = vpop.f32.mrb[0].mxu0
      %v1362 = vadd.f32 %v1265, %v1361
      %v1363 = vpop.f32.mrb[0].mxu0
      %v1364 = vpop.f32.mrb[0].mxu0
      %v1365 = vadd.f32 %v1268, %v1364
      %v1366 = vpop.f32.mrb[0].mxu0
      %1367 = vmatprep.mubr.bf16.mxu0 %v729
      %1368 = vmatmul.mubr.bf16.gmra.mrb[0].mxu0 %v728
      %v1369 = vpop.f32.mrb[0].mxu0
      %v1370 = vadd.f32 %v1273, %v1369
      %v1371 = vpop.f32.mrb[0].mxu0
      %v1372 = vpop.f32.mrb[0].mxu0
      %v1373 = vadd.f32 %v1276, %v1372
      %v1374 = vpop.f32.mrb[0].mxu0
      %1375 = vmatprep.mubr.bf16.mxu0 %v737
      %1376 = vmatmul.mubr.bf16.gmra.mrb[0].mxu0 %v736
      %v1377 = vpop.f32.mrb[0].mxu0
      %v1378 = vadd.f32 %v1281, %v1377
      %v1379 = vpop.f32.mrb[0].mxu0
      %v1380 = vpop.f32.mrb[0].mxu0
      %v1381 = vadd.f32 %v1284, %v1380
      %v1382 = vpop.f32.mrb[0].mxu0
      %1383 = vmatprep.mubr.bf16.mxu0 %v745
      %1384 = vmatmul.mubr.bf16.gmra.mrb[0].mxu0 %v744
      %v1385 = vpop.f32.mrb[0].mxu0
      %v1386 = vadd.f32 %v1289, %v1385
      %v1387 = vpop.f32.mrb[0].mxu0
      %v1388 = vpop.f32.mrb[0].mxu0
      %v1389 = vadd.f32 %v1292, %v1388
      %v1390 = vpop.f32.mrb[0].mxu0
      %1391 = vmatprep.mubr.bf16.mxu0 %v753
      %1392 = vmatmul.mubr.bf16.gmra.mrb[0].mxu0 %v752
      %v1393 = vpop.f32.mrb[0].mxu0
      %v1394 = vadd.f32 %v1297, %v1393
      %v1395 = vpop.f32.mrb[0].mxu0
      %v1396 = vpop.f32.mrb[0].mxu0
      %v1397 = vadd.f32 %v1300, %v1396
      %v1398 = vpop.f32.mrb[0].mxu0
      %1399 = vmatprep.mubr.bf16.mxu0 %v761
      %1400 = vmatmul.mubr.bf16.gmra.mrb[0].mxu0 %v760
      %v1401 = vpop.f32.mrb[0].mxu0
      %v1402 = vadd.f32 %v1305, %v1401
      %v1403 = vpop.f32.mrb[0].mxu0
      %v1404 = vpop.f32.mrb[0].mxu0
      %v1405 = vadd.f32 %v1308, %v1404
      %v1406 = vpop.f32.mrb[0].mxu0
      %1407 = vmatprep.mubr.bf16.mxu0 %v769
      %1408 = vmatmul.mubr.bf16.gmra.mrb[0].mxu0 %v768
      %v1409 = vpop.f32.mrb[0].mxu0
      %v1410 = vadd.f32 %v1313, %v1409
      %v1411 = vpop.f32.mrb[0].mxu0
      %v1412 = vpop.f32.mrb[0].mxu0
      %v1413 = vadd.f32 %v1316, %v1412
      %v1414 = vpop.f32.mrb[0].mxu0
      %1415 = vdwg.mxu0
      %1416 = vmatprep.subr.bf16.mxu0 0
      %1417 = vmatpush1.bf16.msra.mxu0 %v1126
      %1418 = vmatprep.subr.bf16.mxu0 0
      %1419 = vmatpush1.bf16.msra.mxu0 %v1127
      %1420 = vmatprep.subr.bf16.mxu0 0
      %1421 = vmatpush1.bf16.msra.mxu0 %v1128
      %1422 = vmatprep.subr.bf16.mxu0 0
      %1423 = vmatpush1.bf16.msra.mxu0 %v1129
      %1424 = vmatprep.subr.bf16.mxu0 0
      %1425 = vmatpush1.bf16.msra.mxu0 %v1130
      %1426 = vmatprep.subr.bf16.mxu0 0
      %1427 = vmatpush1.bf16.msra.mxu0 %v1131
      %1428 = vmatprep.subr.bf16.mxu0 0
      %1429 = vmatpush1.bf16.msra.mxu0 %v1132
      %1430 = vmatprep.subr.bf16.mxu0 0
      %1431 = vmatpush1.bf16.msra.mxu0 %v1133
      %1432 = vmatprep.subr.bf16.mxu0 0
      %1433 = vmatpush1.bf16.msra.mxu0 %v1134
      %1434 = vmatprep.subr.bf16.mxu0 0
      %1435 = vmatpush1.bf16.msra.mxu0 %v1135
      %1436 = vmatprep.subr.bf16.mxu0 0
      %1437 = vmatpush1.bf16.msra.mxu0 %v1136
      %1438 = vmatprep.subr.bf16.mxu0 0
      %1439 = vmatpush1.bf16.msra.mxu0 %v1137
      %1440 = vmatprep.subr.bf16.mxu0 0
      %1441 = vmatpush1.bf16.msra.mxu0 %v1138
      %1442 = vmatprep.subr.bf16.mxu0 0
      %1443 = vmatpush1.bf16.msra.mxu0 %v1139
      %1444 = vmatprep.subr.bf16.mxu0 0
      %1445 = vmatpush1.bf16.msra.mxu0 %v1140
      %1446 = vmatprep.subr.bf16.mxu0 0
      %1447 = vmatpush1.bf16.msra.mxu0 %v1141
      %1448 = vmatprep.mubr.bf16.mxu0 %v715
      %1449 = vmatmul.mubr.bf16.gmra.mrb[0].mxu0 %v714
      %v1450 = vpop.f32.mrb[0].mxu0
      %v1451 = vadd.f32 %v1354, %v1450
      %v1452 = vpop.f32.mrb[0].mxu0
      %v1453 = vpop.f32.mrb[0].mxu0
      %v1454 = vadd.f32 %v1357, %v1453
      %v1455 = vpop.f32.mrb[0].mxu0
      %1456 = vmatprep.mubr.bf16.mxu0 %v723
      %1457 = vmatmul.mubr.bf16.gmra.mrb[0].mxu0 %v722
      %v1458 = vpop.f32.mrb[0].mxu0
      %v1459 = vadd.f32 %v1362, %v1458
      %v1460 = vpop.f32.mrb[0].mxu0
      %v1461 = vpop.f32.mrb[0].mxu0
      %v1462 = vadd.f32 %v1365, %v1461
      %v1463 = vpop.f32.mrb[0].mxu0
      %1464 = vmatprep.mubr.bf16.mxu0 %v731
      %1465 = vmatmul.mubr.bf16.gmra.mrb[0].mxu0 %v730
      %v1466 = vpop.f32.mrb[0].mxu0
      %v1467 = vadd.f32 %v1370, %v1466
      %v1468 = vpop.f32.mrb[0].mxu0
      %v1469 = vpop.f32.mrb[0].mxu0
      %v1470 = vadd.f32 %v1373, %v1469
      %v1471 = vpop.f32.mrb[0].mxu0
      %1472 = vmatprep.mubr.bf16.mxu0 %v739
      %1473 = vmatmul.mubr.bf16.gmra.mrb[0].mxu0 %v738
      %v1474 = vpop.f32.mrb[0].mxu0
      %v1475 = vadd.f32 %v1378, %v1474
      %v1476 = vpop.f32.mrb[0].mxu0
      %v1477 = vpop.f32.mrb[0].mxu0
      %v1478 = vadd.f32 %v1381, %v1477
      %v1479 = vpop.f32.mrb[0].mxu0
      %1480 = vmatprep.mubr.bf16.mxu0 %v747
      %1481 = vmatmul.mubr.bf16.gmra.mrb[0].mxu0 %v746
      %v1482 = vpop.f32.mrb[0].mxu0
      %v1483 = vadd.f32 %v1386, %v1482
      %v1484 = vpop.f32.mrb[0].mxu0
      %v1485 = vpop.f32.mrb[0].mxu0
      %v1486 = vadd.f32 %v1389, %v1485
      %v1487 = vpop.f32.mrb[0].mxu0
      %1488 = vmatprep.mubr.bf16.mxu0 %v755
      %1489 = vmatmul.mubr.bf16.gmra.mrb[0].mxu0 %v754
      %v1490 = vpop.f32.mrb[0].mxu0
      %v1491 = vadd.f32 %v1394, %v1490
      %v1492 = vpop.f32.mrb[0].mxu0
      %v1493 = vpop.f32.mrb[0].mxu0
      %v1494 = vadd.f32 %v1397, %v1493
      %v1495 = vpop.f32.mrb[0].mxu0
      %1496 = vmatprep.mubr.bf16.mxu0 %v763
      %1497 = vmatmul.mubr.bf16.gmra.mrb[0].mxu0 %v762
      %v1498 = vpop.f32.mrb[0].mxu0
      %v1499 = vadd.f32 %v1402, %v1498
      %v1500 = vpop.f32.mrb[0].mxu0
      %v1501 = vpop.f32.mrb[0].mxu0
      %v1502 = vadd.f32 %v1405, %v1501
      %v1503 = vpop.f32.mrb[0].mxu0
      %1504 = vmatprep.mubr.bf16.mxu0 %v771
      %1505 = vmatmul.mubr.bf16.gmra.mrb[0].mxu0 %v770
      %v1506 = vpop.f32.mrb[0].mxu0
      %v1507 = vadd.f32 %v1410, %v1506
      %v1508 = vpop.f32.mrb[0].mxu0
      %v1509 = vpop.f32.mrb[0].mxu0
      %v1510 = vadd.f32 %v1413, %v1509
      %v1511 = vpop.f32.mrb[0].mxu0
      %1512 = vdwg.mxu0
      %1513 = vmatprep.subr.bf16.mxu0 0
      %1514 = vmatpush1.bf16.msra.mxu0 %v1142
      %1515 = vmatprep.subr.bf16.mxu0 0
      %1516 = vmatpush1.bf16.msra.mxu0 %v1143
      %1517 = vmatprep.subr.bf16.mxu0 0
      %1518 = vmatpush1.bf16.msra.mxu0 %v1144
      %1519 = vmatprep.subr.bf16.mxu0 0
      %1520 = vmatpush1.bf16.msra.mxu0 %v1145
      %1521 = vmatprep.subr.bf16.mxu0 0
      %1522 = vmatpush1.bf16.msra.mxu0 %v1146
      %1523 = vmatprep.subr.bf16.mxu0 0
      %1524 = vmatpush1.bf16.msra.mxu0 %v1147
      %1525 = vmatprep.subr.bf16.mxu0 0
      %1526 = vmatpush1.bf16.msra.mxu0 %v1148
      %1527 = vmatprep.subr.bf16.mxu0 0
      %1528 = vmatpush1.bf16.msra.mxu0 %v1149
      %1529 = vmatprep.subr.bf16.mxu0 0
      %1530 = vmatpush1.bf16.msra.mxu0 %v1150
      %1531 = vmatprep.subr.bf16.mxu0 0
      %1532 = vmatpush1.bf16.msra.mxu0 %v1151
      %1533 = vmatprep.subr.bf16.mxu0 0
      %1534 = vmatpush1.bf16.msra.mxu0 %v1152
      %1535 = vmatprep.subr.bf16.mxu0 0
      %1536 = vmatpush1.bf16.msra.mxu0 %v1153
      %1537 = vmatprep.subr.bf16.mxu0 0
      %1538 = vmatpush1.bf16.msra.mxu0 %v1154
      %1539 = vmatprep.subr.bf16.mxu0 0
      %1540 = vmatpush1.bf16.msra.mxu0 %v1155
      %1541 = vmatprep.subr.bf16.mxu0 0
      %1542 = vmatpush1.bf16.msra.mxu0 %v1156
      %1543 = vmatprep.subr.bf16.mxu0 0
      %1544 = vmatpush1.bf16.msra.mxu0 %v1157
      %1545 = vmatprep.mubr.bf16.mxu0 %v717
      %1546 = vmatmul.mubr.bf16.gmra.mrb[0].mxu0 %v716
      %v1547 = vpop.f32.mrb[0].mxu0
      %v1548 = vadd.f32 %v1451, %v1547
      %v1549 = vpop.f32.mrb[0].mxu0
      %v1550 = vpop.f32.mrb[0].mxu0
      %v1551 = vadd.f32 %v1454, %v1550
      %v1552 = vpop.f32.mrb[0].mxu0
      %1553 = vmatprep.mubr.bf16.mxu0 %v725
      %1554 = vmatmul.mubr.bf16.gmra.mrb[0].mxu0 %v724
      %v1555 = vpop.f32.mrb[0].mxu0
      %v1556 = vadd.f32 %v1459, %v1555
      %v1557 = vpop.f32.mrb[0].mxu0
      %v1558 = vpop.f32.mrb[0].mxu0
      %v1559 = vadd.f32 %v1462, %v1558
      %v1560 = vpop.f32.mrb[0].mxu0
      %1561 = vmatprep.mubr.bf16.mxu0 %v733
      %1562 = vmatmul.mubr.bf16.gmra.mrb[0].mxu0 %v732
      %v1563 = vpop.f32.mrb[0].mxu0
      %v1564 = vadd.f32 %v1467, %v1563
      %v1565 = vpop.f32.mrb[0].mxu0
      %v1566 = vpop.f32.mrb[0].mxu0
      %v1567 = vadd.f32 %v1470, %v1566
      %v1568 = vpop.f32.mrb[0].mxu0
      %1569 = vmatprep.mubr.bf16.mxu0 %v741
      %1570 = vmatmul.mubr.bf16.gmra.mrb[0].mxu0 %v740
      %v1571 = vpop.f32.mrb[0].mxu0
      %v1572 = vadd.f32 %v1475, %v1571
      %v1573 = vpop.f32.mrb[0].mxu0
      %v1574 = vpop.f32.mrb[0].mxu0
      %v1575 = vadd.f32 %v1478, %v1574
      %v1576 = vpop.f32.mrb[0].mxu0
      %1577 = vmatprep.mubr.bf16.mxu0 %v749
      %1578 = vmatmul.mubr.bf16.gmra.mrb[0].mxu0 %v748
      %v1579 = vpop.f32.mrb[0].mxu0
      %v1580 = vadd.f32 %v1483, %v1579
      %v1581 = vpop.f32.mrb[0].mxu0
      %v1582 = vpop.f32.mrb[0].mxu0
      %v1583 = vadd.f32 %v1486, %v1582
      %v1584 = vpop.f32.mrb[0].mxu0
      %1585 = vmatprep.mubr.bf16.mxu0 %v757
      %1586 = vmatmul.mubr.bf16.gmra.mrb[0].mxu0 %v756
      %v1587 = vpop.f32.mrb[0].mxu0
      %v1588 = vadd.f32 %v1491, %v1587
      %v1589 = vpop.f32.mrb[0].mxu0
      %v1590 = vpop.f32.mrb[0].mxu0
      %v1591 = vadd.f32 %v1494, %v1590
      %v1592 = vpop.f32.mrb[0].mxu0
      %1593 = vmatprep.mubr.bf16.mxu0 %v765
      %1594 = vmatmul.mubr.bf16.gmra.mrb[0].mxu0 %v764
      %v1595 = vpop.f32.mrb[0].mxu0
      %v1596 = vadd.f32 %v1499, %v1595
      %v1597 = vpop.f32.mrb[0].mxu0
      %v1598 = vpop.f32.mrb[0].mxu0
      %v1599 = vadd.f32 %v1502, %v1598
      %v1600 = vpop.f32.mrb[0].mxu0
      %1601 = vmatprep.mubr.bf16.mxu0 %v773
      %1602 = vmatmul.mubr.bf16.gmra.mrb[0].mxu0 %v772
      %v1603 = vpop.f32.mrb[0].mxu0
      %v1604 = vadd.f32 %v1507, %v1603
      %v1605 = vpop.f32.mrb[0].mxu0
      %v1606 = vpop.f32.mrb[0].mxu0
      %v1607 = vadd.f32 %v1510, %v1606
      %v1608 = vpop.f32.mrb[0].mxu0
      %1609 = vdwg.mxu0
      %v1610 = vmax.f32 %v1548, 0.0
      %v1611 = vmax.f32 %v1551, 0.0
      %v1612 = vmax.f32 %v1556, 0.0
      %v1613 = vmax.f32 %v1559, 0.0
      %v1614 = vmax.f32 %v1564, 0.0
      %v1615 = vmax.f32 %v1567, 0.0
      %v1616 = vmax.f32 %v1572, 0.0
      %v1617 = vmax.f32 %v1575, 0.0
      %v1618 = vmax.f32 %v1580, 0.0
      %v1619 = vmax.f32 %v1583, 0.0
      %v1620 = vmax.f32 %v1588, 0.0
      %v1621 = vmax.f32 %v1591, 0.0
      %v1622 = vmax.f32 %v1596, 0.0
      %v1623 = vmax.f32 %v1599, 0.0
      %v1624 = vmax.f32 %v1604, 0.0
      %v1625 = vmax.f32 %v1607, 0.0
      %v1626 = vpack.c.bf16 %v1611, %v1610
      %v1627 = vpack.c.bf16 %v1613, %v1612
      %v1628 = vpack.c.bf16 %v1615, %v1614
      %v1629 = vpack.c.bf16 %v1617, %v1616
      %v1630 = vpack.c.bf16 %v1619, %v1618
      %v1631 = vpack.c.bf16 %v1621, %v1620
      %v1632 = vpack.c.bf16 %v1623, %v1622
      %v1633 = vpack.c.bf16 %v1625, %v1624
      %v1642 = vunpack.c.l.b16 %v1626
      %v1643 = vunpack.c.h.b16 %v1626
      %v1644 = vunpack.c.l.b16 %v1627
      %v1645 = vunpack.c.h.b16 %v1627
      %v1646 = vunpack.c.l.b16 %v1628
      %v1647 = vunpack.c.h.b16 %v1628
      %v1648 = vunpack.c.l.b16 %v1629
      %v1649 = vunpack.c.h.b16 %v1629
      %v1650 = vunpack.c.l.b16 %v1630
      %v1651 = vunpack.c.h.b16 %v1630
      %v1652 = vunpack.c.l.b16 %v1631
      %v1653 = vunpack.c.h.b16 %v1631
      %v1654 = vunpack.c.l.b16 %v1632
      %v1655 = vunpack.c.h.b16 %v1632
      %v1656 = vunpack.c.l.b16 %v1633
      %v1657 = vunpack.c.h.b16 %v1633
      %v1658 = vpack.c.b16 %v1642, %v1642
      %v1659 = vpack.c.b16 %v1643, %v1643
      %v1660 = vpack.c.b16 %v1644, %v1644
      %v1661 = vpack.c.b16 %v1645, %v1645
      %v1662 = vpack.c.b16 %v1646, %v1646
      %v1663 = vpack.c.b16 %v1647, %v1647
      %v1664 = vpack.c.b16 %v1648, %v1648
      %v1665 = vpack.c.b16 %v1649, %v1649
      %v1666 = vpack.c.b16 %v1650, %v1650
      %v1667 = vpack.c.b16 %v1651, %v1651
      %v1668 = vpack.c.b16 %v1652, %v1652
      %v1669 = vpack.c.b16 %v1653, %v1653
      %v1670 = vpack.c.b16 %v1654, %v1654
      %v1671 = vpack.c.b16 %v1655, %v1655
      %v1672 = vpack.c.b16 %v1656, %v1656
      %v1673 = vpack.c.b16 %v1657, %v1657
      %vm1690 = vcmask 519168
      %1691 = vst.msk [vmem:[%s310] sm:$0xf] %vm1690, %v1658
      %1692 = vst.msk [vmem:[%s310 + $0x4] sm:$0xf] %vm1690, %v1659
      %1693 = vst.msk [vmem:[%s310 + $0x8] sm:$0xf] %vm1690, %v1660
      %1694 = vst.msk [vmem:[%s310 + $0xc] sm:$0xf] %vm1690, %v1661
      %1695 = vst.msk [vmem:[%s310 + $0x10] sm:$0xf] %vm1690, %v1662
      %1696 = vst.msk [vmem:[%s310 + $0x14] sm:$0xf] %vm1690, %v1663
      %1697 = vst.msk [vmem:[%s310 + $0x18] sm:$0xf] %vm1690, %v1664
      %1698 = vst.msk [vmem:[%s310 + $0x1c] sm:$0xf] %vm1690, %v1665
      %1699 = vst.msk [vmem:[%s310 + $0x20] sm:$0xf] %vm1690, %v1666
      %1700 = vst.msk [vmem:[%s310 + $0x24] sm:$0xf] %vm1690, %v1667
      %1701 = vst.msk [vmem:[%s310 + $0x28] sm:$0xf] %vm1690, %v1668
      %1702 = vst.msk [vmem:[%s310 + $0x2c] sm:$0xf] %vm1690, %v1669
      %1703 = vst.msk [vmem:[%s310 + $0x30] sm:$0xf] %vm1690, %v1670
      %1704 = vst.msk [vmem:[%s310 + $0x34] sm:$0xf] %vm1690, %v1671
      %1705 = vst.msk [vmem:[%s310 + $0x38] sm:$0xf] %vm1690, %v1672
      %1706 = vst.msk [vmem:[%s310 + $0x3c] sm:$0xf] %vm1690, %v1673
      %p1707 = scmp.eq.s32.totalorder %s22, 0
      // Predicated region
      $region33: #{srcnn_forward.4} parent=31 // pred_check
        %p1708 = pneg %p1707
      $region34: #{srcnn_forward.4} parent=31 // pred_check_branch
        %1710 = sbr.rel (%p1708) target = $region36
      $region35: #{srcnn_forward.4} parent=31 // pred_region
        %vm1711 = vcmask 516096
        %1712 = vst.msk [vmem:[%s314] sm:$0x1] %vm1711, 0.0
        %1713 = vst.msk [vmem:[%s317] sm:$0x1] %vm1711, 0.0
      $region36: #{srcnn_forward.4} parent=31 // pred_fallthru
        _
      %v1714 = vld [vmem:[%s314] sm:$0x1]
      %vm1715 = vcmask 523264
      %v1716 = vsel %vm1715, %v1610, 0.0
      %v1717 = vsel %vm1715, %v1611, 0.0
      %v1718 = vadd.f32 %v1716, %v1717
      %v1719 = vsel %vm1715, %v1612, 0.0
      %v1720 = vadd.f32 %v1718, %v1719
      %v1721 = vsel %vm1715, %v1613, 0.0
      %v1722 = vadd.f32 %v1720, %v1721
      %v1723 = vsel %vm1715, %v1614, 0.0
      %v1724 = vadd.f32 %v1722, %v1723
      %v1725 = vsel %vm1715, %v1615, 0.0
      %v1726 = vadd.f32 %v1724, %v1725
      %v1727 = vsel %vm1715, %v1616, 0.0
      %v1728 = vadd.f32 %v1726, %v1727
      %v1729 = vsel %vm1715, %v1617, 0.0
      %v1730 = vadd.f32 %v1728, %v1729
      %v1731 = vsel %vm1715, %v1618, 0.0
      %v1732 = vadd.f32 %v1730, %v1731
      %v1733 = vsel %vm1715, %v1619, 0.0
      %v1734 = vadd.f32 %v1732, %v1733
      %v1735 = vsel %vm1715, %v1620, 0.0
      %v1736 = vadd.f32 %v1734, %v1735
      %v1737 = vsel %vm1715, %v1621, 0.0
      %v1738 = vadd.f32 %v1736, %v1737
      %v1739 = vsel %vm1715, %v1622, 0.0
      %v1740 = vadd.f32 %v1738, %v1739
      %v1741 = vsel %vm1715, %v1623, 0.0
      %v1742 = vadd.f32 %v1740, %v1741
      %v1743 = vsel %vm1715, %v1624, 0.0
      %v1744 = vadd.f32 %v1742, %v1743
      %v1745 = vsel %vm1715, %v1625, 0.0
      %v1746 = vadd.f32 %v1744, %v1745
      %v1747 = vrot.slane %v1746, 4
      %v1748 = vadd.f32 %v1746, %v1747
      %v1749 = vrot.slane %v1748, 2
      %v1750 = vadd.f32 %v1748, %v1749
      %v1751 = vrot.slane %v1750, 1
      %v1752 = vadd.f32 %v1750, %v1751
      %v1753 = vadd.f32 %v1714, %v1752
      %vm1754 = vcmask 516096
      %1755 = vst.msk [vmem:[%s314] sm:$0x1] %vm1754, %v1753
      %v1756 = vld [vmem:[%s317] sm:$0x1]
      %v1757 = vmul.f32 %v1610, %v1610
      %v1758 = vmul.f32 %v1611, %v1611
      %v1759 = vmul.f32 %v1612, %v1612
      %v1760 = vmul.f32 %v1613, %v1613
      %v1761 = vmul.f32 %v1614, %v1614
      %v1762 = vmul.f32 %v1615, %v1615
      %v1763 = vmul.f32 %v1616, %v1616
      %v1764 = vmul.f32 %v1617, %v1617
      %v1765 = vmul.f32 %v1618, %v1618
      %v1766 = vmul.f32 %v1619, %v1619
      %v1767 = vmul.f32 %v1620, %v1620
      %v1768 = vmul.f32 %v1621, %v1621
      %v1769 = vmul.f32 %v1622, %v1622
      %v1770 = vmul.f32 %v1623, %v1623
      %v1771 = vmul.f32 %v1624, %v1624
      %v1772 = vmul.f32 %v1625, %v1625
      %v1773 = vsel %vm1715, %v1757, 0.0
      %v1774 = vsel %vm1715, %v1758, 0.0
      %v1775 = vadd.f32 %v1773, %v1774
      %v1776 = vsel %vm1715, %v1759, 0.0
      %v1777 = vadd.f32 %v1775, %v1776
      %v1778 = vsel %vm1715, %v1760, 0.0
      %v1779 = vadd.f32 %v1777, %v1778
      %v1780 = vsel %vm1715, %v1761, 0.0
      %v1781 = vadd.f32 %v1779, %v1780
      %v1782 = vsel %vm1715, %v1762, 0.0
      %v1783 = vadd.f32 %v1781, %v1782
      %v1784 = vsel %vm1715, %v1763, 0.0
      %v1785 = vadd.f32 %v1783, %v1784
      %v1786 = vsel %vm1715, %v1764, 0.0
      %v1787 = vadd.f32 %v1785, %v1786
      %v1788 = vsel %vm1715, %v1765, 0.0
      %v1789 = vadd.f32 %v1787, %v1788
      %v1790 = vsel %vm1715, %v1766, 0.0
      %v1791 = vadd.f32 %v1789, %v1790
      %v1792 = vsel %vm1715, %v1767, 0.0
      %v1793 = vadd.f32 %v1791, %v1792
      %v1794 = vsel %vm1715, %v1768, 0.0
      %v1795 = vadd.f32 %v1793, %v1794
      %v1796 = vsel %vm1715, %v1769, 0.0
      %v1797 = vadd.f32 %v1795, %v1796
      %v1798 = vsel %vm1715, %v1770, 0.0
      %v1799 = vadd.f32 %v1797, %v1798
      %v1800 = vsel %vm1715, %v1771, 0.0
      %v1801 = vadd.f32 %v1799, %v1800
      %v1802 = vsel %vm1715, %v1772, 0.0
      %v1803 = vadd.f32 %v1801, %v1802
      %v1804 = vrot.slane %v1803, 4
      %v1805 = vadd.f32 %v1803, %v1804
      %v1806 = vrot.slane %v1805, 2
      %v1807 = vadd.f32 %v1805, %v1806
      %v1808 = vrot.slane %v1807, 1
      %v1809 = vadd.f32 %v1807, %v1808
      %v1810 = vadd.f32 %v1756, %v1809
      %1811 = vst.msk [vmem:[%s317] sm:$0x1] %vm1754, %v1810
      %s1812 = smul.u32 16, %s22
      %p1813 = scmp.lt.s32.totalorder %s21, 3
      %s1814 = scalar_select %p1813, %s21, 3
      %p1815 = scmp.lt.s32.totalorder %s1812, 15
      %s1816 = scalar_select %p1815, %s1812, 15
      %s1817 = smul.addr %s1814, 16
      %s1818 = sadd.s32 %s1816, %s1817
      %s1819 = smul.addr %s1818, 4
      %s1820 = scalar_lea.vmem %s3, %s1819
      %p1821 = scmp.lt.s32.totalorder %s21, 3
      %s1822 = scalar_select %p1821, %s21, 3
      %s1823 = scalar_lea.vmem %s4, %s1822
      %p1824 = scmp.lt.s32.totalorder %s21, 3
      %s1825 = scalar_select %p1824, %s21, 3
      %s1826 = scalar_lea.vmem %s5, %s1825
      // Predicated region
      $region37: #{srcnn_forward.4} parent=31 // pred_check
        %p1827 = pneg %p129
      $region38: #{srcnn_forward.4} parent=31 // pred_check_branch
        %1829 = sbr.rel (%p1827) target = $region40
      $region39: #{srcnn_forward.4} parent=31 // pred_region
        %s1830 = smul.u32 16, %s22
      $region40: #{srcnn_forward.4} parent=31 // pred_fallthru
        _
      // Predicated region
      $region41: #{srcnn_forward.4} parent=31 // pred_check
        %p1831 = pneg %p155
      $region42: #{srcnn_forward.4} parent=31 // pred_check_branch
        %1833 = sbr.rel (%p1831) target = $region44
      $region43: #{srcnn_forward.4} parent=31 // pred_region
        _
      $region44: #{srcnn_forward.4} parent=31 // pred_fallthru
        _
      // Predicated region
      $region45: #{srcnn_forward.4} parent=31 // pred_check
        %p1834 = pneg %p181
      $region46: #{srcnn_forward.4} parent=31 // pred_check_branch
        %1836 = sbr.rel (%p1834) target = $region48
      $region47: #{srcnn_forward.4} parent=31 // pred_region
        _
      $region48: #{srcnn_forward.4} parent=31 // pred_fallthru
        _
    $region32: #{srcnn_forward.4} parent=5 // pred_fallthru
      _
    %p1837 = scmp.le.s32.totalorder 2, %s12
    // Predicated region
    $region49: #{srcnn_forward.4} parent=5 // pred_check
      %p1838 = pneg %p1837
    $region50: #{srcnn_forward.4} parent=5 // pred_check_branch
      %1840 = sbr.rel (%p1838) target = $region52
    $region51: #{srcnn_forward.4} parent=5 // pred_region
      %s1841 = ssub.s32 %s12, 2
      // Predicated region
      $region53: #{srcnn_forward.4} parent=51 // pred_check
        %p1842 = pneg %p135
      $region54: #{srcnn_forward.4} parent=51 // pred_check_branch
        %1844 = sbr.rel (%p1842) target = $region56
      $region55: #{srcnn_forward.4} parent=51 // pred_region
        %s1845 = smul.u32 16, %s24
        %p1846 = scmp.lt.s32.totalorder %s23, 3
        %s1847 = scalar_select %p1846, %s23, 3
        %p1848 = scmp.lt.s32.totalorder %s1845, 15
        %s1849 = scalar_select %p1848, %s1845, 15
        %s1850 = smul.addr %s1847, 16
        %s1851 = sadd.s32 %s1849, %s1850
        %s1852 = smul.addr %s1851, 4
        %s1853 = scalar_lea.vmem %s3, %s1852
      $region56: #{srcnn_forward.4} parent=51 // pred_fallthru
        _
      // Predicated region
      $region57: #{srcnn_forward.4} parent=51 // pred_check
        %p1854 = pneg %p161
      $region58: #{srcnn_forward.4} parent=51 // pred_check_branch
        %1856 = sbr.rel (%p1854) target = $region60
      $region59: #{srcnn_forward.4} parent=51 // pred_region
        %p1857 = scmp.lt.s32.totalorder %s23, 3
        %s1858 = scalar_select %p1857, %s23, 3
        %s1859 = scalar_lea.vmem %s4, %s1858
      $region60: #{srcnn_forward.4} parent=51 // pred_fallthru
        _
      // Predicated region
      $region61: #{srcnn_forward.4} parent=51 // pred_check
        %p1860 = pneg %p187
      $region62: #{srcnn_forward.4} parent=51 // pred_check_branch
        %1862 = sbr.rel (%p1860) target = $region64
      $region63: #{srcnn_forward.4} parent=51 // pred_region
        %p1863 = scmp.lt.s32.totalorder %s23, 3
        %s1864 = scalar_select %p1863, %s23, 3
        %s1865 = scalar_lea.vmem %s5, %s1864
      $region64: #{srcnn_forward.4} parent=51 // pred_fallthru
        _
    $region52: #{srcnn_forward.4} parent=5 // pred_fallthru
      _
  $region6: #{srcnn_forward.4} parent=0 // loop_footer
    %s16 = sadd.s32 1, %s12
  $region7: #{srcnn_forward.4} parent=0 // loop_footer_branch
    %11 = sbr.rel target = $region3
  $region8: #{srcnn_forward.4} parent=0 // loop_exit
    _

// kernel: srcnn_forward.5
$region0: #{srcnn_forward.5}
  #allocation0 [shape = 'u32[]', space=smem, size = 0x4, offset = 0x4, fixed_abs, tag = 'smem constant byte address 0x4 - core index']
  #allocation1 [shape = 'u32[144,128]{1,0:T(1,128)}', space=vmem, size = 0x12000, scoped, tag = 'internal scratch']
  %s0 = inlined_call_operand.vmem [shape: bf16[4,512,256], index: 0, kind: input, shape index: {}]
  %s1 = inlined_call_operand.vmem [shape: bf16[4,256,128], index: 1, kind: input, shape index: {}]
  %s2 = inlined_call_operand.vmem [shape: f32[4,1,128], index: 2, kind: input, shape index: {}]
  %s3 = inlined_call_operand.vmem [shape: f32[4,512,128], index: 3, kind: output, shape index: {}]
  %s4 = sld [smem:[#allocation0]]
  $region45: #{srcnn_forward.5} parent=0
    _
  %s6 = ssub.s32 1, %s4
  %s7 = scalar_select 0, %s6, %s4
  loop: start=0, step=1, limit=6
  $region2: #{srcnn_forward.5} parent=0 // loop_pre_header
    _
  $region3: #{srcnn_forward.5} parent=0 // loop_header
    %s9 = sphi 0, %s13
    %p10 = scmp.ge.s32.totalorder %s9, 6
    %s16 = sphi 0, %s28
    %s17 = sphi 0, %s24
    %s18 = sphi 0, %s16
    %s19 = sphi 0, %s17
    %s20 = sphi 0, %s18
    %s21 = sphi 0, %s19
    %s33 = sphi 0, %s35
    %s36 = sphi 0, %s33
    %s37 = sphi 0, %s36
    %s53 = sphi 0, %s37
    %s59 = sphi 0, %s61
    %s62 = sphi 0, %s59
    %s63 = sphi 0, %s62
    %s79 = sphi 0, %s63
    %s85 = sphi 0, %s87
    %s88 = sphi 0, %s85
    %s89 = sphi 0, %s88
    %s105 = sphi 0, %s89
    %s113 = sphi 0, %s115
    %s116 = sphi 0, %s113
    %s117 = sphi 0, %s116
    %s133 = sphi 0, %s117
  $region4: #{srcnn_forward.5} parent=0 // loop_header_branch
    %12 = sbr.rel (%p10) target = $region8
  $region5: #{srcnn_forward.5} parent=0 // loop_body
    %s14 = ssub.s32 %s9, 1
    %s15 = ssub.s32 %s9, 2
    %s22 = sadd.s32 1, %s17
    %p23 = scmp.ge.s32.totalorder %s22, 1
    %s24 = scalar_select %p23, 0, %s22
    %s25 = sadd.s32 1, %s16
    %s26 = scalar_select %p23, %s25, %s16
    %p27 = scmp.ge.s32.totalorder %s26, 4
    %s28 = scalar_select %p27, 0, %s26
    %s29 = ssub.s32 %s16, %s28
    %s30 = ssub.s32 %s17, %s24
    %s31 = sor.u32 %s29, %s30
    %p32 = scmp.eq.s32.totalorder %s31, 0
    %s34 = sadd.s32 %s33, 1
    %s35 = scalar_select %p32, %s33, %s34
    %p38 = pneg %p32
    %p39 = scmp.eq.s32.totalorder %s9, 3
    %p40 = por %p38, %p39
    %p41 = scmp.ne.s32.totalorder %s33, %s36
    %p42 = scmp.eq.s32.totalorder %s9, 0
    %p43 = por %p41, %p42
    %p44 = scmp.ne.s32.totalorder %s33, %s36
    %p45 = scmp.eq.s32.totalorder %s14, 3
    %p46 = por %p44, %p45
    %p47 = scmp.ne.s32.totalorder %s36, %s37
    %p48 = scmp.eq.s32.totalorder %s14, 0
    %p49 = por %p47, %p48
    %p50 = scmp.ne.s32.totalorder %s36, %s37
    %p51 = scmp.eq.s32.totalorder %s15, 3
    %p52 = por %p50, %p51
    %p54 = scmp.ne.s32.totalorder %s37, %s53
    %p55 = scmp.eq.s32.totalorder %s15, 0
    %p56 = por %p54, %p55
    %s57 = ssub.s32 %s16, %s28
    %p58 = scmp.eq.s32.totalorder %s57, 0
    %s60 = sadd.s32 %s59, 1
    %s61 = scalar_select %p58, %s59, %s60
    %p64 = pneg %p58
    %p65 = scmp.eq.s32.totalorder %s9, 3
    %p66 = por %p64, %p65
    %p67 = scmp.ne.s32.totalorder %s59, %s62
    %p68 = scmp.eq.s32.totalorder %s9, 0
    %p69 = por %p67, %p68
    %p70 = scmp.ne.s32.totalorder %s59, %s62
    %p71 = scmp.eq.s32.totalorder %s14, 3
    %p72 = por %p70, %p71
    %p73 = scmp.ne.s32.totalorder %s62, %s63
    %p74 = scmp.eq.s32.totalorder %s14, 0
    %p75 = por %p73, %p74
    %p76 = scmp.ne.s32.totalorder %s62, %s63
    %p77 = scmp.eq.s32.totalorder %s15, 3
    %p78 = por %p76, %p77
    %p80 = scmp.ne.s32.totalorder %s63, %s79
    %p81 = scmp.eq.s32.totalorder %s15, 0
    %p82 = por %p80, %p81
    %s83 = ssub.s32 %s16, %s28
    %p84 = scmp.eq.s32.totalorder %s83, 0
    %s86 = sadd.s32 %s85, 1
    %s87 = scalar_select %p84, %s85, %s86
    %p90 = pneg %p84
    %p91 = scmp.eq.s32.totalorder %s9, 3
    %p92 = por %p90, %p91
    %p93 = scmp.ne.s32.totalorder %s85, %s88
    %p94 = scmp.eq.s32.totalorder %s9, 0
    %p95 = por %p93, %p94
    %p96 = scmp.ne.s32.totalorder %s85, %s88
    %p97 = scmp.eq.s32.totalorder %s14, 3
    %p98 = por %p96, %p97
    %p99 = scmp.ne.s32.totalorder %s88, %s89
    %p100 = scmp.eq.s32.totalorder %s14, 0
    %p101 = por %p99, %p100
    %p102 = scmp.ne.s32.totalorder %s88, %s89
    %p103 = scmp.eq.s32.totalorder %s15, 3
    %p104 = por %p102, %p103
    %p106 = scmp.ne.s32.totalorder %s89, %s105
    %p107 = scmp.eq.s32.totalorder %s15, 0
    %p108 = por %p106, %p107
    %s109 = ssub.s32 %s16, %s28
    %s110 = ssub.s32 %s17, %s24
    %s111 = sor.u32 %s109, %s110
    %p112 = scmp.eq.s32.totalorder %s111, 0
    %s114 = sadd.s32 %s113, 1
    %s115 = scalar_select %p112, %s113, %s114
    %p118 = pneg %p112
    %p119 = scmp.eq.s32.totalorder %s9, 3
    %p120 = por %p118, %p119
    %p121 = scmp.ne.s32.totalorder %s113, %s116
    %p122 = scmp.eq.s32.totalorder %s9, 0
    %p123 = por %p121, %p122
    %p124 = scmp.ne.s32.totalorder %s113, %s116
    %p125 = scmp.eq.s32.totalorder %s14, 3
    %p126 = por %p124, %p125
    %p127 = scmp.ne.s32.totalorder %s116, %s117
    %p128 = scmp.eq.s32.totalorder %s14, 0
    %p129 = por %p127, %p128
    %p130 = scmp.ne.s32.totalorder %s116, %s117
    %p131 = scmp.eq.s32.totalorder %s15, 3
    %p132 = por %p130, %p131
    %p134 = scmp.ne.s32.totalorder %s117, %s133
    %p135 = scmp.eq.s32.totalorder %s15, 0
    %p136 = por %p134, %p135
    %p137 = scmp.le.s32.totalorder 1, %s9
    %p138 = scmp.lt.s32.totalorder %s9, 5
    %p139 = pnand %p137, %p138
    %p140 = pneg %p139
    // Predicated region
    $region9: #{srcnn_forward.5} parent=5 // pred_check
      _
    $region10: #{srcnn_forward.5} parent=5 // pred_check_branch
      %142 = sbr.rel (%p139) target = $region12
    $region11: #{srcnn_forward.5} parent=5 // pred_region
      %s143 = ssub.s32 %s9, 1
    $region12: #{srcnn_forward.5} parent=5 // pred_fallthru
      _
    %p144 = scmp.lt.s32.totalorder %s9, 4
    // Predicated region
    $region13: #{srcnn_forward.5} parent=5 // pred_check
      %p145 = pneg %p144
    $region14: #{srcnn_forward.5} parent=5 // pred_check_branch
      %147 = sbr.rel (%p145) target = $region16
    $region15: #{srcnn_forward.5} parent=5 // pred_region
      // Predicated region
      $region17: #{srcnn_forward.5} parent=15 // pred_check
        %p148 = pneg %p43
      $region18: #{srcnn_forward.5} parent=15 // pred_check_branch
        %150 = sbr.rel (%p148) target = $region20
      $region19: #{srcnn_forward.5} parent=15 // pred_region
        %s151 = smul.u32 64, %s17
        %p152 = scmp.lt.s32.totalorder %s16, 3
        %s153 = scalar_select %p152, %s16, 3
        %p154 = scmp.lt.s32.totalorder %s151, 63
        %s155 = scalar_select %p154, %s151, 63
        %s156 = smul.addr %s155, 2
        %s157 = smul.addr %s153, 128
        %s158 = sadd.s32 %s156, %s157
        %s159 = smul.addr %s158, 4
        %s160 = scalar_lea.vmem %s0, %s159
        %s161 = smul.u32 64, %s17
      $region20: #{srcnn_forward.5} parent=15 // pred_fallthru
        _
      // Predicated region
      $region21: #{srcnn_forward.5} parent=15 // pred_check
        %p162 = pneg %p69
      $region22: #{srcnn_forward.5} parent=15 // pred_check_branch
        %164 = sbr.rel (%p162) target = $region24
      $region23: #{srcnn_forward.5} parent=15 // pred_region
        %p165 = scmp.lt.s32.totalorder %s16, 3
        %s166 = scalar_select %p165, %s16, 3
        %s167 = smul.addr %s166, 32
        %s168 = smul.addr %s167, 4
        %s169 = scalar_lea.vmem %s1, %s168
      $region24: #{srcnn_forward.5} parent=15 // pred_fallthru
        _
      // Predicated region
      $region25: #{srcnn_forward.5} parent=15 // pred_check
        %p170 = pneg %p95
      $region26: #{srcnn_forward.5} parent=15 // pred_check_branch
        %172 = sbr.rel (%p170) target = $region28
      $region27: #{srcnn_forward.5} parent=15 // pred_region
        %p173 = scmp.lt.s32.totalorder %s16, 3
        %s174 = scalar_select %p173, %s16, 3
        %s175 = scalar_lea.vmem %s2, %s174
      $region28: #{srcnn_forward.5} parent=15 // pred_fallthru
        _
    $region16: #{srcnn_forward.5} parent=5 // pred_fallthru
      _
    %p176 = scmp.le.s32.totalorder 1, %s9
    %p177 = scmp.lt.s32.totalorder %s9, 5
    %p178 = pnand %p176, %p177
    %p179 = pneg %p178
    // Predicated region
    $region29: #{srcnn_forward.5} parent=5 // pred_check
      _
    $region30: #{srcnn_forward.5} parent=5 // pred_check_branch
      %181 = sbr.rel (%p178) target = $region32
    $region31: #{srcnn_forward.5} parent=5 // pred_region
      %s182 = ssub.s32 %s9, 1
      %s183 = smul.u32 64, %s19
      %p184 = scmp.lt.s32.totalorder %s18, 3
      %s185 = scalar_select %p184, %s18, 3
      %p186 = scmp.lt.s32.totalorder %s183, 63
      %s187 = scalar_select %p186, %s183, 63
      %s188 = smul.addr %s187, 2
      %s189 = smul.addr %s185, 128
      %s190 = sadd.s32 %s188, %s189
      %s191 = smul.addr %s190, 4
      %s192 = scalar_lea.vmem %s0, %s191
      %p193 = pneg %p49
      %p194 = pneg %p46
      %p195 = scmp.lt.s32.totalorder %s18, 3
      %s196 = scalar_select %p195, %s18, 3
      %s197 = smul.addr %s196, 32
      %s198 = smul.addr %s197, 4
      %s199 = scalar_lea.vmem %s1, %s198
      %p200 = pneg %p75
      %p201 = pneg %p72
      %p202 = scmp.lt.s32.totalorder %s18, 3
      %s203 = scalar_select %p202, %s18, 3
      %s204 = scalar_lea.vmem %s2, %s203
      %p205 = pneg %p101
      %p206 = pneg %p98
      %p207 = pneg %p129
      %p208 = pneg %p126
      %s209 = smul.u32 64, %s19
      %p210 = scmp.lt.s32.totalorder %s18, 3
      %s211 = scalar_select %p210, %s18, 3
      %p212 = scmp.lt.s32.totalorder %s209, 63
      %s213 = scalar_select %p212, %s209, 63
      %s214 = smul.addr %s211, 64
      %s215 = sadd.s32 %s213, %s214
      %s216 = smul.addr %s215, 8
      %s217 = scalar_lea.vmem %s3, %s216
      %s218 = smul.u32 64, %s19
      %p219 = scmp.lt.s32.totalorder %s18, 3
      %s220 = scalar_select %p219, %s18, 3
      %p221 = scmp.lt.s32.totalorder %s218, 63
      %s222 = scalar_select %p221, %s218, 63
      %s223 = smul.addr %s222, 2
      %s224 = smul.addr %s220, 128
      %s225 = sadd.s32 %s223, %s224
      %s226 = smul.addr %s225, 4
      %s227 = scalar_lea.vmem %s0, %s226
      %s228 = smul.u32 64, %s19
      %p229 = scmp.lt.s32.totalorder %s18, 3
      %s230 = scalar_select %p229, %s18, 3
      %s231 = smul.addr %s230, 32
      %s232 = smul.addr %s231, 4
      %s233 = scalar_lea.vmem %s1, %s232
      %p234 = scmp.lt.s32.totalorder %s18, 3
      %s235 = scalar_select %p234, %s18, 3
      %s236 = scalar_lea.vmem %s2, %s235
      %s237 = smul.u32 64, %s19
      %p238 = scmp.lt.s32.totalorder %s18, 3
      %s239 = scalar_select %p238, %s18, 3
      %p240 = scmp.lt.s32.totalorder %s237, 63
      %s241 = scalar_select %p240, %s237, 63
      %s242 = smul.addr %s239, 64
      %s243 = sadd.s32 %s241, %s242
      %s244 = smul.addr %s243, 8
      %s245 = scalar_lea.vmem %s3, %s244
      %s246 = smul.u32 64, %s19
      %v248 = vld [vmem:[%s227] sm:$0xff]
      %v249 = vld [vmem:[%s227 + $0x8] sm:$0xff]
      %v250 = vld [vmem:[%s227 + $0x10] sm:$0xff]
      %v251 = vld [vmem:[%s227 + $0x18] sm:$0xff]
      %v252 = vld [vmem:[%s227 + $0x20] sm:$0xff]
      %v253 = vld [vmem:[%s227 + $0x28] sm:$0xff]
      %v254 = vld [vmem:[%s227 + $0x30] sm:$0xff]
      %v255 = vld [vmem:[%s227 + $0x38] sm:$0xff]
      %v256 = vld [vmem:[%s227 + $0x40] sm:$0xff]
      %v257 = vld [vmem:[%s227 + $0x48] sm:$0xff]
      %v258 = vld [vmem:[%s227 + $0x50] sm:$0xff]
      %v259 = vld [vmem:[%s227 + $0x58] sm:$0xff]
      %v260 = vld [vmem:[%s227 + $0x60] sm:$0xff]
      %v261 = vld [vmem:[%s227 + $0x68] sm:$0xff]
      %v262 = vld [vmem:[%s227 + $0x70] sm:$0xff]
      %v263 = vld [vmem:[%s227 + $0x78] sm:$0xff]
      %v264 = vld [vmem:[%s227 + $0x80] sm:$0xff]
      %v265 = vld [vmem:[%s227 + $0x88] sm:$0xff]
      %v266 = vld [vmem:[%s227 + $0x90] sm:$0xff]
      %v267 = vld [vmem:[%s227 + $0x98] sm:$0xff]
      %v268 = vld [vmem:[%s227 + $0xa0] sm:$0xff]
      %v269 = vld [vmem:[%s227 + $0xa8] sm:$0xff]
      %v270 = vld [vmem:[%s227 + $0xb0] sm:$0xff]
      %v271 = vld [vmem:[%s227 + $0xb8] sm:$0xff]
      %v272 = vld [vmem:[%s227 + $0xc0] sm:$0xff]
      %v273 = vld [vmem:[%s227 + $0xc8] sm:$0xff]
      %v274 = vld [vmem:[%s227 + $0xd0] sm:$0xff]
      %v275 = vld [vmem:[%s227 + $0xd8] sm:$0xff]
      %v276 = vld [vmem:[%s227 + $0xe0] sm:$0xff]
      %v277 = vld [vmem:[%s227 + $0xe8] sm:$0xff]
      %v278 = vld [vmem:[%s227 + $0xf0] sm:$0xff]
      %v279 = vld [vmem:[%s227 + $0xf8] sm:$0xff]
      %v280 = vld [vmem:[%s227 + $0x100] sm:$0xff]
      %v281 = vld [vmem:[%s227 + $0x108] sm:$0xff]
      %v282 = vld [vmem:[%s227 + $0x110] sm:$0xff]
      %v283 = vld [vmem:[%s227 + $0x118] sm:$0xff]
      %v284 = vld [vmem:[%s227 + $0x120] sm:$0xff]
      %v285 = vld [vmem:[%s227 + $0x128] sm:$0xff]
      %v286 = vld [vmem:[%s227 + $0x130] sm:$0xff]
      %v287 = vld [vmem:[%s227 + $0x138] sm:$0xff]
      %v288 = vld [vmem:[%s227 + $0x140] sm:$0xff]
      %v289 = vld [vmem:[%s227 + $0x148] sm:$0xff]
      %v290 = vld [vmem:[%s227 + $0x150] sm:$0xff]
      %v291 = vld [vmem:[%s227 + $0x158] sm:$0xff]
      %v292 = vld [vmem:[%s227 + $0x160] sm:$0xff]
      %v293 = vld [vmem:[%s227 + $0x168] sm:$0xff]
      %v294 = vld [vmem:[%s227 + $0x170] sm:$0xff]
      %v295 = vld [vmem:[%s227 + $0x178] sm:$0xff]
      %v296 = vld [vmem:[%s227 + $0x180] sm:$0xff]
      %v297 = vld [vmem:[%s227 + $0x188] sm:$0xff]
      %v298 = vld [vmem:[%s227 + $0x190] sm:$0xff]
      %v299 = vld [vmem:[%s227 + $0x198] sm:$0xff]
      %v300 = vld [vmem:[%s227 + $0x1a0] sm:$0xff]
      %v301 = vld [vmem:[%s227 + $0x1a8] sm:$0xff]
      %v302 = vld [vmem:[%s227 + $0x1b0] sm:$0xff]
      %v303 = vld [vmem:[%s227 + $0x1b8] sm:$0xff]
      %v304 = vld [vmem:[%s227 + $0x1c0] sm:$0xff]
      %v305 = vld [vmem:[%s227 + $0x1c8] sm:$0xff]
      %v306 = vld [vmem:[%s227 + $0x1d0] sm:$0xff]
      %v307 = vld [vmem:[%s227 + $0x1d8] sm:$0xff]
      %v308 = vld [vmem:[%s227 + $0x1e0] sm:$0xff]
      %v309 = vld [vmem:[%s227 + $0x1e8] sm:$0xff]
      %v310 = vld [vmem:[%s227 + $0x1f0] sm:$0xff]
      %v311 = vld [vmem:[%s227 + $0x1f8] sm:$0xff]
      %v312 = vld [vmem:[%s233] sm:$0xf]
      %v313 = vld [vmem:[%s233 + $0x4] sm:$0xf]
      %v314 = vld [vmem:[%s233 + $0x8] sm:$0xf]
      %v315 = vld [vmem:[%s233 + $0xc] sm:$0xf]
      %v316 = vld [vmem:[%s233 + $0x10] sm:$0xf]
      %v317 = vld [vmem:[%s233 + $0x14] sm:$0xf]
      %v318 = vld [vmem:[%s233 + $0x18] sm:$0xf]
      %v319 = vld [vmem:[%s233 + $0x1c] sm:$0xf]
      %v320 = vld [vmem:[%s233 + $0x20] sm:$0xf]
      %v321 = vld [vmem:[%s233 + $0x24] sm:$0xf]
      %v322 = vld [vmem:[%s233 + $0x28] sm:$0xf]
      %v323 = vld [vmem:[%s233 + $0x2c] sm:$0xf]
      %v324 = vld [vmem:[%s233 + $0x30] sm:$0xf]
      %v325 = vld [vmem:[%s233 + $0x34] sm:$0xf]
      %v326 = vld [vmem:[%s233 + $0x38] sm:$0xf]
      %v327 = vld [vmem:[%s233 + $0x3c] sm:$0xf]
      %v328 = vld [vmem:[%s233 + $0x40] sm:$0xf]
      %v329 = vld [vmem:[%s233 + $0x44] sm:$0xf]
      %v330 = vld [vmem:[%s233 + $0x48] sm:$0xf]
      %v331 = vld [vmem:[%s233 + $0x4c] sm:$0xf]
      %v332 = vld [vmem:[%s233 + $0x50] sm:$0xf]
      %v333 = vld [vmem:[%s233 + $0x54] sm:$0xf]
      %v334 = vld [vmem:[%s233 + $0x58] sm:$0xf]
      %v335 = vld [vmem:[%s233 + $0x5c] sm:$0xf]
      %v336 = vld [vmem:[%s233 + $0x60] sm:$0xf]
      %v337 = vld [vmem:[%s233 + $0x64] sm:$0xf]
      %v338 = vld [vmem:[%s233 + $0x68] sm:$0xf]
      %v339 = vld [vmem:[%s233 + $0x6c] sm:$0xf]
      %v340 = vld [vmem:[%s233 + $0x70] sm:$0xf]
      %v341 = vld [vmem:[%s233 + $0x74] sm:$0xf]
      %v342 = vld [vmem:[%s233 + $0x78] sm:$0xf]
      %v343 = vld [vmem:[%s233 + $0x7c] sm:$0xf]
      %v344 = vld [vmem:[%s236] sm:$0x1]
      %v346 = vlaneseq
      %v347 = vshrl.u32 %v346, 7
      %v348 = vsub.s32 0, %v347
      %v349 = vrot.slane %v344, %v348
      %v415 = vunpack.c.l.b16 %v248
      %v416 = vunpack.c.h.b16 %v248
      %v417 = vunpack.c.l.b16 %v249
      %v418 = vunpack.c.h.b16 %v249
      %v419 = vunpack.c.l.b16 %v250
      %v420 = vunpack.c.h.b16 %v250
      %v421 = vunpack.c.l.b16 %v251
      %v422 = vunpack.c.h.b16 %v251
      %v423 = vunpack.c.l.b16 %v252
      %v424 = vunpack.c.h.b16 %v252
      %v425 = vunpack.c.l.b16 %v253
      %v426 = vunpack.c.h.b16 %v253
      %v427 = vunpack.c.l.b16 %v254
      %v428 = vunpack.c.h.b16 %v254
      %v429 = vunpack.c.l.b16 %v255
      %v430 = vunpack.c.h.b16 %v255
      %v431 = vunpack.c.l.b16 %v256
      %v432 = vunpack.c.h.b16 %v256
      %v433 = vunpack.c.l.b16 %v257
      %v434 = vunpack.c.h.b16 %v257
      %v435 = vunpack.c.l.b16 %v258
      %v436 = vunpack.c.h.b16 %v258
      %v437 = vunpack.c.l.b16 %v259
      %v438 = vunpack.c.h.b16 %v259
      %v439 = vunpack.c.l.b16 %v260
      %v440 = vunpack.c.h.b16 %v260
      %v441 = vunpack.c.l.b16 %v261
      %v442 = vunpack.c.h.b16 %v261
      %v443 = vunpack.c.l.b16 %v262
      %v444 = vunpack.c.h.b16 %v262
      %v445 = vunpack.c.l.b16 %v263
      %v446 = vunpack.c.h.b16 %v263
      %v447 = vunpack.c.l.b16 %v264
      %v448 = vunpack.c.h.b16 %v264
      %v449 = vunpack.c.l.b16 %v265
      %v450 = vunpack.c.h.b16 %v265
      %v451 = vunpack.c.l.b16 %v266
      %v452 = vunpack.c.h.b16 %v266
      %v453 = vunpack.c.l.b16 %v267
      %v454 = vunpack.c.h.b16 %v267
      %v455 = vunpack.c.l.b16 %v268
      %v456 = vunpack.c.h.b16 %v268
      %v457 = vunpack.c.l.b16 %v269
      %v458 = vunpack.c.h.b16 %v269
      %v459 = vunpack.c.l.b16 %v270
      %v460 = vunpack.c.h.b16 %v270
      %v461 = vunpack.c.l.b16 %v271
      %v462 = vunpack.c.h.b16 %v271
      %v463 = vunpack.c.l.b16 %v272
      %v464 = vunpack.c.h.b16 %v272
      %v465 = vunpack.c.l.b16 %v273
      %v466 = vunpack.c.h.b16 %v273
      %v467 = vunpack.c.l.b16 %v274
      %v468 = vunpack.c.h.b16 %v274
      %v469 = vunpack.c.l.b16 %v275
      %v470 = vunpack.c.h.b16 %v275
      %v471 = vunpack.c.l.b16 %v276
      %v472 = vunpack.c.h.b16 %v276
      %v473 = vunpack.c.l.b16 %v277
      %v474 = vunpack.c.h.b16 %v277
      %v475 = vunpack.c.l.b16 %v278
      %v476 = vunpack.c.h.b16 %v278
      %v477 = vunpack.c.l.b16 %v279
      %v478 = vunpack.c.h.b16 %v279
      %v479 = vunpack.c.l.b16 %v280
      %v480 = vunpack.c.h.b16 %v280
      %v481 = vunpack.c.l.b16 %v281
      %v482 = vunpack.c.h.b16 %v281
      %v483 = vunpack.c.l.b16 %v282
      %v484 = vunpack.c.h.b16 %v282
      %v485 = vunpack.c.l.b16 %v283
      %v486 = vunpack.c.h.b16 %v283
      %v487 = vunpack.c.l.b16 %v284
      %v488 = vunpack.c.h.b16 %v284
      %v489 = vunpack.c.l.b16 %v285
      %v490 = vunpack.c.h.b16 %v285
      %v491 = vunpack.c.l.b16 %v286
      %v492 = vunpack.c.h.b16 %v286
      %v493 = vunpack.c.l.b16 %v287
      %v494 = vunpack.c.h.b16 %v287
      %v495 = vunpack.c.l.b16 %v288
      %v496 = vunpack.c.h.b16 %v288
      %v497 = vunpack.c.l.b16 %v289
      %v498 = vunpack.c.h.b16 %v289
      %v499 = vunpack.c.l.b16 %v290
      %v500 = vunpack.c.h.b16 %v290
      %v501 = vunpack.c.l.b16 %v291
      %v502 = vunpack.c.h.b16 %v291
      %v503 = vunpack.c.l.b16 %v292
      %v504 = vunpack.c.h.b16 %v292
      %v505 = vunpack.c.l.b16 %v293
      %v506 = vunpack.c.h.b16 %v293
      %v507 = vunpack.c.l.b16 %v294
      %v508 = vunpack.c.h.b16 %v294
      %v509 = vunpack.c.l.b16 %v295
      %v510 = vunpack.c.h.b16 %v295
      %v511 = vunpack.c.l.b16 %v296
      %v512 = vunpack.c.h.b16 %v296
      %v513 = vunpack.c.l.b16 %v297
      %v514 = vunpack.c.h.b16 %v297
      %v515 = vunpack.c.l.b16 %v298
      %v516 = vunpack.c.h.b16 %v298
      %v517 = vunpack.c.l.b16 %v299
      %v518 = vunpack.c.h.b16 %v299
      %v519 = vunpack.c.l.b16 %v300
      %v520 = vunpack.c.h.b16 %v300
      %v521 = vunpack.c.l.b16 %v301
      %v522 = vunpack.c.h.b16 %v301
      %v523 = vunpack.c.l.b16 %v302
      %v524 = vunpack.c.h.b16 %v302
      %v525 = vunpack.c.l.b16 %v303
      %v526 = vunpack.c.h.b16 %v303
      %v527 = vunpack.c.l.b16 %v304
      %v528 = vunpack.c.h.b16 %v304
      %v529 = vunpack.c.l.b16 %v305
      %v530 = vunpack.c.h.b16 %v305
      %v531 = vunpack.c.l.b16 %v306
      %v532 = vunpack.c.h.b16 %v306
      %v533 = vunpack.c.l.b16 %v307
      %v534 = vunpack.c.h.b16 %v307
      %v535 = vunpack.c.l.b16 %v308
      %v536 = vunpack.c.h.b16 %v308
      %v537 = vunpack.c.l.b16 %v309
      %v538 = vunpack.c.h.b16 %v309
      %v539 = vunpack.c.l.b16 %v310
      %v540 = vunpack.c.h.b16 %v310
      %v541 = vunpack.c.l.b16 %v311
      %v542 = vunpack.c.h.b16 %v311
      %v543 = vpack.c.b16 %v417, %v415
      %v544 = vpack.c.b16 %v418, %v416
      %v545 = vpack.c.b16 %v421, %v419
      %v546 = vpack.c.b16 %v422, %v420
      %v547 = vpack.c.b16 %v425, %v423
      %v548 = vpack.c.b16 %v426, %v424
      %v549 = vpack.c.b16 %v429, %v427
      %v550 = vpack.c.b16 %v430, %v428
      %v551 = vpack.c.b16 %v433, %v431
      %v552 = vpack.c.b16 %v434, %v432
      %v553 = vpack.c.b16 %v437, %v435
      %v554 = vpack.c.b16 %v438, %v436
      %v555 = vpack.c.b16 %v441, %v439
      %v556 = vpack.c.b16 %v442, %v440
      %v557 = vpack.c.b16 %v445, %v443
      %v558 = vpack.c.b16 %v446, %v444
      %v559 = vpack.c.b16 %v449, %v447
      %v560 = vpack.c.b16 %v450, %v448
      %v561 = vpack.c.b16 %v453, %v451
      %v562 = vpack.c.b16 %v454, %v452
      %v563 = vpack.c.b16 %v457, %v455
      %v564 = vpack.c.b16 %v458, %v456
      %v565 = vpack.c.b16 %v461, %v459
      %v566 = vpack.c.b16 %v462, %v460
      %v567 = vpack.c.b16 %v465, %v463
      %v568 = vpack.c.b16 %v466, %v464
      %v569 = vpack.c.b16 %v469, %v467
      %v570 = vpack.c.b16 %v470, %v468
      %v571 = vpack.c.b16 %v473, %v471
      %v572 = vpack.c.b16 %v474, %v472
      %v573 = vpack.c.b16 %v477, %v475
      %v574 = vpack.c.b16 %v478, %v476
      %v575 = vpack.c.b16 %v481, %v479
      %v576 = vpack.c.b16 %v482, %v480
      %v577 = vpack.c.b16 %v485, %v483
      %v578 = vpack.c.b16 %v486, %v484
      %v579 = vpack.c.b16 %v489, %v487
      %v580 = vpack.c.b16 %v490, %v488
      %v581 = vpack.c.b16 %v493, %v491
      %v582 = vpack.c.b16 %v494, %v492
      %v583 = vpack.c.b16 %v497, %v495
      %v584 = vpack.c.b16 %v498, %v496
      %v585 = vpack.c.b16 %v501, %v499
      %v586 = vpack.c.b16 %v502, %v500
      %v587 = vpack.c.b16 %v505, %v503
      %v588 = vpack.c.b16 %v506, %v504
      %v589 = vpack.c.b16 %v509, %v507
      %v590 = vpack.c.b16 %v510, %v508
      %v591 = vpack.c.b16 %v513, %v511
      %v592 = vpack.c.b16 %v514, %v512
      %v593 = vpack.c.b16 %v517, %v515
      %v594 = vpack.c.b16 %v518, %v516
      %v595 = vpack.c.b16 %v521, %v519
      %v596 = vpack.c.b16 %v522, %v520
      %v597 = vpack.c.b16 %v525, %v523
      %v598 = vpack.c.b16 %v526, %v524
      %v599 = vpack.c.b16 %v529, %v527
      %v600 = vpack.c.b16 %v530, %v528
      %v601 = vpack.c.b16 %v533, %v531
      %v602 = vpack.c.b16 %v534, %v532
      %v603 = vpack.c.b16 %v537, %v535
      %v604 = vpack.c.b16 %v538, %v536
      %v605 = vpack.c.b16 %v541, %v539
      %v606 = vpack.c.b16 %v542, %v540
      %v703 = vunpack.c.l.b16 %v312
      %v704 = vunpack.c.l.b16 %v313
      %v705 = vunpack.c.l.b16 %v314
      %v706 = vunpack.c.l.b16 %v315
      %v707 = vunpack.c.l.b16 %v316
      %v708 = vunpack.c.l.b16 %v317
      %v709 = vunpack.c.l.b16 %v318
      %v710 = vunpack.c.l.b16 %v319
      %v711 = vunpack.c.l.b16 %v320
      %v712 = vunpack.c.l.b16 %v321
      %v713 = vunpack.c.l.b16 %v322
      %v714 = vunpack.c.l.b16 %v323
      %v715 = vunpack.c.l.b16 %v324
      %v716 = vunpack.c.l.b16 %v325
      %v717 = vunpack.c.l.b16 %v326
      %v718 = vunpack.c.l.b16 %v327
      %v719 = vunpack.c.l.b16 %v328
      %v720 = vunpack.c.l.b16 %v329
      %v721 = vunpack.c.l.b16 %v330
      %v722 = vunpack.c.l.b16 %v331
      %v723 = vunpack.c.l.b16 %v332
      %v724 = vunpack.c.l.b16 %v333
      %v725 = vunpack.c.l.b16 %v334
      %v726 = vunpack.c.l.b16 %v335
      %v727 = vunpack.c.l.b16 %v336
      %v728 = vunpack.c.l.b16 %v337
      %v729 = vunpack.c.l.b16 %v338
      %v730 = vunpack.c.l.b16 %v339
      %v731 = vunpack.c.l.b16 %v340
      %v732 = vunpack.c.l.b16 %v341
      %v733 = vunpack.c.l.b16 %v342
      %v734 = vunpack.c.l.b16 %v343
      %v735 = vpack.c.b16 %v704, %v703
      %v736 = vpack.c.b16 %v706, %v705
      %v737 = vpack.c.b16 %v708, %v707
      %v738 = vpack.c.b16 %v710, %v709
      %v739 = vpack.c.b16 %v712, %v711
      %v740 = vpack.c.b16 %v714, %v713
      %v741 = vpack.c.b16 %v716, %v715
      %v742 = vpack.c.b16 %v718, %v717
      %v743 = vpack.c.b16 %v720, %v719
      %v744 = vpack.c.b16 %v722, %v721
      %v745 = vpack.c.b16 %v724, %v723
      %v746 = vpack.c.b16 %v726, %v725
      %v747 = vpack.c.b16 %v728, %v727
      %v748 = vpack.c.b16 %v730, %v729
      %v749 = vpack.c.b16 %v732, %v731
      %v750 = vpack.c.b16 %v734, %v733
      %767 = vmatprep.subr.bf16.mxu0 0
      %768 = vmatpush1.bf16.msra.mxu0 %v735
      %769 = vmatprep.subr.bf16.mxu0 0
      %770 = vmatpush1.bf16.msra.mxu0 %v736
      %771 = vmatprep.subr.bf16.mxu0 0
      %772 = vmatpush1.bf16.msra.mxu0 %v737
      %773 = vmatprep.subr.bf16.mxu0 0
      %774 = vmatpush1.bf16.msra.mxu0 %v738
      %775 = vmatprep.subr.bf16.mxu0 0
      %776 = vmatpush1.bf16.msra.mxu0 %v739
      %777 = vmatprep.subr.bf16.mxu0 0
      %778 = vmatpush1.bf16.msra.mxu0 %v740
      %779 = vmatprep.subr.bf16.mxu0 0
      %780 = vmatpush1.bf16.msra.mxu0 %v741
      %781 = vmatprep.subr.bf16.mxu0 0
      %782 = vmatpush1.bf16.msra.mxu0 %v742
      %783 = vmatprep.subr.bf16.mxu0 0
      %784 = vmatpush1.bf16.msra.mxu0 %v743
      %785 = vmatprep.subr.bf16.mxu0 0
      %786 = vmatpush1.bf16.msra.mxu0 %v744
      %787 = vmatprep.subr.bf16.mxu0 0
      %788 = vmatpush1.bf16.msra.mxu0 %v745
      %789 = vmatprep.subr.bf16.mxu0 0
      %790 = vmatpush1.bf16.msra.mxu0 %v746
      %791 = vmatprep.subr.bf16.mxu0 0
      %792 = vmatpush1.bf16.msra.mxu0 %v747
      %793 = vmatprep.subr.bf16.mxu0 0
      %794 = vmatpush1.bf16.msra.mxu0 %v748
      %795 = vmatprep.subr.bf16.mxu0 0
      %796 = vmatpush1.bf16.msra.mxu0 %v749
      %797 = vmatprep.subr.bf16.mxu0 0
      %798 = vmatpush1.bf16.msra.mxu0 %v750
      %799 = vmatprep.mubr.bf16.mxu0 %v544
      %800 = vmatmul.mubr.bf16.gmra.mrb[0].mxu0 %v543
      %v801 = vpop.f32.mrb[0].mxu0
      %v802 = vadd.f32 %v349, %v801
      %v803 = vpop.f32.mrb[0].mxu0
      %v804 = vpop.f32.mrb[0].mxu0
      %v805 = vadd.f32 %v349, %v804
      %v806 = vpop.f32.mrb[0].mxu0
      %807 = vmatprep.mubr.bf16.mxu0 %v546
      %808 = vmatmul.mubr.bf16.gmra.mrb[0].mxu0 %v545
      %v809 = vpop.f32.mrb[0].mxu0
      %v810 = vadd.f32 %v349, %v809
      %v811 = vpop.f32.mrb[0].mxu0
      %v812 = vpop.f32.mrb[0].mxu0
      %v813 = vadd.f32 %v349, %v812
      %v814 = vpop.f32.mrb[0].mxu0
      %815 = vmatprep.mubr.bf16.mxu0 %v548
      %816 = vmatmul.mubr.bf16.gmra.mrb[0].mxu0 %v547
      %v817 = vpop.f32.mrb[0].mxu0
      %v818 = vadd.f32 %v349, %v817
      %v819 = vpop.f32.mrb[0].mxu0
      %v820 = vpop.f32.mrb[0].mxu0
      %v821 = vadd.f32 %v349, %v820
      %v822 = vpop.f32.mrb[0].mxu0
      %823 = vmatprep.mubr.bf16.mxu0 %v550
      %824 = vmatmul.mubr.bf16.gmra.mrb[0].mxu0 %v549
      %v825 = vpop.f32.mrb[0].mxu0
      %v826 = vadd.f32 %v349, %v825
      %v827 = vpop.f32.mrb[0].mxu0
      %v828 = vpop.f32.mrb[0].mxu0
      %v829 = vadd.f32 %v349, %v828
      %v830 = vpop.f32.mrb[0].mxu0
      %831 = vmatprep.mubr.bf16.mxu0 %v552
      %832 = vmatmul.mubr.bf16.gmra.mrb[0].mxu0 %v551
      %v833 = vpop.f32.mrb[0].mxu0
      %v834 = vadd.f32 %v349, %v833
      %v835 = vpop.f32.mrb[0].mxu0
      %v836 = vpop.f32.mrb[0].mxu0
      %v837 = vadd.f32 %v349, %v836
      %v838 = vpop.f32.mrb[0].mxu0
      %839 = vmatprep.mubr.bf16.mxu0 %v554
      %840 = vmatmul.mubr.bf16.gmra.mrb[0].mxu0 %v553
      %v841 = vpop.f32.mrb[0].mxu0
      %v842 = vadd.f32 %v349, %v841
      %v843 = vpop.f32.mrb[0].mxu0
      %v844 = vpop.f32.mrb[0].mxu0
      %v845 = vadd.f32 %v349, %v844
      %v846 = vpop.f32.mrb[0].mxu0
      %847 = vmatprep.mubr.bf16.mxu0 %v556
      %848 = vmatmul.mubr.bf16.gmra.mrb[0].mxu0 %v555
      %v849 = vpop.f32.mrb[0].mxu0
      %v850 = vadd.f32 %v349, %v849
      %v851 = vpop.f32.mrb[0].mxu0
      %v852 = vpop.f32.mrb[0].mxu0
      %v853 = vadd.f32 %v349, %v852
      %v854 = vpop.f32.mrb[0].mxu0
      %855 = vmatprep.mubr.bf16.mxu0 %v558
      %856 = vmatmul.mubr.bf16.gmra.mrb[0].mxu0 %v557
      %v857 = vpop.f32.mrb[0].mxu0
      %v858 = vadd.f32 %v349, %v857
      %v859 = vpop.f32.mrb[0].mxu0
      %v860 = vpop.f32.mrb[0].mxu0
      %v861 = vadd.f32 %v349, %v860
      %v862 = vpop.f32.mrb[0].mxu0
      %863 = vmatprep.mubr.bf16.mxu0 %v560
      %864 = vmatmul.mubr.bf16.gmra.mrb[0].mxu0 %v559
      %v865 = vpop.f32.mrb[0].mxu0
      %v866 = vadd.f32 %v349, %v865
      %v867 = vpop.f32.mrb[0].mxu0
      %v868 = vpop.f32.mrb[0].mxu0
      %v869 = vadd.f32 %v349, %v868
      %v870 = vpop.f32.mrb[0].mxu0
      %871 = vmatprep.mubr.bf16.mxu0 %v562
      %872 = vmatmul.mubr.bf16.gmra.mrb[0].mxu0 %v561
      %v873 = vpop.f32.mrb[0].mxu0
      %v874 = vadd.f32 %v349, %v873
      %v875 = vpop.f32.mrb[0].mxu0
      %v876 = vpop.f32.mrb[0].mxu0
      %v877 = vadd.f32 %v349, %v876
      %v878 = vpop.f32.mrb[0].mxu0
      %879 = vmatprep.mubr.bf16.mxu0 %v564
      %880 = vmatmul.mubr.bf16.gmra.mrb[0].mxu0 %v563
      %v881 = vpop.f32.mrb[0].mxu0
      %v882 = vadd.f32 %v349, %v881
      %v883 = vpop.f32.mrb[0].mxu0
      %v884 = vpop.f32.mrb[0].mxu0
      %v885 = vadd.f32 %v349, %v884
      %v886 = vpop.f32.mrb[0].mxu0
      %887 = vmatprep.mubr.bf16.mxu0 %v566
      %888 = vmatmul.mubr.bf16.gmra.mrb[0].mxu0 %v565
      %v889 = vpop.f32.mrb[0].mxu0
      %v890 = vadd.f32 %v349, %v889
      %v891 = vpop.f32.mrb[0].mxu0
      %v892 = vpop.f32.mrb[0].mxu0
      %v893 = vadd.f32 %v349, %v892
      %v894 = vpop.f32.mrb[0].mxu0
      %895 = vmatprep.mubr.bf16.mxu0 %v568
      %896 = vmatmul.mubr.bf16.gmra.mrb[0].mxu0 %v567
      %v897 = vpop.f32.mrb[0].mxu0
      %v898 = vadd.f32 %v349, %v897
      %v899 = vpop.f32.mrb[0].mxu0
      %v900 = vpop.f32.mrb[0].mxu0
      %v901 = vadd.f32 %v349, %v900
      %v902 = vpop.f32.mrb[0].mxu0
      %903 = vmatprep.mubr.bf16.mxu0 %v570
      %904 = vmatmul.mubr.bf16.gmra.mrb[0].mxu0 %v569
      %v905 = vpop.f32.mrb[0].mxu0
      %v906 = vadd.f32 %v349, %v905
      %v907 = vpop.f32.mrb[0].mxu0
      %v908 = vpop.f32.mrb[0].mxu0
      %v909 = vadd.f32 %v349, %v908
      %v910 = vpop.f32.mrb[0].mxu0
      %911 = vmatprep.mubr.bf16.mxu0 %v572
      %912 = vmatmul.mubr.bf16.gmra.mrb[0].mxu0 %v571
      %v913 = vpop.f32.mrb[0].mxu0
      %v914 = vadd.f32 %v349, %v913
      %v915 = vpop.f32.mrb[0].mxu0
      %v916 = vpop.f32.mrb[0].mxu0
      %v917 = vadd.f32 %v349, %v916
      %v918 = vpop.f32.mrb[0].mxu0
      %919 = vmatprep.mubr.bf16.mxu0 %v574
      %920 = vmatmul.mubr.bf16.gmra.mrb[0].mxu0 %v573
      %v921 = vpop.f32.mrb[0].mxu0
      %v922 = vadd.f32 %v349, %v921
      %v923 = vpop.f32.mrb[0].mxu0
      %v924 = vpop.f32.mrb[0].mxu0
      %v925 = vadd.f32 %v349, %v924
      %v926 = vpop.f32.mrb[0].mxu0
      %927 = vmatprep.mubr.bf16.mxu0 %v576
      %928 = vmatmul.mubr.bf16.gmra.mrb[0].mxu0 %v575
      %v929 = vpop.f32.mrb[0].mxu0
      %v930 = vadd.f32 %v349, %v929
      %v931 = vpop.f32.mrb[0].mxu0
      %v932 = vpop.f32.mrb[0].mxu0
      %v933 = vadd.f32 %v349, %v932
      %v934 = vpop.f32.mrb[0].mxu0
      %935 = vmatprep.mubr.bf16.mxu0 %v578
      %936 = vmatmul.mubr.bf16.gmra.mrb[0].mxu0 %v577
      %v937 = vpop.f32.mrb[0].mxu0
      %v938 = vadd.f32 %v349, %v937
      %v939 = vpop.f32.mrb[0].mxu0
      %v940 = vpop.f32.mrb[0].mxu0
      %v941 = vadd.f32 %v349, %v940
      %v942 = vpop.f32.mrb[0].mxu0
      %943 = vmatprep.mubr.bf16.mxu0 %v580
      %944 = vmatmul.mubr.bf16.gmra.mrb[0].mxu0 %v579
      %v945 = vpop.f32.mrb[0].mxu0
      %v946 = vadd.f32 %v349, %v945
      %v947 = vpop.f32.mrb[0].mxu0
      %v948 = vpop.f32.mrb[0].mxu0
      %v949 = vadd.f32 %v349, %v948
      %v950 = vpop.f32.mrb[0].mxu0
      %951 = vmatprep.mubr.bf16.mxu0 %v582
      %952 = vmatmul.mubr.bf16.gmra.mrb[0].mxu0 %v581
      %v953 = vpop.f32.mrb[0].mxu0
      %v954 = vadd.f32 %v349, %v953
      %v955 = vpop.f32.mrb[0].mxu0
      %v956 = vpop.f32.mrb[0].mxu0
      %v957 = vadd.f32 %v349, %v956
      %v958 = vpop.f32.mrb[0].mxu0
      %959 = vmatprep.mubr.bf16.mxu0 %v584
      %960 = vmatmul.mubr.bf16.gmra.mrb[0].mxu0 %v583
      %v961 = vpop.f32.mrb[0].mxu0
      %v962 = vadd.f32 %v349, %v961
      %v963 = vpop.f32.mrb[0].mxu0
      %v964 = vpop.f32.mrb[0].mxu0
      %v965 = vadd.f32 %v349, %v964
      %v966 = vpop.f32.mrb[0].mxu0
      %967 = vmatprep.mubr.bf16.mxu0 %v586
      %968 = vmatmul.mubr.bf16.gmra.mrb[0].mxu0 %v585
      %v969 = vpop.f32.mrb[0].mxu0
      %v970 = vadd.f32 %v349, %v969
      %v971 = vpop.f32.mrb[0].mxu0
      %v972 = vpop.f32.mrb[0].mxu0
      %v973 = vadd.f32 %v349, %v972
      %v974 = vpop.f32.mrb[0].mxu0
      %975 = vmatprep.mubr.bf16.mxu0 %v588
      %976 = vmatmul.mubr.bf16.gmra.mrb[0].mxu0 %v587
      %v977 = vpop.f32.mrb[0].mxu0
      %v978 = vadd.f32 %v349, %v977
      %v979 = vpop.f32.mrb[0].mxu0
      %v980 = vpop.f32.mrb[0].mxu0
      %v981 = vadd.f32 %v349, %v980
      %v982 = vpop.f32.mrb[0].mxu0
      %983 = vmatprep.mubr.bf16.mxu0 %v590
      %984 = vmatmul.mubr.bf16.gmra.mrb[0].mxu0 %v589
      %v985 = vpop.f32.mrb[0].mxu0
      %v986 = vadd.f32 %v349, %v985
      %v987 = vpop.f32.mrb[0].mxu0
      %v988 = vpop.f32.mrb[0].mxu0
      %v989 = vadd.f32 %v349, %v988
      %v990 = vpop.f32.mrb[0].mxu0
      %991 = vmatprep.mubr.bf16.mxu0 %v592
      %992 = vmatmul.mubr.bf16.gmra.mrb[0].mxu0 %v591
      %v993 = vpop.f32.mrb[0].mxu0
      %v994 = vadd.f32 %v349, %v993
      %v995 = vpop.f32.mrb[0].mxu0
      %v996 = vpop.f32.mrb[0].mxu0
      %v997 = vadd.f32 %v349, %v996
      %v998 = vpop.f32.mrb[0].mxu0
      %999 = vmatprep.mubr.bf16.mxu0 %v594
      %1000 = vmatmul.mubr.bf16.gmra.mrb[0].mxu0 %v593
      %v1001 = vpop.f32.mrb[0].mxu0
      %v1002 = vadd.f32 %v349, %v1001
      %v1003 = vpop.f32.mrb[0].mxu0
      %v1004 = vpop.f32.mrb[0].mxu0
      %v1005 = vadd.f32 %v349, %v1004
      %v1006 = vpop.f32.mrb[0].mxu0
      %1007 = vmatprep.mubr.bf16.mxu0 %v596
      %1008 = vmatmul.mubr.bf16.gmra.mrb[0].mxu0 %v595
      %v1009 = vpop.f32.mrb[0].mxu0
      %v1010 = vadd.f32 %v349, %v1009
      %v1011 = vpop.f32.mrb[0].mxu0
      %v1012 = vpop.f32.mrb[0].mxu0
      %v1013 = vadd.f32 %v349, %v1012
      %v1014 = vpop.f32.mrb[0].mxu0
      %1015 = vmatprep.mubr.bf16.mxu0 %v598
      %1016 = vmatmul.mubr.bf16.gmra.mrb[0].mxu0 %v597
      %v1017 = vpop.f32.mrb[0].mxu0
      %v1018 = vadd.f32 %v349, %v1017
      %v1019 = vpop.f32.mrb[0].mxu0
      %v1020 = vpop.f32.mrb[0].mxu0
      %v1021 = vadd.f32 %v349, %v1020
      %v1022 = vpop.f32.mrb[0].mxu0
      %1023 = vmatprep.mubr.bf16.mxu0 %v600
      %1024 = vmatmul.mubr.bf16.gmra.mrb[0].mxu0 %v599
      %v1025 = vpop.f32.mrb[0].mxu0
      %v1026 = vadd.f32 %v349, %v1025
      %v1027 = vpop.f32.mrb[0].mxu0
      %v1028 = vpop.f32.mrb[0].mxu0
      %v1029 = vadd.f32 %v349, %v1028
      %v1030 = vpop.f32.mrb[0].mxu0
      %1031 = vmatprep.mubr.bf16.mxu0 %v602
      %1032 = vmatmul.mubr.bf16.gmra.mrb[0].mxu0 %v601
      %v1033 = vpop.f32.mrb[0].mxu0
      %v1034 = vadd.f32 %v349, %v1033
      %v1035 = vpop.f32.mrb[0].mxu0
      %v1036 = vpop.f32.mrb[0].mxu0
      %v1037 = vadd.f32 %v349, %v1036
      %v1038 = vpop.f32.mrb[0].mxu0
      %1039 = vmatprep.mubr.bf16.mxu0 %v604
      %1040 = vmatmul.mubr.bf16.gmra.mrb[0].mxu0 %v603
      %v1041 = vpop.f32.mrb[0].mxu0
      %v1042 = vadd.f32 %v349, %v1041
      %v1043 = vpop.f32.mrb[0].mxu0
      %v1044 = vpop.f32.mrb[0].mxu0
      %v1045 = vadd.f32 %v349, %v1044
      %v1046 = vpop.f32.mrb[0].mxu0
      %1047 = vmatprep.mubr.bf16.mxu0 %v606
      %1048 = vmatmul.mubr.bf16.gmra.mrb[0].mxu0 %v605
      %v1049 = vpop.f32.mrb[0].mxu0
      %v1050 = vadd.f32 %v349, %v1049
      %v1051 = vpop.f32.mrb[0].mxu0
      %v1052 = vpop.f32.mrb[0].mxu0
      %v1053 = vadd.f32 %v349, %v1052
      %v1054 = vpop.f32.mrb[0].mxu0
      %1055 = vdwg.mxu0
      %1056 = vst [vmem:[%s245] sm:$0xff] %v802
      %1057 = vst [vmem:[%s245 + $0x8] sm:$0xff] %v805
      %1058 = vst [vmem:[%s245 + $0x10] sm:$0xff] %v810
      %1059 = vst [vmem:[%s245 + $0x18] sm:$0xff] %v813
      %1060 = vst [vmem:[%s245 + $0x20] sm:$0xff] %v818
      %1061 = vst [vmem:[%s245 + $0x28] sm:$0xff] %v821
      %1062 = vst [vmem:[%s245 + $0x30] sm:$0xff] %v826
      %1063 = vst [vmem:[%s245 + $0x38] sm:$0xff] %v829
      %1064 = vst [vmem:[%s245 + $0x40] sm:$0xff] %v834
      %1065 = vst [vmem:[%s245 + $0x48] sm:$0xff] %v837
      %1066 = vst [vmem:[%s245 + $0x50] sm:$0xff] %v842
      %1067 = vst [vmem:[%s245 + $0x58] sm:$0xff] %v845
      %1068 = vst [vmem:[%s245 + $0x60] sm:$0xff] %v850
      %1069 = vst [vmem:[%s245 + $0x68] sm:$0xff] %v853
      %1070 = vst [vmem:[%s245 + $0x70] sm:$0xff] %v858
      %1071 = vst [vmem:[%s245 + $0x78] sm:$0xff] %v861
      %1072 = vst [vmem:[%s245 + $0x80] sm:$0xff] %v866
      %1073 = vst [vmem:[%s245 + $0x88] sm:$0xff] %v869
      %1074 = vst [vmem:[%s245 + $0x90] sm:$0xff] %v874
      %1075 = vst [vmem:[%s245 + $0x98] sm:$0xff] %v877
      %1076 = vst [vmem:[%s245 + $0xa0] sm:$0xff] %v882
      %1077 = vst [vmem:[%s245 + $0xa8] sm:$0xff] %v885
      %1078 = vst [vmem:[%s245 + $0xb0] sm:$0xff] %v890
      %1079 = vst [vmem:[%s245 + $0xb8] sm:$0xff] %v893
      %1080 = vst [vmem:[%s245 + $0xc0] sm:$0xff] %v898
      %1081 = vst [vmem:[%s245 + $0xc8] sm:$0xff] %v901
      %1082 = vst [vmem:[%s245 + $0xd0] sm:$0xff] %v906
      %1083 = vst [vmem:[%s245 + $0xd8] sm:$0xff] %v909
      %1084 = vst [vmem:[%s245 + $0xe0] sm:$0xff] %v914
      %1085 = vst [vmem:[%s245 + $0xe8] sm:$0xff] %v917
      %1086 = vst [vmem:[%s245 + $0xf0] sm:$0xff] %v922
      %1087 = vst [vmem:[%s245 + $0xf8] sm:$0xff] %v925
      %1088 = vst [vmem:[%s245 + $0x100] sm:$0xff] %v930
      %1089 = vst [vmem:[%s245 + $0x108] sm:$0xff] %v933
      %1090 = vst [vmem:[%s245 + $0x110] sm:$0xff] %v938
      %1091 = vst [vmem:[%s245 + $0x118] sm:$0xff] %v941
      %1092 = vst [vmem:[%s245 + $0x120] sm:$0xff] %v946
      %1093 = vst [vmem:[%s245 + $0x128] sm:$0xff] %v949
      %1094 = vst [vmem:[%s245 + $0x130] sm:$0xff] %v954
      %1095 = vst [vmem:[%s245 + $0x138] sm:$0xff] %v957
      %1096 = vst [vmem:[%s245 + $0x140] sm:$0xff] %v962
      %1097 = vst [vmem:[%s245 + $0x148] sm:$0xff] %v965
      %1098 = vst [vmem:[%s245 + $0x150] sm:$0xff] %v970
      %1099 = vst [vmem:[%s245 + $0x158] sm:$0xff] %v973
      %1100 = vst [vmem:[%s245 + $0x160] sm:$0xff] %v978
      %1101 = vst [vmem:[%s245 + $0x168] sm:$0xff] %v981
      %1102 = vst [vmem:[%s245 + $0x170] sm:$0xff] %v986
      %1103 = vst [vmem:[%s245 + $0x178] sm:$0xff] %v989
      %1104 = vst [vmem:[%s245 + $0x180] sm:$0xff] %v994
      %1105 = vst [vmem:[%s245 + $0x188] sm:$0xff] %v997
      %1106 = vst [vmem:[%s245 + $0x190] sm:$0xff] %v1002
      %1107 = vst [vmem:[%s245 + $0x198] sm:$0xff] %v1005
      %1108 = vst [vmem:[%s245 + $0x1a0] sm:$0xff] %v1010
      %1109 = vst [vmem:[%s245 + $0x1a8] sm:$0xff] %v1013
      %1110 = vst [vmem:[%s245 + $0x1b0] sm:$0xff] %v1018
      %1111 = vst [vmem:[%s245 + $0x1b8] sm:$0xff] %v1021
      %1112 = vst [vmem:[%s245 + $0x1c0] sm:$0xff] %v1026
      %1113 = vst [vmem:[%s245 + $0x1c8] sm:$0xff] %v1029
      %1114 = vst [vmem:[%s245 + $0x1d0] sm:$0xff] %v1034
      %1115 = vst [vmem:[%s245 + $0x1d8] sm:$0xff] %v1037
      %1116 = vst [vmem:[%s245 + $0x1e0] sm:$0xff] %v1042
      %1117 = vst [vmem:[%s245 + $0x1e8] sm:$0xff] %v1045
      %1118 = vst [vmem:[%s245 + $0x1f0] sm:$0xff] %v1050
      %1119 = vst [vmem:[%s245 + $0x1f8] sm:$0xff] %v1053
      %s1120 = smul.u32 64, %s19
      %p1121 = scmp.lt.s32.totalorder %s18, 3
      %s1122 = scalar_select %p1121, %s18, 3
      %p1123 = scmp.lt.s32.totalorder %s1120, 63
      %s1124 = scalar_select %p1123, %s1120, 63
      %s1125 = smul.addr %s1122, 64
      %s1126 = sadd.s32 %s1124, %s1125
      %s1127 = smul.addr %s1126, 8
      %s1128 = scalar_lea.vmem %s3, %s1127
      // Predicated region
      $region33: #{srcnn_forward.5} parent=31 // pred_check
        %p1129 = pneg %p126
      $region34: #{srcnn_forward.5} parent=31 // pred_check_branch
        %1131 = sbr.rel (%p1129) target = $region36
      $region35: #{srcnn_forward.5} parent=31 // pred_region
        %s1132 = smul.u32 64, %s19
      $region36: #{srcnn_forward.5} parent=31 // pred_fallthru
        _
    $region32: #{srcnn_forward.5} parent=5 // pred_fallthru
      _
    %p1133 = scmp.le.s32.totalorder 2, %s9
    // Predicated region
    $region37: #{srcnn_forward.5} parent=5 // pred_check
      %p1134 = pneg %p1133
    $region38: #{srcnn_forward.5} parent=5 // pred_check_branch
      %1136 = sbr.rel (%p1134) target = $region40
    $region39: #{srcnn_forward.5} parent=5 // pred_region
      %s1137 = ssub.s32 %s9, 2
      // Predicated region
      $region41: #{srcnn_forward.5} parent=39 // pred_check
        %p1138 = pneg %p132
      $region42: #{srcnn_forward.5} parent=39 // pred_check_branch
        %1140 = sbr.rel (%p1138) target = $region44
      $region43: #{srcnn_forward.5} parent=39 // pred_region
        %s1141 = smul.u32 64, %s21
        %p1142 = scmp.lt.s32.totalorder %s20, 3
        %s1143 = scalar_select %p1142, %s20, 3
        %p1144 = scmp.lt.s32.totalorder %s1141, 63
        %s1145 = scalar_select %p1144, %s1141, 63
        %s1146 = smul.addr %s1143, 64
        %s1147 = sadd.s32 %s1145, %s1146
        %s1148 = smul.addr %s1147, 8
        %s1149 = scalar_lea.vmem %s3, %s1148
      $region44: #{srcnn_forward.5} parent=39 // pred_fallthru
        _
    $region40: #{srcnn_forward.5} parent=5 // pred_fallthru
      _
  $region6: #{srcnn_forward.5} parent=0 // loop_footer
    %s13 = sadd.s32 1, %s9
  $region7: #{srcnn_forward.5} parent=0 // loop_footer_branch
    %8 = sbr.rel target = $region3
  $region8: #{srcnn_forward.5} parent=0 // loop_exit
    _

</llo_original>
